<compile_context>
chip_gen: v6e
topology: v6e:2x2x1
jax: 0.10.0
libtpu: 0.0.40
codegen_flags: <defaults>
</compile_context>

<pallas_src>
import functools
import math

import numpy as np

import jax
import jax.numpy as jnp
from jax.experimental import pallas as pl
from jax.experimental.pallas import tpu as pltpu

_INV_SQRT2 = 1.0 / math.sqrt(2.0)
_BN_EPS = 1e-5


def _gelu(x):
    # Exact (erf-based) GELU, matching PyTorch nn.GELU default.
    return 0.5 * x * (1.0 + jax.lax.erf(x * _INV_SQRT2))


def _round_up(x, m):
    return ((x + m - 1) // m) * m


def _row_width(min_width, n_rows):
    """Smallest padded row width >= min_width with n_rows * width % 128 == 0."""
    step = 128 // math.gcd(n_rows, 128)
    return _round_up(min_width, step)


# ---------------------------------------------------------------------------
# Small host-built constants (cached; O(H) / O(W), no dense spatial matrices).
# ---------------------------------------------------------------------------

def _bilinear_matrix(out_size, in_size):
    """1-D bilinear interpolation matrix, PyTorch align_corners=False."""
    u = np.zeros((out_size, in_size), np.float32)
    for o in range(out_size):
        src = max((o + 0.5) * in_size / out_size - 0.5, 0.0)
        lo = min(int(np.floor(src)), in_size - 1)
        hi = min(lo + 1, in_size - 1)
        f = src - lo
        u[o, lo] += 1.0 - f
        u[o, hi] += f
    return u


@functools.lru_cache(maxsize=None)
def _uwt_np(W):
    """(W, 2W) width-upsample matrix (right operand of the width matmul)."""
    return np.ascontiguousarray(_bilinear_matrix(2 * W, W).T)


@functools.lru_cache(maxsize=None)
def _height_coeffs(H):
    """Per output row: (lo, hi, w_lo, w_hi) for 2x bilinear, align_corners=False."""
    out = []
    for oi in range(2 * H):
        src = max((oi + 0.5) / 2.0 - 0.5, 0.0)
        lo = min(int(math.floor(src)), H - 1)
        hi = min(lo + 1, H - 1)
        f = src - lo
        out.append((lo, hi, 1.0 - f, f))
    return tuple(out)


def _fold_conv_bn(w_oihw, conv_bias, gamma, beta, mean, var):
    """Fold inference-mode BN into the conv: (Cout, 9*Cin) weight, (Cout, 1) bias."""
    scale = gamma * jax.lax.rsqrt(var + _BN_EPS)                 # (Cout,)
    w = jnp.transpose(w_oihw, (0, 2, 3, 1))                      # (O, KH, KW, I)
    w = w.reshape(w_oihw.shape[0], -1) * scale[:, None]          # (O, 9*I), (ky,kx,ci)
    b = beta + scale * (conv_bias - mean)
    return w.astype(jnp.float32), b[:, None].astype(jnp.float32)


# ---------------------------------------------------------------------------
# Fused kernel.
# ---------------------------------------------------------------------------

def _make_up_kernel(C1, C2, H, W, Wp1, Wp2, P1, P2):
    Ho, Wo = 2 * H, 2 * W
    L1 = H * Wp1        # wide conv1 output length per channel (multiple of 128)
    L2 = Ho * Wp2       # wide conv2 output length per channel (multiple of 128)
    hcoef = _height_coeffs(H)

    def kernel(x_ref, w1_ref, b1_ref, uwt_ref, w2_ref, b2_ref, o_ref,
               xp1_ref, patch1_ref, y1_ref, rows_ref, zw_ref, xp2_ref,
               patch2_ref):
        # x_ref  : (1, C1, H*W)   flat NCHW input for one batch element
        # w*_ref : (Cout, 9*C1)   conv weights with BN scale folded in
        # b*_ref : (Cout, 1)      conv bias + BN shift
        # uwt_ref: (W, 2W)        separable width-upsample matrix
        # o_ref  : (1, C2, L2)    wide conv2 output (junk cols sliced in wrapper)

        def conv3x3(xp_ref, patch_ref, w_ref, b_ref, Wp, L):
            # im2col: 9 lane-offset taps of the flat padded image packed on the
            # sublane axis, then a single (Cout, 9*C1) x (9*C1, L) MXU matmul.
            for t in range(9):
                ky, kx = divmod(t, 3)
                d = ky * Wp + kx
                patch_ref[t * C1:(t + 1) * C1, :] = xp_ref[:, d:d + L]
            y = jnp.dot(w_ref[...], patch_ref[...],
                        preferred_element_type=jnp.float32)
            return _gelu(y + b_ref[...])

        # ---- conv1 input: zero-pad scatter into flat padded buffer ---------
        x = x_ref[0]                                           # (C1, H*W)
        xp1_ref[...] = jnp.zeros_like(xp1_ref)
        for h in range(H):
            dst = (h + 1) * Wp1 + 1
            xp1_ref[:, dst:dst + W] = x[:, h * W:(h + 1) * W]

        # ---- conv1 + BN1 + GELU (one im2col matmul) -------------------------
        y1_ref[...] = conv3x3(xp1_ref, patch1_ref, w1_ref, b1_ref, Wp1, L1)

        # ---- relayout valid columns to (H*C1, W): row h, channel c at h*C1+c
        for h in range(H):
            rows_ref[h * C1:(h + 1) * C1, :] = y1_ref[:, h * Wp1:h * Wp1 + W]

        # ---- separable bilinear x2: width matmul against (W, 2W) -----------
        zw_ref[...] = jnp.dot(rows_ref[...], uwt_ref[...],
                              preferred_element_type=jnp.float32)  # (H*C1, 2W)

        # ---- height upsample (4-tap constant weights) fused with the -------
        # ---- zero-pad scatter into the flat padded buffer for conv2 --------
        xp2_ref[...] = jnp.zeros_like(xp2_ref)
        for oi, (lo, hi, wlo, whi) in enumerate(hcoef):
            row = (wlo * zw_ref[lo * C1:(lo + 1) * C1, :]
                   + whi * zw_ref[hi * C1:(hi + 1) * C1, :])       # (C1, 2W)
            dst = (oi + 1) * Wp2 + 1
            xp2_ref[:, dst:dst + Wo] = row

        # ---- conv2 + BN2 + GELU (one im2col matmul); lane-dense wide store -
        y2 = conv3x3(xp2_ref, patch2_ref, w2_ref, b2_ref, Wp2, L2)  # (C2, L2)
        o_ref[...] = y2.reshape((1,) + y2.shape).astype(o_ref.dtype)

    return kernel


def up_forward(x_nchw, p):
    """UP.forward: NCHW in -> NCHW out (spatial x2), inference-mode BatchNorm."""
    N, C1, H, W = x_nchw.shape
    C2 = p["w2"].shape[0]
    Ho, Wo = 2 * H, 2 * W

    # Wide row widths chosen so L1/L2 land on multiples of 128 (unmasked vst,
    # no ragged scratch tails); the extra junk columns are dropped by the
    # wrapper slice at the end.
    Wp1 = _row_width(W + 2, H)
    Wp2 = _row_width(Wo + 2, Ho)
    L1, L2 = H * Wp1, Ho * Wp2
    P1 = _round_up(L1 + 2 * Wp1 + 2, 128)   # flat padded image + tap headroom
    P2 = _round_up(L2 + 2 * Wp2 + 2, 128)

    w1, b1 = _fold_conv_bn(p["w1"], p["b1"], p["g1"], p["beta1"], p["m1"], p["v1"])
    w2, b2 = _fold_conv_bn(p["w2"], p["b2"], p["g2"], p["beta2"], p["m2"], p["v2"])
    uwt = jnp.asarray(_uwt_np(W))

    x_flat = x_nchw.reshape(N, C1, H * W).astype(jnp.float32)

    out_wide = pl.pallas_call(
        _make_up_kernel(C1, C2, H, W, Wp1, Wp2, P1, P2),
        out_shape=jax.ShapeDtypeStruct((N, C2, L2), jnp.float32),
        grid=(N,),
        in_specs=[
            pl.BlockSpec((1, C1, H * W), lambda n: (n, 0, 0)),
            pl.BlockSpec((C1, 9 * C1), lambda n: (0, 0)),
            pl.BlockSpec((C1, 1), lambda n: (0, 0)),
            pl.BlockSpec((W, Wo), lambda n: (0, 0)),
            pl.BlockSpec((C2, 9 * C1), lambda n: (0, 0)),
            pl.BlockSpec((C2, 1), lambda n: (0, 0)),
        ],
        out_specs=pl.BlockSpec((1, C2, L2), lambda n: (n, 0, 0)),
        scratch_shapes=[
            pltpu.VMEM((C1, P1), jnp.float32),        # padded conv1 input
            pltpu.VMEM((9 * C1, L1), jnp.float32),    # conv1 im2col patch
            pltpu.VMEM((C1, L1), jnp.float32),        # conv1 activation (wide)
            pltpu.VMEM((H * C1, W), jnp.float32),     # valid rows, W on lanes
            pltpu.VMEM((H * C1, Wo), jnp.float32),    # width-upsampled rows
            pltpu.VMEM((C1, P2), jnp.float32),        # padded upsampled image
            pltpu.VMEM((9 * C1, L2), jnp.float32),    # conv2 im2col patch
        ],
        compiler_params=pltpu.CompilerParams(
            dimension_semantics=("parallel",),
        ),
    )(x_flat, w1, b1, uwt, w2, b2)

    # Drop the junk columns per wide row -> NCHW (N, C2, 2H, 2W).
    return out_wide.reshape(N, C2, Ho, Wp2)[:, :, :, :Wo]


# ---------------------------------------------------------------------------
# Deterministic parameters + pure-JAX reference.
# ---------------------------------------------------------------------------

def init_up_params(key, in_channel, out_channel):
    ks = jax.random.split(key, 8)
    p = {}
    p["w1"] = 0.1 * jax.random.normal(ks[0], (in_channel, in_channel, 3, 3), jnp.float32)
    p["b1"] = 0.05 * jax.random.normal(ks[1], (in_channel,), jnp.float32)
    p["g1"] = 1.0 + 0.1 * jax.random.normal(ks[2], (in_channel,), jnp.float32)
    p["beta1"] = 0.1 * jax.random.normal(ks[3], (in_channel,), jnp.float32)
    p["m1"] = 0.05 * jax.random.normal(ks[2], (in_channel,), jnp.float32)
    p["v1"] = 1.0 + 0.1 * jax.random.uniform(ks[3], (in_channel,), jnp.float32)
    p["w2"] = 0.1 * jax.random.normal(ks[4], (out_channel, in_channel, 3, 3), jnp.float32)
    p["b2"] = 0.05 * jax.random.normal(ks[5], (out_channel,), jnp.float32)
    p["g2"] = 1.0 + 0.1 * jax.random.normal(ks[6], (out_channel,), jnp.float32)
    p["beta2"] = 0.1 * jax.random.normal(ks[7], (out_channel,), jnp.float32)
    p["m2"] = 0.05 * jax.random.normal(ks[6], (out_channel,), jnp.float32)
    p["v2"] = 1.0 + 0.1 * jax.random.uniform(ks[7], (out_channel,), jnp.float32)
    return p


def _ref_conv_bn_gelu(x, w, b, gamma, beta, mean, var):
    y = jax.lax.conv_general_dilated(
        x, w, window_strides=(1, 1), padding="SAME",
        dimension_numbers=("NCHW", "OIHW", "NCHW"),
        precision=jax.lax.Precision.HIGHEST)
    y = y + b[None, :, None, None]
    y = (y - mean[None, :, None, None]) * jax.lax.rsqrt(var[None, :, None, None] + _BN_EPS)
    y = y * gamma[None, :, None, None] + beta[None, :, None, None]
    return _gelu(y)


def _ref_bilinear_up2(x):
    """F.interpolate(scale_factor=2, mode='bilinear', align_corners=False), NCHW."""
    def up_axis(a, axis):
        n = a.shape[axis]
        src = jnp.maximum((jnp.arange(2 * n) + 0.5) / 2.0 - 0.5, 0.0)
        lo = jnp.floor(src).astype(jnp.int32)
        hi = jnp.minimum(lo + 1, n - 1)
        shape = [1] * a.ndim
        shape[axis] = 2 * n
        f = (src - lo.astype(src.dtype)).reshape(shape)
        return jnp.take(a, lo, axis=axis) * (1.0 - f) + jnp.take(a, hi, axis=axis) * f
    return up_axis(up_axis(x, 2), 3)


def _reference_forward(x, p):
    y = _ref_conv_bn_gelu(x, p["w1"], p["b1"], p["g1"], p["beta1"], p["m1"], p["v1"])
    y = _ref_bilinear_up2(y)
    y = _ref_conv_bn_gelu(y, p["w2"], p["b2"], p["g2"], p["beta2"], p["m2"], p["v2"])
    return y


if __name__ == "__main__":
    key = jax.random.PRNGKey(0)
    k_x, k_p = jax.random.split(key)

    N, C_in, H, W = 2, 4, 16, 16
    C_out = 8
    x = jax.random.normal(k_x, (N, C_in, H, W), jnp.float32)
    params = init_up_params(k_p, C_in, C_out)

    up_fn = jax.jit(up_forward)   # constant-folds BN fusion + output slice
    out = jax.block_until_ready(up_fn(x, params))
    assert out.shape == (N, C_out, 2 * H, 2 * W), out.shape

    ref = jax.block_until_ready(_reference_forward(x, params))
    max_err = float(jnp.max(jnp.abs(out - ref)))
    assert jnp.allclose(out, ref, atol=1e-4, rtol=1e-4), max_err

    print("KERNEL_OK")
</pallas_src>

<mosaic_0001>
module attributes {stable_mosaic.version = 11 : i64} {
  func.func @kernel(%arg0: i32, %arg1: memref<1x4x256xf32, #tpu.memory_space<vmem>>, %arg2: memref<4x36xf32, #tpu.memory_space<vmem>>, %arg3: memref<4x1xf32, #tpu.memory_space<vmem>>, %arg4: memref<16x32xf32, #tpu.memory_space<vmem>>, %arg5: memref<8x36xf32, #tpu.memory_space<vmem>>, %arg6: memref<8x1xf32, #tpu.memory_space<vmem>>, %arg7: memref<1x8x1152xf32, #tpu.memory_space<vmem>>, %arg8: memref<4x512xf32, #tpu.memory_space<vmem>>, %arg9: memref<36x384xf32, #tpu.memory_space<vmem>>, %arg10: memref<4x384xf32, #tpu.memory_space<vmem>>, %arg11: memref<64x16xf32, #tpu.memory_space<vmem>>, %arg12: memref<64x32xf32, #tpu.memory_space<vmem>>, %arg13: memref<4x1280xf32, #tpu.memory_space<vmem>>, %arg14: memref<36x1152xf32, #tpu.memory_space<vmem>>) attributes {dimension_semantics = [#tpu.dimension_semantics<parallel>], iteration_bounds = array<i64: 2>, scalar_prefetch = 0 : i64, scratch_operands = 7 : i64, tpu.core_type = #tpu.core_type<tc>, window_params = [{transform_indices = @transform_0, window_bounds = array<i64: 1, 4, 256>}, {pipeline_mode = #tpu.pipeline_mode<synchronous>, transform_indices = @transform_1, window_bounds = array<i64: 4, 36>}, {pipeline_mode = #tpu.pipeline_mode<synchronous>, transform_indices = @transform_2, window_bounds = array<i64: 4, 1>}, {pipeline_mode = #tpu.pipeline_mode<synchronous>, transform_indices = @transform_3, window_bounds = array<i64: 16, 32>}, {pipeline_mode = #tpu.pipeline_mode<synchronous>, transform_indices = @transform_4, window_bounds = array<i64: 8, 36>}, {pipeline_mode = #tpu.pipeline_mode<synchronous>, transform_indices = @transform_5, window_bounds = array<i64: 8, 1>}, {transform_indices = @transform_6, window_bounds = array<i64: 1, 8, 1152>}]} {
    %c0 = arith.constant 0 : index
    %c0_0 = arith.constant 0 : index
    %c0_1 = arith.constant 0 : index
    %0 = vector.load %arg1[%c0, %c0_0, %c0_1] : memref<1x4x256xf32, #tpu.memory_space<vmem>>, vector<1x4x256xf32>
    %1 = vector.shape_cast %0 : vector<1x4x256xf32> to vector<4x256xf32>
    %cst = arith.constant 0.000000e+00 : f32
    %2 = vector.broadcast %cst : f32 to vector<4x512xf32>
    %c0_2 = arith.constant 0 : index
    %c0_3 = arith.constant 0 : index
    %3 = vector.load %arg8[%c0_2, %c0_3] : memref<4x512xf32, #tpu.memory_space<vmem>>, vector<4x512xf32>
    tpu.vector_store %arg8[%c0_2, %c0_3], %2 {strides = array<i32>} : memref<4x512xf32, #tpu.memory_space<vmem>>, vector<4x512xf32>,
    %4 = vector.extract_strided_slice %1 {offsets = [0, 0], sizes = [4, 16], strides = [1, 1]} : vector<4x256xf32> to vector<4x16xf32>
    %c0_4 = arith.constant 0 : index
    %c25 = arith.constant 25 : index
    %5 = vector.load %arg8[%c0_4, %c25] : memref<4x512xf32, #tpu.memory_space<vmem>>, vector<4x16xf32>
    tpu.vector_store %arg8[%c0_4, %c25], %4 {strides = array<i32>} : memref<4x512xf32, #tpu.memory_space<vmem>>, vector<4x16xf32>,
    %6 = vector.extract_strided_slice %1 {offsets = [0, 16], sizes = [4, 16], strides = [1, 1]} : vector<4x256xf32> to vector<4x16xf32>
    %c0_5 = arith.constant 0 : index
    %c49 = arith.constant 49 : index
    %7 = vector.load %arg8[%c0_5, %c49] : memref<4x512xf32, #tpu.memory_space<vmem>>, vector<4x16xf32>
    tpu.vector_store %arg8[%c0_5, %c49], %6 {strides = array<i32>} : memref<4x512xf32, #tpu.memory_space<vmem>>, vector<4x16xf32>,
    %8 = vector.extract_strided_slice %1 {offsets = [0, 32], sizes = [4, 16], strides = [1, 1]} : vector<4x256xf32> to vector<4x16xf32>
    %c0_6 = arith.constant 0 : index
    %c73 = arith.constant 73 : index
    %9 = vector.load %arg8[%c0_6, %c73] : memref<4x512xf32, #tpu.memory_space<vmem>>, vector<4x16xf32>
    tpu.vector_store %arg8[%c0_6, %c73], %8 {strides = array<i32>} : memref<4x512xf32, #tpu.memory_space<vmem>>, vector<4x16xf32>,
    %10 = vector.extract_strided_slice %1 {offsets = [0, 48], sizes = [4, 16], strides = [1, 1]} : vector<4x256xf32> to vector<4x16xf32>
    %c0_7 = arith.constant 0 : index
    %c97 = arith.constant 97 : index
    %11 = vector.load %arg8[%c0_7, %c97] : memref<4x512xf32, #tpu.memory_space<vmem>>, vector<4x16xf32>
    tpu.vector_store %arg8[%c0_7, %c97], %10 {strides = array<i32>} : memref<4x512xf32, #tpu.memory_space<vmem>>, vector<4x16xf32>,
    %12 = vector.extract_strided_slice %1 {offsets = [0, 64], sizes = [4, 16], strides = [1, 1]} : vector<4x256xf32> to vector<4x16xf32>
    %c0_8 = arith.constant 0 : index
    %c121 = arith.constant 121 : index
    %13 = vector.load %arg8[%c0_8, %c121] : memref<4x512xf32, #tpu.memory_space<vmem>>, vector<4x16xf32>
    tpu.vector_store %arg8[%c0_8, %c121], %12 {strides = array<i32>} : memref<4x512xf32, #tpu.memory_space<vmem>>, vector<4x16xf32>,
    %14 = vector.extract_strided_slice %1 {offsets = [0, 80], sizes = [4, 16], strides = [1, 1]} : vector<4x256xf32> to vector<4x16xf32>
    %c0_9 = arith.constant 0 : index
    %c145 = arith.constant 145 : index
    %15 = vector.load %arg8[%c0_9, %c145] : memref<4x512xf32, #tpu.memory_space<vmem>>, vector<4x16xf32>
    tpu.vector_store %arg8[%c0_9, %c145], %14 {strides = array<i32>} : memref<4x512xf32, #tpu.memory_space<vmem>>, vector<4x16xf32>,
    %16 = vector.extract_strided_slice %1 {offsets = [0, 96], sizes = [4, 16], strides = [1, 1]} : vector<4x256xf32> to vector<4x16xf32>
    %c0_10 = arith.constant 0 : index
    %c169 = arith.constant 169 : index
    %17 = vector.load %arg8[%c0_10, %c169] : memref<4x512xf32, #tpu.memory_space<vmem>>, vector<4x16xf32>
    tpu.vector_store %arg8[%c0_10, %c169], %16 {strides = array<i32>} : memref<4x512xf32, #tpu.memory_space<vmem>>, vector<4x16xf32>,
    %18 = vector.extract_strided_slice %1 {offsets = [0, 112], sizes = [4, 16], strides = [1, 1]} : vector<4x256xf32> to vector<4x16xf32>
    %c0_11 = arith.constant 0 : index
    %c193 = arith.constant 193 : index
    %19 = vector.load %arg8[%c0_11, %c193] : memref<4x512xf32, #tpu.memory_space<vmem>>, vector<4x16xf32>
    tpu.vector_store %arg8[%c0_11, %c193], %18 {strides = array<i32>} : memref<4x512xf32, #tpu.memory_space<vmem>>, vector<4x16xf32>,
    %20 = vector.extract_strided_slice %1 {offsets = [0, 128], sizes = [4, 16], strides = [1, 1]} : vector<4x256xf32> to vector<4x16xf32>
    %c0_12 = arith.constant 0 : index
    %c217 = arith.constant 217 : index
    %21 = vector.load %arg8[%c0_12, %c217] : memref<4x512xf32, #tpu.memory_space<vmem>>, vector<4x16xf32>
    tpu.vector_store %arg8[%c0_12, %c217], %20 {strides = array<i32>} : memref<4x512xf32, #tpu.memory_space<vmem>>, vector<4x16xf32>,
    %22 = vector.extract_strided_slice %1 {offsets = [0, 144], sizes = [4, 16], strides = [1, 1]} : vector<4x256xf32> to vector<4x16xf32>
    %c0_13 = arith.constant 0 : index
    %c241 = arith.constant 241 : index
    %23 = vector.load %arg8[%c0_13, %c241] : memref<4x512xf32, #tpu.memory_space<vmem>>, vector<4x16xf32>
    tpu.vector_store %arg8[%c0_13, %c241], %22 {strides = array<i32>} : memref<4x512xf32, #tpu.memory_space<vmem>>, vector<4x16xf32>,
    %24 = vector.extract_strided_slice %1 {offsets = [0, 160], sizes = [4, 16], strides = [1, 1]} : vector<4x256xf32> to vector<4x16xf32>
    %c0_14 = arith.constant 0 : index
    %c265 = arith.constant 265 : index
    %25 = vector.load %arg8[%c0_14, %c265] : memref<4x512xf32, #tpu.memory_space<vmem>>, vector<4x16xf32>
    tpu.vector_store %arg8[%c0_14, %c265], %24 {strides = array<i32>} : memref<4x512xf32, #tpu.memory_space<vmem>>, vector<4x16xf32>,
    %26 = vector.extract_strided_slice %1 {offsets = [0, 176], sizes = [4, 16], strides = [1, 1]} : vector<4x256xf32> to vector<4x16xf32>
    %c0_15 = arith.constant 0 : index
    %c289 = arith.constant 289 : index
    %27 = vector.load %arg8[%c0_15, %c289] : memref<4x512xf32, #tpu.memory_space<vmem>>, vector<4x16xf32>
    tpu.vector_store %arg8[%c0_15, %c289], %26 {strides = array<i32>} : memref<4x512xf32, #tpu.memory_space<vmem>>, vector<4x16xf32>,
    %28 = vector.extract_strided_slice %1 {offsets = [0, 192], sizes = [4, 16], strides = [1, 1]} : vector<4x256xf32> to vector<4x16xf32>
    %c0_16 = arith.constant 0 : index
    %c313 = arith.constant 313 : index
    %29 = vector.load %arg8[%c0_16, %c313] : memref<4x512xf32, #tpu.memory_space<vmem>>, vector<4x16xf32>
    tpu.vector_store %arg8[%c0_16, %c313], %28 {strides = array<i32>} : memref<4x512xf32, #tpu.memory_space<vmem>>, vector<4x16xf32>,
    %30 = vector.extract_strided_slice %1 {offsets = [0, 208], sizes = [4, 16], strides = [1, 1]} : vector<4x256xf32> to vector<4x16xf32>
    %c0_17 = arith.constant 0 : index
    %c337 = arith.constant 337 : index
    %31 = vector.load %arg8[%c0_17, %c337] : memref<4x512xf32, #tpu.memory_space<vmem>>, vector<4x16xf32>
    tpu.vector_store %arg8[%c0_17, %c337], %30 {strides = array<i32>} : memref<4x512xf32, #tpu.memory_space<vmem>>, vector<4x16xf32>,
    %32 = vector.extract_strided_slice %1 {offsets = [0, 224], sizes = [4, 16], strides = [1, 1]} : vector<4x256xf32> to vector<4x16xf32>
    %c0_18 = arith.constant 0 : index
    %c361 = arith.constant 361 : index
    %33 = vector.load %arg8[%c0_18, %c361] : memref<4x512xf32, #tpu.memory_space<vmem>>, vector<4x16xf32>
    tpu.vector_store %arg8[%c0_18, %c361], %32 {strides = array<i32>} : memref<4x512xf32, #tpu.memory_space<vmem>>, vector<4x16xf32>,
    %34 = vector.extract_strided_slice %1 {offsets = [0, 240], sizes = [4, 16], strides = [1, 1]} : vector<4x256xf32> to vector<4x16xf32>
    %c0_19 = arith.constant 0 : index
    %c385 = arith.constant 385 : index
    %35 = vector.load %arg8[%c0_19, %c385] : memref<4x512xf32, #tpu.memory_space<vmem>>, vector<4x16xf32>
    tpu.vector_store %arg8[%c0_19, %c385], %34 {strides = array<i32>} : memref<4x512xf32, #tpu.memory_space<vmem>>, vector<4x16xf32>,
    %c0_20 = arith.constant 0 : index
    %c0_21 = arith.constant 0 : index
    %36 = vector.load %arg8[%c0_20, %c0_21] : memref<4x512xf32, #tpu.memory_space<vmem>>, vector<4x384xf32>
    %c0_22 = arith.constant 0 : index
    %c0_23 = arith.constant 0 : index
    %37 = vector.load %arg9[%c0_22, %c0_23] : memref<36x384xf32, #tpu.memory_space<vmem>>, vector<4x384xf32>
    tpu.vector_store %arg9[%c0_22, %c0_23], %36 {strides = array<i32>} : memref<36x384xf32, #tpu.memory_space<vmem>>, vector<4x384xf32>,
    %c0_24 = arith.constant 0 : index
    %c1 = arith.constant 1 : index
    %38 = vector.load %arg8[%c0_24, %c1] : memref<4x512xf32, #tpu.memory_space<vmem>>, vector<4x384xf32>
    %c4 = arith.constant 4 : index
    %c0_25 = arith.constant 0 : index
    %39 = vector.load %arg9[%c4, %c0_25] : memref<36x384xf32, #tpu.memory_space<vmem>>, vector<4x384xf32>
    tpu.vector_store %arg9[%c4, %c0_25], %38 {strides = array<i32>} : memref<36x384xf32, #tpu.memory_space<vmem>>, vector<4x384xf32>,
    %c0_26 = arith.constant 0 : index
    %c2 = arith.constant 2 : index
    %40 = vector.load %arg8[%c0_26, %c2] : memref<4x512xf32, #tpu.memory_space<vmem>>, vector<4x384xf32>
    %c8 = arith.constant 8 : index
    %c0_27 = arith.constant 0 : index
    %41 = vector.load %arg9[%c8, %c0_27] : memref<36x384xf32, #tpu.memory_space<vmem>>, vector<4x384xf32>
    tpu.vector_store %arg9[%c8, %c0_27], %40 {strides = array<i32>} : memref<36x384xf32, #tpu.memory_space<vmem>>, vector<4x384xf32>,
    %c0_28 = arith.constant 0 : index
    %c24 = arith.constant 24 : index
    %42 = vector.load %arg8[%c0_28, %c24] : memref<4x512xf32, #tpu.memory_space<vmem>>, vector<4x384xf32>
    %c12 = arith.constant 12 : index
    %c0_29 = arith.constant 0 : index
    %43 = vector.load %arg9[%c12, %c0_29] : memref<36x384xf32, #tpu.memory_space<vmem>>, vector<4x384xf32>
    tpu.vector_store %arg9[%c12, %c0_29], %42 {strides = array<i32>} : memref<36x384xf32, #tpu.memory_space<vmem>>, vector<4x384xf32>,
    %c0_30 = arith.constant 0 : index
    %c25_31 = arith.constant 25 : index
    %44 = vector.load %arg8[%c0_30, %c25_31] : memref<4x512xf32, #tpu.memory_space<vmem>>, vector<4x384xf32>
    %c16 = arith.constant 16 : index
    %c0_32 = arith.constant 0 : index
    %45 = vector.load %arg9[%c16, %c0_32] : memref<36x384xf32, #tpu.memory_space<vmem>>, vector<4x384xf32>
    tpu.vector_store %arg9[%c16, %c0_32], %44 {strides = array<i32>} : memref<36x384xf32, #tpu.memory_space<vmem>>, vector<4x384xf32>,
    %c0_33 = arith.constant 0 : index
    %c26 = arith.constant 26 : index
    %46 = vector.load %arg8[%c0_33, %c26] : memref<4x512xf32, #tpu.memory_space<vmem>>, vector<4x384xf32>
    %c20 = arith.constant 20 : index
    %c0_34 = arith.constant 0 : index
    %47 = vector.load %arg9[%c20, %c0_34] : memref<36x384xf32, #tpu.memory_space<vmem>>, vector<4x384xf32>
    tpu.vector_store %arg9[%c20, %c0_34], %46 {strides = array<i32>} : memref<36x384xf32, #tpu.memory_space<vmem>>, vector<4x384xf32>,
    %c0_35 = arith.constant 0 : index
    %c48 = arith.constant 48 : index
    %48 = vector.load %arg8[%c0_35, %c48] : memref<4x512xf32, #tpu.memory_space<vmem>>, vector<4x384xf32>
    %c24_36 = arith.constant 24 : index
    %c0_37 = arith.constant 0 : index
    %49 = vector.load %arg9[%c24_36, %c0_37] : memref<36x384xf32, #tpu.memory_space<vmem>>, vector<4x384xf32>
    tpu.vector_store %arg9[%c24_36, %c0_37], %48 {strides = array<i32>} : memref<36x384xf32, #tpu.memory_space<vmem>>, vector<4x384xf32>,
    %c0_38 = arith.constant 0 : index
    %c49_39 = arith.constant 49 : index
    %50 = vector.load %arg8[%c0_38, %c49_39] : memref<4x512xf32, #tpu.memory_space<vmem>>, vector<4x384xf32>
    %c28 = arith.constant 28 : index
    %c0_40 = arith.constant 0 : index
    %51 = vector.load %arg9[%c28, %c0_40] : memref<36x384xf32, #tpu.memory_space<vmem>>, vector<4x384xf32>
    tpu.vector_store %arg9[%c28, %c0_40], %50 {strides = array<i32>} : memref<36x384xf32, #tpu.memory_space<vmem>>, vector<4x384xf32>,
    %c0_41 = arith.constant 0 : index
    %c50 = arith.constant 50 : index
    %52 = vector.load %arg8[%c0_41, %c50] : memref<4x512xf32, #tpu.memory_space<vmem>>, vector<4x384xf32>
    %c32 = arith.constant 32 : index
    %c0_42 = arith.constant 0 : index
    %53 = vector.load %arg9[%c32, %c0_42] : memref<36x384xf32, #tpu.memory_space<vmem>>, vector<4x384xf32>
    tpu.vector_store %arg9[%c32, %c0_42], %52 {strides = array<i32>} : memref<36x384xf32, #tpu.memory_space<vmem>>, vector<4x384xf32>,
    %c0_43 = arith.constant 0 : index
    %c0_44 = arith.constant 0 : index
    %54 = vector.load %arg2[%c0_43, %c0_44] : memref<4x36xf32, #tpu.memory_space<vmem>>, vector<4x36xf32>
    %c0_45 = arith.constant 0 : index
    %c0_46 = arith.constant 0 : index
    %55 = vector.load %arg9[%c0_45, %c0_46] : memref<36x384xf32, #tpu.memory_space<vmem>>, vector<36x384xf32>
    %cst_47 = arith.constant dense<0.000000e+00> : vector<4x384xf32>
    %56 = tpu.matmul %54, %55, %cst_47 {dimension_numbers = #tpu.dot_dimension_numbers<[1], [0], [0], [1], [0, 0, 1, 1], [], []>} : vector<4x36xf32>, vector<36x384xf32>, vector<4x384xf32> -> vector<4x384xf32>
    %c0_48 = arith.constant 0 : index
    %c0_49 = arith.constant 0 : index
    %57 = vector.load %arg3[%c0_48, %c0_49] : memref<4x1xf32, #tpu.memory_space<vmem>>, vector<4x1xf32>
    %58 = vector.broadcast %57 : vector<4x1xf32> to vector<4x384xf32>
    %59 = arith.addf %56, %58 : vector<4x384xf32>
    %cst_50 = arith.constant 5.000000e-01 : f32
    %60 = vector.broadcast %cst_50 : f32 to vector<4x384xf32>
    %61 = arith.mulf %60, %59 : vector<4x384xf32>
    %cst_51 = arith.constant 0.707106769 : f32
    %62 = vector.broadcast %cst_51 : f32 to vector<4x384xf32>
    %63 = arith.mulf %59, %62 : vector<4x384xf32>
    %64 = math.erf %63 : vector<4x384xf32>
    %cst_52 = arith.constant 1.000000e+00 : f32
    %65 = vector.broadcast %cst_52 : f32 to vector<4x384xf32>
    %66 = arith.addf %65, %64 : vector<4x384xf32>
    %67 = arith.mulf %61, %66 : vector<4x384xf32>
    %c0_53 = arith.constant 0 : index
    %c0_54 = arith.constant 0 : index
    %68 = vector.load %arg10[%c0_53, %c0_54] : memref<4x384xf32, #tpu.memory_space<vmem>>, vector<4x384xf32>
    tpu.vector_store %arg10[%c0_53, %c0_54], %67 {strides = array<i32>} : memref<4x384xf32, #tpu.memory_space<vmem>>, vector<4x384xf32>,
    %c0_55 = arith.constant 0 : index
    %c0_56 = arith.constant 0 : index
    %69 = vector.load %arg10[%c0_55, %c0_56] : memref<4x384xf32, #tpu.memory_space<vmem>>, vector<4x16xf32>
    %c0_57 = arith.constant 0 : index
    %c0_58 = arith.constant 0 : index
    %70 = vector.load %arg11[%c0_57, %c0_58] : memref<64x16xf32, #tpu.memory_space<vmem>>, vector<4x16xf32>
    tpu.vector_store %arg11[%c0_57, %c0_58], %69 {strides = array<i32>} : memref<64x16xf32, #tpu.memory_space<vmem>>, vector<4x16xf32>,
    %c0_59 = arith.constant 0 : index
    %c24_60 = arith.constant 24 : index
    %71 = vector.load %arg10[%c0_59, %c24_60] : memref<4x384xf32, #tpu.memory_space<vmem>>, vector<4x16xf32>
    %c4_61 = arith.constant 4 : index
    %c0_62 = arith.constant 0 : index
    %72 = vector.load %arg11[%c4_61, %c0_62] : memref<64x16xf32, #tpu.memory_space<vmem>>, vector<4x16xf32>
    tpu.vector_store %arg11[%c4_61, %c0_62], %71 {strides = array<i32>} : memref<64x16xf32, #tpu.memory_space<vmem>>, vector<4x16xf32>,
    %c0_63 = arith.constant 0 : index
    %c48_64 = arith.constant 48 : index
    %73 = vector.load %arg10[%c0_63, %c48_64] : memref<4x384xf32, #tpu.memory_space<vmem>>, vector<4x16xf32>
    %c8_65 = arith.constant 8 : index
    %c0_66 = arith.constant 0 : index
    %74 = vector.load %arg11[%c8_65, %c0_66] : memref<64x16xf32, #tpu.memory_space<vmem>>, vector<4x16xf32>
    tpu.vector_store %arg11[%c8_65, %c0_66], %73 {strides = array<i32>} : memref<64x16xf32, #tpu.memory_space<vmem>>, vector<4x16xf32>,
    %c0_67 = arith.constant 0 : index
    %c72 = arith.constant 72 : index
    %75 = vector.load %arg10[%c0_67, %c72] : memref<4x384xf32, #tpu.memory_space<vmem>>, vector<4x16xf32>
    %c12_68 = arith.constant 12 : index
    %c0_69 = arith.constant 0 : index
    %76 = vector.load %arg11[%c12_68, %c0_69] : memref<64x16xf32, #tpu.memory_space<vmem>>, vector<4x16xf32>
    tpu.vector_store %arg11[%c12_68, %c0_69], %75 {strides = array<i32>} : memref<64x16xf32, #tpu.memory_space<vmem>>, vector<4x16xf32>,
    %c0_70 = arith.constant 0 : index
    %c96 = arith.constant 96 : index
    %77 = vector.load %arg10[%c0_70, %c96] : memref<4x384xf32, #tpu.memory_space<vmem>>, vector<4x16xf32>
    %c16_71 = arith.constant 16 : index
    %c0_72 = arith.constant 0 : index
    %78 = vector.load %arg11[%c16_71, %c0_72] : memref<64x16xf32, #tpu.memory_space<vmem>>, vector<4x16xf32>
    tpu.vector_store %arg11[%c16_71, %c0_72], %77 {strides = array<i32>} : memref<64x16xf32, #tpu.memory_space<vmem>>, vector<4x16xf32>,
    %c0_73 = arith.constant 0 : index
    %c120 = arith.constant 120 : index
    %79 = vector.load %arg10[%c0_73, %c120] : memref<4x384xf32, #tpu.memory_space<vmem>>, vector<4x16xf32>
    %c20_74 = arith.constant 20 : index
    %c0_75 = arith.constant 0 : index
    %80 = vector.load %arg11[%c20_74, %c0_75] : memref<64x16xf32, #tpu.memory_space<vmem>>, vector<4x16xf32>
    tpu.vector_store %arg11[%c20_74, %c0_75], %79 {strides = array<i32>} : memref<64x16xf32, #tpu.memory_space<vmem>>, vector<4x16xf32>,
    %c0_76 = arith.constant 0 : index
    %c144 = arith.constant 144 : index
    %81 = vector.load %arg10[%c0_76, %c144] : memref<4x384xf32, #tpu.memory_space<vmem>>, vector<4x16xf32>
    %c24_77 = arith.constant 24 : index
    %c0_78 = arith.constant 0 : index
    %82 = vector.load %arg11[%c24_77, %c0_78] : memref<64x16xf32, #tpu.memory_space<vmem>>, vector<4x16xf32>
    tpu.vector_store %arg11[%c24_77, %c0_78], %81 {strides = array<i32>} : memref<64x16xf32, #tpu.memory_space<vmem>>, vector<4x16xf32>,
    %c0_79 = arith.constant 0 : index
    %c168 = arith.constant 168 : index
    %83 = vector.load %arg10[%c0_79, %c168] : memref<4x384xf32, #tpu.memory_space<vmem>>, vector<4x16xf32>
    %c28_80 = arith.constant 28 : index
    %c0_81 = arith.constant 0 : index
    %84 = vector.load %arg11[%c28_80, %c0_81] : memref<64x16xf32, #tpu.memory_space<vmem>>, vector<4x16xf32>
    tpu.vector_store %arg11[%c28_80, %c0_81], %83 {strides = array<i32>} : memref<64x16xf32, #tpu.memory_space<vmem>>, vector<4x16xf32>,
    %c0_82 = arith.constant 0 : index
    %c192 = arith.constant 192 : index
    %85 = vector.load %arg10[%c0_82, %c192] : memref<4x384xf32, #tpu.memory_space<vmem>>, vector<4x16xf32>
    %c32_83 = arith.constant 32 : index
    %c0_84 = arith.constant 0 : index
    %86 = vector.load %arg11[%c32_83, %c0_84] : memref<64x16xf32, #tpu.memory_space<vmem>>, vector<4x16xf32>
    tpu.vector_store %arg11[%c32_83, %c0_84], %85 {strides = array<i32>} : memref<64x16xf32, #tpu.memory_space<vmem>>, vector<4x16xf32>,
    %c0_85 = arith.constant 0 : index
    %c216 = arith.constant 216 : index
    %87 = vector.load %arg10[%c0_85, %c216] : memref<4x384xf32, #tpu.memory_space<vmem>>, vector<4x16xf32>
    %c36 = arith.constant 36 : index
    %c0_86 = arith.constant 0 : index
    %88 = vector.load %arg11[%c36, %c0_86] : memref<64x16xf32, #tpu.memory_space<vmem>>, vector<4x16xf32>
    tpu.vector_store %arg11[%c36, %c0_86], %87 {strides = array<i32>} : memref<64x16xf32, #tpu.memory_space<vmem>>, vector<4x16xf32>,
    %c0_87 = arith.constant 0 : index
    %c240 = arith.constant 240 : index
    %89 = vector.load %arg10[%c0_87, %c240] : memref<4x384xf32, #tpu.memory_space<vmem>>, vector<4x16xf32>
    %c40 = arith.constant 40 : index
    %c0_88 = arith.constant 0 : index
    %90 = vector.load %arg11[%c40, %c0_88] : memref<64x16xf32, #tpu.memory_space<vmem>>, vector<4x16xf32>
    tpu.vector_store %arg11[%c40, %c0_88], %89 {strides = array<i32>} : memref<64x16xf32, #tpu.memory_space<vmem>>, vector<4x16xf32>,
    %c0_89 = arith.constant 0 : index
    %c264 = arith.constant 264 : index
    %91 = vector.load %arg10[%c0_89, %c264] : memref<4x384xf32, #tpu.memory_space<vmem>>, vector<4x16xf32>
    %c44 = arith.constant 44 : index
    %c0_90 = arith.constant 0 : index
    %92 = vector.load %arg11[%c44, %c0_90] : memref<64x16xf32, #tpu.memory_space<vmem>>, vector<4x16xf32>
    tpu.vector_store %arg11[%c44, %c0_90], %91 {strides = array<i32>} : memref<64x16xf32, #tpu.memory_space<vmem>>, vector<4x16xf32>,
    %c0_91 = arith.constant 0 : index
    %c288 = arith.constant 288 : index
    %93 = vector.load %arg10[%c0_91, %c288] : memref<4x384xf32, #tpu.memory_space<vmem>>, vector<4x16xf32>
    %c48_92 = arith.constant 48 : index
    %c0_93 = arith.constant 0 : index
    %94 = vector.load %arg11[%c48_92, %c0_93] : memref<64x16xf32, #tpu.memory_space<vmem>>, vector<4x16xf32>
    tpu.vector_store %arg11[%c48_92, %c0_93], %93 {strides = array<i32>} : memref<64x16xf32, #tpu.memory_space<vmem>>, vector<4x16xf32>,
    %c0_94 = arith.constant 0 : index
    %c312 = arith.constant 312 : index
    %95 = vector.load %arg10[%c0_94, %c312] : memref<4x384xf32, #tpu.memory_space<vmem>>, vector<4x16xf32>
    %c52 = arith.constant 52 : index
    %c0_95 = arith.constant 0 : index
    %96 = vector.load %arg11[%c52, %c0_95] : memref<64x16xf32, #tpu.memory_space<vmem>>, vector<4x16xf32>
    tpu.vector_store %arg11[%c52, %c0_95], %95 {strides = array<i32>} : memref<64x16xf32, #tpu.memory_space<vmem>>, vector<4x16xf32>,
    %c0_96 = arith.constant 0 : index
    %c336 = arith.constant 336 : index
    %97 = vector.load %arg10[%c0_96, %c336] : memref<4x384xf32, #tpu.memory_space<vmem>>, vector<4x16xf32>
    %c56 = arith.constant 56 : index
    %c0_97 = arith.constant 0 : index
    %98 = vector.load %arg11[%c56, %c0_97] : memref<64x16xf32, #tpu.memory_space<vmem>>, vector<4x16xf32>
    tpu.vector_store %arg11[%c56, %c0_97], %97 {strides = array<i32>} : memref<64x16xf32, #tpu.memory_space<vmem>>, vector<4x16xf32>,
    %c0_98 = arith.constant 0 : index
    %c360 = arith.constant 360 : index
    %99 = vector.load %arg10[%c0_98, %c360] : memref<4x384xf32, #tpu.memory_space<vmem>>, vector<4x16xf32>
    %c60 = arith.constant 60 : index
    %c0_99 = arith.constant 0 : index
    %100 = vector.load %arg11[%c60, %c0_99] : memref<64x16xf32, #tpu.memory_space<vmem>>, vector<4x16xf32>
    tpu.vector_store %arg11[%c60, %c0_99], %99 {strides = array<i32>} : memref<64x16xf32, #tpu.memory_space<vmem>>, vector<4x16xf32>,
    %c0_100 = arith.constant 0 : index
    %c0_101 = arith.constant 0 : index
    %101 = vector.load %arg11[%c0_100, %c0_101] : memref<64x16xf32, #tpu.memory_space<vmem>>, vector<64x16xf32>
    %c0_102 = arith.constant 0 : index
    %c0_103 = arith.constant 0 : index
    %102 = vector.load %arg4[%c0_102, %c0_103] : memref<16x32xf32, #tpu.memory_space<vmem>>, vector<16x32xf32>
    %cst_104 = arith.constant dense<0.000000e+00> : vector<64x32xf32>
    %103 = tpu.matmul %101, %102, %cst_104 {dimension_numbers = #tpu.dot_dimension_numbers<[1], [0], [0], [1], [0, 0, 1, 1], [], []>} : vector<64x16xf32>, vector<16x32xf32>, vector<64x32xf32> -> vector<64x32xf32>
    %c0_105 = arith.constant 0 : index
    %c0_106 = arith.constant 0 : index
    %104 = vector.load %arg12[%c0_105, %c0_106] : memref<64x32xf32, #tpu.memory_space<vmem>>, vector<64x32xf32>
    tpu.vector_store %arg12[%c0_105, %c0_106], %103 {strides = array<i32>} : memref<64x32xf32, #tpu.memory_space<vmem>>, vector<64x32xf32>,
    %cst_107 = arith.constant 0.000000e+00 : f32
    %105 = vector.broadcast %cst_107 : f32 to vector<4x1280xf32>
    %c0_108 = arith.constant 0 : index
    %c0_109 = arith.constant 0 : index
    %106 = vector.load %arg13[%c0_108, %c0_109] : memref<4x1280xf32, #tpu.memory_space<vmem>>, vector<4x1280xf32>
    tpu.vector_store %arg13[%c0_108, %c0_109], %105 {strides = array<i32>} : memref<4x1280xf32, #tpu.memory_space<vmem>>, vector<4x1280xf32>,
    %c0_110 = arith.constant 0 : index
    %c0_111 = arith.constant 0 : index
    %107 = vector.load %arg12[%c0_110, %c0_111] : memref<64x32xf32, #tpu.memory_space<vmem>>, vector<4x32xf32>
    %cst_112 = arith.constant 1.000000e+00 : f32
    %108 = vector.broadcast %cst_112 : f32 to vector<4x32xf32>
    %109 = arith.mulf %108, %107 : vector<4x32xf32>
    %c4_113 = arith.constant 4 : index
    %c0_114 = arith.constant 0 : index
    %110 = vector.load %arg12[%c4_113, %c0_114] : memref<64x32xf32, #tpu.memory_space<vmem>>, vector<4x32xf32>
    %cst_115 = arith.constant 0.000000e+00 : f32
    %111 = vector.broadcast %cst_115 : f32 to vector<4x32xf32>
    %112 = arith.mulf %111, %110 : vector<4x32xf32>
    %113 = arith.addf %109, %112 : vector<4x32xf32>
    %c0_116 = arith.constant 0 : index
    %c37 = arith.constant 37 : index
    %114 = vector.load %arg13[%c0_116, %c37] : memref<4x1280xf32, #tpu.memory_space<vmem>>, vector<4x32xf32>
    tpu.vector_store %arg13[%c0_116, %c37], %113 {strides = array<i32>} : memref<4x1280xf32, #tpu.memory_space<vmem>>, vector<4x32xf32>,
    %c0_117 = arith.constant 0 : index
    %c0_118 = arith.constant 0 : index
    %115 = vector.load %arg12[%c0_117, %c0_118] : memref<64x32xf32, #tpu.memory_space<vmem>>, vector<4x32xf32>
    %cst_119 = arith.constant 7.500000e-01 : f32
    %116 = vector.broadcast %cst_119 : f32 to vector<4x32xf32>
    %117 = arith.mulf %116, %115 : vector<4x32xf32>
    %c4_120 = arith.constant 4 : index
    %c0_121 = arith.constant 0 : index
    %118 = vector.load %arg12[%c4_120, %c0_121] : memref<64x32xf32, #tpu.memory_space<vmem>>, vector<4x32xf32>
    %cst_122 = arith.constant 2.500000e-01 : f32
    %119 = vector.broadcast %cst_122 : f32 to vector<4x32xf32>
    %120 = arith.mulf %119, %118 : vector<4x32xf32>
    %121 = arith.addf %117, %120 : vector<4x32xf32>
    %c0_123 = arith.constant 0 : index
    %c73_124 = arith.constant 73 : index
    %122 = vector.load %arg13[%c0_123, %c73_124] : memref<4x1280xf32, #tpu.memory_space<vmem>>, vector<4x32xf32>
    tpu.vector_store %arg13[%c0_123, %c73_124], %121 {strides = array<i32>} : memref<4x1280xf32, #tpu.memory_space<vmem>>, vector<4x32xf32>,
    %c0_125 = arith.constant 0 : index
    %c0_126 = arith.constant 0 : index
    %123 = vector.load %arg12[%c0_125, %c0_126] : memref<64x32xf32, #tpu.memory_space<vmem>>, vector<4x32xf32>
    %cst_127 = arith.constant 2.500000e-01 : f32
    %124 = vector.broadcast %cst_127 : f32 to vector<4x32xf32>
    %125 = arith.mulf %124, %123 : vector<4x32xf32>
    %c4_128 = arith.constant 4 : index
    %c0_129 = arith.constant 0 : index
    %126 = vector.load %arg12[%c4_128, %c0_129] : memref<64x32xf32, #tpu.memory_space<vmem>>, vector<4x32xf32>
    %cst_130 = arith.constant 7.500000e-01 : f32
    %127 = vector.broadcast %cst_130 : f32 to vector<4x32xf32>
    %128 = arith.mulf %127, %126 : vector<4x32xf32>
    %129 = arith.addf %125, %128 : vector<4x32xf32>
    %c0_131 = arith.constant 0 : index
    %c109 = arith.constant 109 : index
    %130 = vector.load %arg13[%c0_131, %c109] : memref<4x1280xf32, #tpu.memory_space<vmem>>, vector<4x32xf32>
    tpu.vector_store %arg13[%c0_131, %c109], %129 {strides = array<i32>} : memref<4x1280xf32, #tpu.memory_space<vmem>>, vector<4x32xf32>,
    %c4_132 = arith.constant 4 : index
    %c0_133 = arith.constant 0 : index
    %131 = vector.load %arg12[%c4_132, %c0_133] : memref<64x32xf32, #tpu.memory_space<vmem>>, vector<4x32xf32>
    %cst_134 = arith.constant 7.500000e-01 : f32
    %132 = vector.broadcast %cst_134 : f32 to vector<4x32xf32>
    %133 = arith.mulf %132, %131 : vector<4x32xf32>
    %c8_135 = arith.constant 8 : index
    %c0_136 = arith.constant 0 : index
    %134 = vector.load %arg12[%c8_135, %c0_136] : memref<64x32xf32, #tpu.memory_space<vmem>>, vector<4x32xf32>
    %cst_137 = arith.constant 2.500000e-01 : f32
    %135 = vector.broadcast %cst_137 : f32 to vector<4x32xf32>
    %136 = arith.mulf %135, %134 : vector<4x32xf32>
    %137 = arith.addf %133, %136 : vector<4x32xf32>
    %c0_138 = arith.constant 0 : index
    %c145_139 = arith.constant 145 : index
    %138 = vector.load %arg13[%c0_138, %c145_139] : memref<4x1280xf32, #tpu.memory_space<vmem>>, vector<4x32xf32>
    tpu.vector_store %arg13[%c0_138, %c145_139], %137 {strides = array<i32>} : memref<4x1280xf32, #tpu.memory_space<vmem>>, vector<4x32xf32>,
    %c4_140 = arith.constant 4 : index
    %c0_141 = arith.constant 0 : index
    %139 = vector.load %arg12[%c4_140, %c0_141] : memref<64x32xf32, #tpu.memory_space<vmem>>, vector<4x32xf32>
    %cst_142 = arith.constant 2.500000e-01 : f32
    %140 = vector.broadcast %cst_142 : f32 to vector<4x32xf32>
    %141 = arith.mulf %140, %139 : vector<4x32xf32>
    %c8_143 = arith.constant 8 : index
    %c0_144 = arith.constant 0 : index
    %142 = vector.load %arg12[%c8_143, %c0_144] : memref<64x32xf32, #tpu.memory_space<vmem>>, vector<4x32xf32>
    %cst_145 = arith.constant 7.500000e-01 : f32
    %143 = vector.broadcast %cst_145 : f32 to vector<4x32xf32>
    %144 = arith.mulf %143, %142 : vector<4x32xf32>
    %145 = arith.addf %141, %144 : vector<4x32xf32>
    %c0_146 = arith.constant 0 : index
    %c181 = arith.constant 181 : index
    %146 = vector.load %arg13[%c0_146, %c181] : memref<4x1280xf32, #tpu.memory_space<vmem>>, vector<4x32xf32>
    tpu.vector_store %arg13[%c0_146, %c181], %145 {strides = array<i32>} : memref<4x1280xf32, #tpu.memory_space<vmem>>, vector<4x32xf32>,
    %c8_147 = arith.constant 8 : index
    %c0_148 = arith.constant 0 : index
    %147 = vector.load %arg12[%c8_147, %c0_148] : memref<64x32xf32, #tpu.memory_space<vmem>>, vector<4x32xf32>
    %cst_149 = arith.constant 7.500000e-01 : f32
    %148 = vector.broadcast %cst_149 : f32 to vector<4x32xf32>
    %149 = arith.mulf %148, %147 : vector<4x32xf32>
    %c12_150 = arith.constant 12 : index
    %c0_151 = arith.constant 0 : index
    %150 = vector.load %arg12[%c12_150, %c0_151] : memref<64x32xf32, #tpu.memory_space<vmem>>, vector<4x32xf32>
    %cst_152 = arith.constant 2.500000e-01 : f32
    %151 = vector.broadcast %cst_152 : f32 to vector<4x32xf32>
    %152 = arith.mulf %151, %150 : vector<4x32xf32>
    %153 = arith.addf %149, %152 : vector<4x32xf32>
    %c0_153 = arith.constant 0 : index
    %c217_154 = arith.constant 217 : index
    %154 = vector.load %arg13[%c0_153, %c217_154] : memref<4x1280xf32, #tpu.memory_space<vmem>>, vector<4x32xf32>
    tpu.vector_store %arg13[%c0_153, %c217_154], %153 {strides = array<i32>} : memref<4x1280xf32, #tpu.memory_space<vmem>>, vector<4x32xf32>,
    %c8_155 = arith.constant 8 : index
    %c0_156 = arith.constant 0 : index
    %155 = vector.load %arg12[%c8_155, %c0_156] : memref<64x32xf32, #tpu.memory_space<vmem>>, vector<4x32xf32>
    %cst_157 = arith.constant 2.500000e-01 : f32
    %156 = vector.broadcast %cst_157 : f32 to vector<4x32xf32>
    %157 = arith.mulf %156, %155 : vector<4x32xf32>
    %c12_158 = arith.constant 12 : index
    %c0_159 = arith.constant 0 : index
    %158 = vector.load %arg12[%c12_158, %c0_159] : memref<64x32xf32, #tpu.memory_space<vmem>>, vector<4x32xf32>
    %cst_160 = arith.constant 7.500000e-01 : f32
    %159 = vector.broadcast %cst_160 : f32 to vector<4x32xf32>
    %160 = arith.mulf %159, %158 : vector<4x32xf32>
    %161 = arith.addf %157, %160 : vector<4x32xf32>
    %c0_161 = arith.constant 0 : index
    %c253 = arith.constant 253 : index
    %162 = vector.load %arg13[%c0_161, %c253] : memref<4x1280xf32, #tpu.memory_space<vmem>>, vector<4x32xf32>
    tpu.vector_store %arg13[%c0_161, %c253], %161 {strides = array<i32>} : memref<4x1280xf32, #tpu.memory_space<vmem>>, vector<4x32xf32>,
    %c12_162 = arith.constant 12 : index
    %c0_163 = arith.constant 0 : index
    %163 = vector.load %arg12[%c12_162, %c0_163] : memref<64x32xf32, #tpu.memory_space<vmem>>, vector<4x32xf32>
    %cst_164 = arith.constant 7.500000e-01 : f32
    %164 = vector.broadcast %cst_164 : f32 to vector<4x32xf32>
    %165 = arith.mulf %164, %163 : vector<4x32xf32>
    %c16_165 = arith.constant 16 : index
    %c0_166 = arith.constant 0 : index
    %166 = vector.load %arg12[%c16_165, %c0_166] : memref<64x32xf32, #tpu.memory_space<vmem>>, vector<4x32xf32>
    %cst_167 = arith.constant 2.500000e-01 : f32
    %167 = vector.broadcast %cst_167 : f32 to vector<4x32xf32>
    %168 = arith.mulf %167, %166 : vector<4x32xf32>
    %169 = arith.addf %165, %168 : vector<4x32xf32>
    %c0_168 = arith.constant 0 : index
    %c289_169 = arith.constant 289 : index
    %170 = vector.load %arg13[%c0_168, %c289_169] : memref<4x1280xf32, #tpu.memory_space<vmem>>, vector<4x32xf32>
    tpu.vector_store %arg13[%c0_168, %c289_169], %169 {strides = array<i32>} : memref<4x1280xf32, #tpu.memory_space<vmem>>, vector<4x32xf32>,
    %c12_170 = arith.constant 12 : index
    %c0_171 = arith.constant 0 : index
    %171 = vector.load %arg12[%c12_170, %c0_171] : memref<64x32xf32, #tpu.memory_space<vmem>>, vector<4x32xf32>
    %cst_172 = arith.constant 2.500000e-01 : f32
    %172 = vector.broadcast %cst_172 : f32 to vector<4x32xf32>
    %173 = arith.mulf %172, %171 : vector<4x32xf32>
    %c16_173 = arith.constant 16 : index
    %c0_174 = arith.constant 0 : index
    %174 = vector.load %arg12[%c16_173, %c0_174] : memref<64x32xf32, #tpu.memory_space<vmem>>, vector<4x32xf32>
    %cst_175 = arith.constant 7.500000e-01 : f32
    %175 = vector.broadcast %cst_175 : f32 to vector<4x32xf32>
    %176 = arith.mulf %175, %174 : vector<4x32xf32>
    %177 = arith.addf %173, %176 : vector<4x32xf32>
    %c0_176 = arith.constant 0 : index
    %c325 = arith.constant 325 : index
    %178 = vector.load %arg13[%c0_176, %c325] : memref<4x1280xf32, #tpu.memory_space<vmem>>, vector<4x32xf32>
    tpu.vector_store %arg13[%c0_176, %c325], %177 {strides = array<i32>} : memref<4x1280xf32, #tpu.memory_space<vmem>>, vector<4x32xf32>,
    %c16_177 = arith.constant 16 : index
    %c0_178 = arith.constant 0 : index
    %179 = vector.load %arg12[%c16_177, %c0_178] : memref<64x32xf32, #tpu.memory_space<vmem>>, vector<4x32xf32>
    %cst_179 = arith.constant 7.500000e-01 : f32
    %180 = vector.broadcast %cst_179 : f32 to vector<4x32xf32>
    %181 = arith.mulf %180, %179 : vector<4x32xf32>
    %c20_180 = arith.constant 20 : index
    %c0_181 = arith.constant 0 : index
    %182 = vector.load %arg12[%c20_180, %c0_181] : memref<64x32xf32, #tpu.memory_space<vmem>>, vector<4x32xf32>
    %cst_182 = arith.constant 2.500000e-01 : f32
    %183 = vector.broadcast %cst_182 : f32 to vector<4x32xf32>
    %184 = arith.mulf %183, %182 : vector<4x32xf32>
    %185 = arith.addf %181, %184 : vector<4x32xf32>
    %c0_183 = arith.constant 0 : index
    %c361_184 = arith.constant 361 : index
    %186 = vector.load %arg13[%c0_183, %c361_184] : memref<4x1280xf32, #tpu.memory_space<vmem>>, vector<4x32xf32>
    tpu.vector_store %arg13[%c0_183, %c361_184], %185 {strides = array<i32>} : memref<4x1280xf32, #tpu.memory_space<vmem>>, vector<4x32xf32>,
    %c16_185 = arith.constant 16 : index
    %c0_186 = arith.constant 0 : index
    %187 = vector.load %arg12[%c16_185, %c0_186] : memref<64x32xf32, #tpu.memory_space<vmem>>, vector<4x32xf32>
    %cst_187 = arith.constant 2.500000e-01 : f32
    %188 = vector.broadcast %cst_187 : f32 to vector<4x32xf32>
    %189 = arith.mulf %188, %187 : vector<4x32xf32>
    %c20_188 = arith.constant 20 : index
    %c0_189 = arith.constant 0 : index
    %190 = vector.load %arg12[%c20_188, %c0_189] : memref<64x32xf32, #tpu.memory_space<vmem>>, vector<4x32xf32>
    %cst_190 = arith.constant 7.500000e-01 : f32
    %191 = vector.broadcast %cst_190 : f32 to vector<4x32xf32>
    %192 = arith.mulf %191, %190 : vector<4x32xf32>
    %193 = arith.addf %189, %192 : vector<4x32xf32>
    %c0_191 = arith.constant 0 : index
    %c397 = arith.constant 397 : index
    %194 = vector.load %arg13[%c0_191, %c397] : memref<4x1280xf32, #tpu.memory_space<vmem>>, vector<4x32xf32>
    tpu.vector_store %arg13[%c0_191, %c397], %193 {strides = array<i32>} : memref<4x1280xf32, #tpu.memory_space<vmem>>, vector<4x32xf32>,
    %c20_192 = arith.constant 20 : index
    %c0_193 = arith.constant 0 : index
    %195 = vector.load %arg12[%c20_192, %c0_193] : memref<64x32xf32, #tpu.memory_space<vmem>>, vector<4x32xf32>
    %cst_194 = arith.constant 7.500000e-01 : f32
    %196 = vector.broadcast %cst_194 : f32 to vector<4x32xf32>
    %197 = arith.mulf %196, %195 : vector<4x32xf32>
    %c24_195 = arith.constant 24 : index
    %c0_196 = arith.constant 0 : index
    %198 = vector.load %arg12[%c24_195, %c0_196] : memref<64x32xf32, #tpu.memory_space<vmem>>, vector<4x32xf32>
    %cst_197 = arith.constant 2.500000e-01 : f32
    %199 = vector.broadcast %cst_197 : f32 to vector<4x32xf32>
    %200 = arith.mulf %199, %198 : vector<4x32xf32>
    %201 = arith.addf %197, %200 : vector<4x32xf32>
    %c0_198 = arith.constant 0 : index
    %c433 = arith.constant 433 : index
    %202 = vector.load %arg13[%c0_198, %c433] : memref<4x1280xf32, #tpu.memory_space<vmem>>, vector<4x32xf32>
    tpu.vector_store %arg13[%c0_198, %c433], %201 {strides = array<i32>} : memref<4x1280xf32, #tpu.memory_space<vmem>>, vector<4x32xf32>,
    %c20_199 = arith.constant 20 : index
    %c0_200 = arith.constant 0 : index
    %203 = vector.load %arg12[%c20_199, %c0_200] : memref<64x32xf32, #tpu.memory_space<vmem>>, vector<4x32xf32>
    %cst_201 = arith.constant 2.500000e-01 : f32
    %204 = vector.broadcast %cst_201 : f32 to vector<4x32xf32>
    %205 = arith.mulf %204, %203 : vector<4x32xf32>
    %c24_202 = arith.constant 24 : index
    %c0_203 = arith.constant 0 : index
    %206 = vector.load %arg12[%c24_202, %c0_203] : memref<64x32xf32, #tpu.memory_space<vmem>>, vector<4x32xf32>
    %cst_204 = arith.constant 7.500000e-01 : f32
    %207 = vector.broadcast %cst_204 : f32 to vector<4x32xf32>
    %208 = arith.mulf %207, %206 : vector<4x32xf32>
    %209 = arith.addf %205, %208 : vector<4x32xf32>
    %c0_205 = arith.constant 0 : index
    %c469 = arith.constant 469 : index
    %210 = vector.load %arg13[%c0_205, %c469] : memref<4x1280xf32, #tpu.memory_space<vmem>>, vector<4x32xf32>
    tpu.vector_store %arg13[%c0_205, %c469], %209 {strides = array<i32>} : memref<4x1280xf32, #tpu.memory_space<vmem>>, vector<4x32xf32>,
    %c24_206 = arith.constant 24 : index
    %c0_207 = arith.constant 0 : index
    %211 = vector.load %arg12[%c24_206, %c0_207] : memref<64x32xf32, #tpu.memory_space<vmem>>, vector<4x32xf32>
    %cst_208 = arith.constant 7.500000e-01 : f32
    %212 = vector.broadcast %cst_208 : f32 to vector<4x32xf32>
    %213 = arith.mulf %212, %211 : vector<4x32xf32>
    %c28_209 = arith.constant 28 : index
    %c0_210 = arith.constant 0 : index
    %214 = vector.load %arg12[%c28_209, %c0_210] : memref<64x32xf32, #tpu.memory_space<vmem>>, vector<4x32xf32>
    %cst_211 = arith.constant 2.500000e-01 : f32
    %215 = vector.broadcast %cst_211 : f32 to vector<4x32xf32>
    %216 = arith.mulf %215, %214 : vector<4x32xf32>
    %217 = arith.addf %213, %216 : vector<4x32xf32>
    %c0_212 = arith.constant 0 : index
    %c505 = arith.constant 505 : index
    %218 = vector.load %arg13[%c0_212, %c505] : memref<4x1280xf32, #tpu.memory_space<vmem>>, vector<4x32xf32>
    tpu.vector_store %arg13[%c0_212, %c505], %217 {strides = array<i32>} : memref<4x1280xf32, #tpu.memory_space<vmem>>, vector<4x32xf32>,
    %c24_213 = arith.constant 24 : index
    %c0_214 = arith.constant 0 : index
    %219 = vector.load %arg12[%c24_213, %c0_214] : memref<64x32xf32, #tpu.memory_space<vmem>>, vector<4x32xf32>
    %cst_215 = arith.constant 2.500000e-01 : f32
    %220 = vector.broadcast %cst_215 : f32 to vector<4x32xf32>
    %221 = arith.mulf %220, %219 : vector<4x32xf32>
    %c28_216 = arith.constant 28 : index
    %c0_217 = arith.constant 0 : index
    %222 = vector.load %arg12[%c28_216, %c0_217] : memref<64x32xf32, #tpu.memory_space<vmem>>, vector<4x32xf32>
    %cst_218 = arith.constant 7.500000e-01 : f32
    %223 = vector.broadcast %cst_218 : f32 to vector<4x32xf32>
    %224 = arith.mulf %223, %222 : vector<4x32xf32>
    %225 = arith.addf %221, %224 : vector<4x32xf32>
    %c0_219 = arith.constant 0 : index
    %c541 = arith.constant 541 : index
    %226 = vector.load %arg13[%c0_219, %c541] : memref<4x1280xf32, #tpu.memory_space<vmem>>, vector<4x32xf32>
    tpu.vector_store %arg13[%c0_219, %c541], %225 {strides = array<i32>} : memref<4x1280xf32, #tpu.memory_space<vmem>>, vector<4x32xf32>,
    %c28_220 = arith.constant 28 : index
    %c0_221 = arith.constant 0 : index
    %227 = vector.load %arg12[%c28_220, %c0_221] : memref<64x32xf32, #tpu.memory_space<vmem>>, vector<4x32xf32>
    %cst_222 = arith.constant 7.500000e-01 : f32
    %228 = vector.broadcast %cst_222 : f32 to vector<4x32xf32>
    %229 = arith.mulf %228, %227 : vector<4x32xf32>
    %c32_223 = arith.constant 32 : index
    %c0_224 = arith.constant 0 : index
    %230 = vector.load %arg12[%c32_223, %c0_224] : memref<64x32xf32, #tpu.memory_space<vmem>>, vector<4x32xf32>
    %cst_225 = arith.constant 2.500000e-01 : f32
    %231 = vector.broadcast %cst_225 : f32 to vector<4x32xf32>
    %232 = arith.mulf %231, %230 : vector<4x32xf32>
    %233 = arith.addf %229, %232 : vector<4x32xf32>
    %c0_226 = arith.constant 0 : index
    %c577 = arith.constant 577 : index
    %234 = vector.load %arg13[%c0_226, %c577] : memref<4x1280xf32, #tpu.memory_space<vmem>>, vector<4x32xf32>
    tpu.vector_store %arg13[%c0_226, %c577], %233 {strides = array<i32>} : memref<4x1280xf32, #tpu.memory_space<vmem>>, vector<4x32xf32>,
    %c28_227 = arith.constant 28 : index
    %c0_228 = arith.constant 0 : index
    %235 = vector.load %arg12[%c28_227, %c0_228] : memref<64x32xf32, #tpu.memory_space<vmem>>, vector<4x32xf32>
    %cst_229 = arith.constant 2.500000e-01 : f32
    %236 = vector.broadcast %cst_229 : f32 to vector<4x32xf32>
    %237 = arith.mulf %236, %235 : vector<4x32xf32>
    %c32_230 = arith.constant 32 : index
    %c0_231 = arith.constant 0 : index
    %238 = vector.load %arg12[%c32_230, %c0_231] : memref<64x32xf32, #tpu.memory_space<vmem>>, vector<4x32xf32>
    %cst_232 = arith.constant 7.500000e-01 : f32
    %239 = vector.broadcast %cst_232 : f32 to vector<4x32xf32>
    %240 = arith.mulf %239, %238 : vector<4x32xf32>
    %241 = arith.addf %237, %240 : vector<4x32xf32>
    %c0_233 = arith.constant 0 : index
    %c613 = arith.constant 613 : index
    %242 = vector.load %arg13[%c0_233, %c613] : memref<4x1280xf32, #tpu.memory_space<vmem>>, vector<4x32xf32>
    tpu.vector_store %arg13[%c0_233, %c613], %241 {strides = array<i32>} : memref<4x1280xf32, #tpu.memory_space<vmem>>, vector<4x32xf32>,
    %c32_234 = arith.constant 32 : index
    %c0_235 = arith.constant 0 : index
    %243 = vector.load %arg12[%c32_234, %c0_235] : memref<64x32xf32, #tpu.memory_space<vmem>>, vector<4x32xf32>
    %cst_236 = arith.constant 7.500000e-01 : f32
    %244 = vector.broadcast %cst_236 : f32 to vector<4x32xf32>
    %245 = arith.mulf %244, %243 : vector<4x32xf32>
    %c36_237 = arith.constant 36 : index
    %c0_238 = arith.constant 0 : index
    %246 = vector.load %arg12[%c36_237, %c0_238] : memref<64x32xf32, #tpu.memory_space<vmem>>, vector<4x32xf32>
    %cst_239 = arith.constant 2.500000e-01 : f32
    %247 = vector.broadcast %cst_239 : f32 to vector<4x32xf32>
    %248 = arith.mulf %247, %246 : vector<4x32xf32>
    %249 = arith.addf %245, %248 : vector<4x32xf32>
    %c0_240 = arith.constant 0 : index
    %c649 = arith.constant 649 : index
    %250 = vector.load %arg13[%c0_240, %c649] : memref<4x1280xf32, #tpu.memory_space<vmem>>, vector<4x32xf32>
    tpu.vector_store %arg13[%c0_240, %c649], %249 {strides = array<i32>} : memref<4x1280xf32, #tpu.memory_space<vmem>>, vector<4x32xf32>,
    %c32_241 = arith.constant 32 : index
    %c0_242 = arith.constant 0 : index
    %251 = vector.load %arg12[%c32_241, %c0_242] : memref<64x32xf32, #tpu.memory_space<vmem>>, vector<4x32xf32>
    %cst_243 = arith.constant 2.500000e-01 : f32
    %252 = vector.broadcast %cst_243 : f32 to vector<4x32xf32>
    %253 = arith.mulf %252, %251 : vector<4x32xf32>
    %c36_244 = arith.constant 36 : index
    %c0_245 = arith.constant 0 : index
    %254 = vector.load %arg12[%c36_244, %c0_245] : memref<64x32xf32, #tpu.memory_space<vmem>>, vector<4x32xf32>
    %cst_246 = arith.constant 7.500000e-01 : f32
    %255 = vector.broadcast %cst_246 : f32 to vector<4x32xf32>
    %256 = arith.mulf %255, %254 : vector<4x32xf32>
    %257 = arith.addf %253, %256 : vector<4x32xf32>
    %c0_247 = arith.constant 0 : index
    %c685 = arith.constant 685 : index
    %258 = vector.load %arg13[%c0_247, %c685] : memref<4x1280xf32, #tpu.memory_space<vmem>>, vector<4x32xf32>
    tpu.vector_store %arg13[%c0_247, %c685], %257 {strides = array<i32>} : memref<4x1280xf32, #tpu.memory_space<vmem>>, vector<4x32xf32>,
    %c36_248 = arith.constant 36 : index
    %c0_249 = arith.constant 0 : index
    %259 = vector.load %arg12[%c36_248, %c0_249] : memref<64x32xf32, #tpu.memory_space<vmem>>, vector<4x32xf32>
    %cst_250 = arith.constant 7.500000e-01 : f32
    %260 = vector.broadcast %cst_250 : f32 to vector<4x32xf32>
    %261 = arith.mulf %260, %259 : vector<4x32xf32>
    %c40_251 = arith.constant 40 : index
    %c0_252 = arith.constant 0 : index
    %262 = vector.load %arg12[%c40_251, %c0_252] : memref<64x32xf32, #tpu.memory_space<vmem>>, vector<4x32xf32>
    %cst_253 = arith.constant 2.500000e-01 : f32
    %263 = vector.broadcast %cst_253 : f32 to vector<4x32xf32>
    %264 = arith.mulf %263, %262 : vector<4x32xf32>
    %265 = arith.addf %261, %264 : vector<4x32xf32>
    %c0_254 = arith.constant 0 : index
    %c721 = arith.constant 721 : index
    %266 = vector.load %arg13[%c0_254, %c721] : memref<4x1280xf32, #tpu.memory_space<vmem>>, vector<4x32xf32>
    tpu.vector_store %arg13[%c0_254, %c721], %265 {strides = array<i32>} : memref<4x1280xf32, #tpu.memory_space<vmem>>, vector<4x32xf32>,
    %c36_255 = arith.constant 36 : index
    %c0_256 = arith.constant 0 : index
    %267 = vector.load %arg12[%c36_255, %c0_256] : memref<64x32xf32, #tpu.memory_space<vmem>>, vector<4x32xf32>
    %cst_257 = arith.constant 2.500000e-01 : f32
    %268 = vector.broadcast %cst_257 : f32 to vector<4x32xf32>
    %269 = arith.mulf %268, %267 : vector<4x32xf32>
    %c40_258 = arith.constant 40 : index
    %c0_259 = arith.constant 0 : index
    %270 = vector.load %arg12[%c40_258, %c0_259] : memref<64x32xf32, #tpu.memory_space<vmem>>, vector<4x32xf32>
    %cst_260 = arith.constant 7.500000e-01 : f32
    %271 = vector.broadcast %cst_260 : f32 to vector<4x32xf32>
    %272 = arith.mulf %271, %270 : vector<4x32xf32>
    %273 = arith.addf %269, %272 : vector<4x32xf32>
    %c0_261 = arith.constant 0 : index
    %c757 = arith.constant 757 : index
    %274 = vector.load %arg13[%c0_261, %c757] : memref<4x1280xf32, #tpu.memory_space<vmem>>, vector<4x32xf32>
    tpu.vector_store %arg13[%c0_261, %c757], %273 {strides = array<i32>} : memref<4x1280xf32, #tpu.memory_space<vmem>>, vector<4x32xf32>,
    %c40_262 = arith.constant 40 : index
    %c0_263 = arith.constant 0 : index
    %275 = vector.load %arg12[%c40_262, %c0_263] : memref<64x32xf32, #tpu.memory_space<vmem>>, vector<4x32xf32>
    %cst_264 = arith.constant 7.500000e-01 : f32
    %276 = vector.broadcast %cst_264 : f32 to vector<4x32xf32>
    %277 = arith.mulf %276, %275 : vector<4x32xf32>
    %c44_265 = arith.constant 44 : index
    %c0_266 = arith.constant 0 : index
    %278 = vector.load %arg12[%c44_265, %c0_266] : memref<64x32xf32, #tpu.memory_space<vmem>>, vector<4x32xf32>
    %cst_267 = arith.constant 2.500000e-01 : f32
    %279 = vector.broadcast %cst_267 : f32 to vector<4x32xf32>
    %280 = arith.mulf %279, %278 : vector<4x32xf32>
    %281 = arith.addf %277, %280 : vector<4x32xf32>
    %c0_268 = arith.constant 0 : index
    %c793 = arith.constant 793 : index
    %282 = vector.load %arg13[%c0_268, %c793] : memref<4x1280xf32, #tpu.memory_space<vmem>>, vector<4x32xf32>
    tpu.vector_store %arg13[%c0_268, %c793], %281 {strides = array<i32>} : memref<4x1280xf32, #tpu.memory_space<vmem>>, vector<4x32xf32>,
    %c40_269 = arith.constant 40 : index
    %c0_270 = arith.constant 0 : index
    %283 = vector.load %arg12[%c40_269, %c0_270] : memref<64x32xf32, #tpu.memory_space<vmem>>, vector<4x32xf32>
    %cst_271 = arith.constant 2.500000e-01 : f32
    %284 = vector.broadcast %cst_271 : f32 to vector<4x32xf32>
    %285 = arith.mulf %284, %283 : vector<4x32xf32>
    %c44_272 = arith.constant 44 : index
    %c0_273 = arith.constant 0 : index
    %286 = vector.load %arg12[%c44_272, %c0_273] : memref<64x32xf32, #tpu.memory_space<vmem>>, vector<4x32xf32>
    %cst_274 = arith.constant 7.500000e-01 : f32
    %287 = vector.broadcast %cst_274 : f32 to vector<4x32xf32>
    %288 = arith.mulf %287, %286 : vector<4x32xf32>
    %289 = arith.addf %285, %288 : vector<4x32xf32>
    %c0_275 = arith.constant 0 : index
    %c829 = arith.constant 829 : index
    %290 = vector.load %arg13[%c0_275, %c829] : memref<4x1280xf32, #tpu.memory_space<vmem>>, vector<4x32xf32>
    tpu.vector_store %arg13[%c0_275, %c829], %289 {strides = array<i32>} : memref<4x1280xf32, #tpu.memory_space<vmem>>, vector<4x32xf32>,
    %c44_276 = arith.constant 44 : index
    %c0_277 = arith.constant 0 : index
    %291 = vector.load %arg12[%c44_276, %c0_277] : memref<64x32xf32, #tpu.memory_space<vmem>>, vector<4x32xf32>
    %cst_278 = arith.constant 7.500000e-01 : f32
    %292 = vector.broadcast %cst_278 : f32 to vector<4x32xf32>
    %293 = arith.mulf %292, %291 : vector<4x32xf32>
    %c48_279 = arith.constant 48 : index
    %c0_280 = arith.constant 0 : index
    %294 = vector.load %arg12[%c48_279, %c0_280] : memref<64x32xf32, #tpu.memory_space<vmem>>, vector<4x32xf32>
    %cst_281 = arith.constant 2.500000e-01 : f32
    %295 = vector.broadcast %cst_281 : f32 to vector<4x32xf32>
    %296 = arith.mulf %295, %294 : vector<4x32xf32>
    %297 = arith.addf %293, %296 : vector<4x32xf32>
    %c0_282 = arith.constant 0 : index
    %c865 = arith.constant 865 : index
    %298 = vector.load %arg13[%c0_282, %c865] : memref<4x1280xf32, #tpu.memory_space<vmem>>, vector<4x32xf32>
    tpu.vector_store %arg13[%c0_282, %c865], %297 {strides = array<i32>} : memref<4x1280xf32, #tpu.memory_space<vmem>>, vector<4x32xf32>,
    %c44_283 = arith.constant 44 : index
    %c0_284 = arith.constant 0 : index
    %299 = vector.load %arg12[%c44_283, %c0_284] : memref<64x32xf32, #tpu.memory_space<vmem>>, vector<4x32xf32>
    %cst_285 = arith.constant 2.500000e-01 : f32
    %300 = vector.broadcast %cst_285 : f32 to vector<4x32xf32>
    %301 = arith.mulf %300, %299 : vector<4x32xf32>
    %c48_286 = arith.constant 48 : index
    %c0_287 = arith.constant 0 : index
    %302 = vector.load %arg12[%c48_286, %c0_287] : memref<64x32xf32, #tpu.memory_space<vmem>>, vector<4x32xf32>
    %cst_288 = arith.constant 7.500000e-01 : f32
    %303 = vector.broadcast %cst_288 : f32 to vector<4x32xf32>
    %304 = arith.mulf %303, %302 : vector<4x32xf32>
    %305 = arith.addf %301, %304 : vector<4x32xf32>
    %c0_289 = arith.constant 0 : index
    %c901 = arith.constant 901 : index
    %306 = vector.load %arg13[%c0_289, %c901] : memref<4x1280xf32, #tpu.memory_space<vmem>>, vector<4x32xf32>
    tpu.vector_store %arg13[%c0_289, %c901], %305 {strides = array<i32>} : memref<4x1280xf32, #tpu.memory_space<vmem>>, vector<4x32xf32>,
    %c48_290 = arith.constant 48 : index
    %c0_291 = arith.constant 0 : index
    %307 = vector.load %arg12[%c48_290, %c0_291] : memref<64x32xf32, #tpu.memory_space<vmem>>, vector<4x32xf32>
    %cst_292 = arith.constant 7.500000e-01 : f32
    %308 = vector.broadcast %cst_292 : f32 to vector<4x32xf32>
    %309 = arith.mulf %308, %307 : vector<4x32xf32>
    %c52_293 = arith.constant 52 : index
    %c0_294 = arith.constant 0 : index
    %310 = vector.load %arg12[%c52_293, %c0_294] : memref<64x32xf32, #tpu.memory_space<vmem>>, vector<4x32xf32>
    %cst_295 = arith.constant 2.500000e-01 : f32
    %311 = vector.broadcast %cst_295 : f32 to vector<4x32xf32>
    %312 = arith.mulf %311, %310 : vector<4x32xf32>
    %313 = arith.addf %309, %312 : vector<4x32xf32>
    %c0_296 = arith.constant 0 : index
    %c937 = arith.constant 937 : index
    %314 = vector.load %arg13[%c0_296, %c937] : memref<4x1280xf32, #tpu.memory_space<vmem>>, vector<4x32xf32>
    tpu.vector_store %arg13[%c0_296, %c937], %313 {strides = array<i32>} : memref<4x1280xf32, #tpu.memory_space<vmem>>, vector<4x32xf32>,
    %c48_297 = arith.constant 48 : index
    %c0_298 = arith.constant 0 : index
    %315 = vector.load %arg12[%c48_297, %c0_298] : memref<64x32xf32, #tpu.memory_space<vmem>>, vector<4x32xf32>
    %cst_299 = arith.constant 2.500000e-01 : f32
    %316 = vector.broadcast %cst_299 : f32 to vector<4x32xf32>
    %317 = arith.mulf %316, %315 : vector<4x32xf32>
    %c52_300 = arith.constant 52 : index
    %c0_301 = arith.constant 0 : index
    %318 = vector.load %arg12[%c52_300, %c0_301] : memref<64x32xf32, #tpu.memory_space<vmem>>, vector<4x32xf32>
    %cst_302 = arith.constant 7.500000e-01 : f32
    %319 = vector.broadcast %cst_302 : f32 to vector<4x32xf32>
    %320 = arith.mulf %319, %318 : vector<4x32xf32>
    %321 = arith.addf %317, %320 : vector<4x32xf32>
    %c0_303 = arith.constant 0 : index
    %c973 = arith.constant 973 : index
    %322 = vector.load %arg13[%c0_303, %c973] : memref<4x1280xf32, #tpu.memory_space<vmem>>, vector<4x32xf32>
    tpu.vector_store %arg13[%c0_303, %c973], %321 {strides = array<i32>} : memref<4x1280xf32, #tpu.memory_space<vmem>>, vector<4x32xf32>,
    %c52_304 = arith.constant 52 : index
    %c0_305 = arith.constant 0 : index
    %323 = vector.load %arg12[%c52_304, %c0_305] : memref<64x32xf32, #tpu.memory_space<vmem>>, vector<4x32xf32>
    %cst_306 = arith.constant 7.500000e-01 : f32
    %324 = vector.broadcast %cst_306 : f32 to vector<4x32xf32>
    %325 = arith.mulf %324, %323 : vector<4x32xf32>
    %c56_307 = arith.constant 56 : index
    %c0_308 = arith.constant 0 : index
    %326 = vector.load %arg12[%c56_307, %c0_308] : memref<64x32xf32, #tpu.memory_space<vmem>>, vector<4x32xf32>
    %cst_309 = arith.constant 2.500000e-01 : f32
    %327 = vector.broadcast %cst_309 : f32 to vector<4x32xf32>
    %328 = arith.mulf %327, %326 : vector<4x32xf32>
    %329 = arith.addf %325, %328 : vector<4x32xf32>
    %c0_310 = arith.constant 0 : index
    %c1009 = arith.constant 1009 : index
    %330 = vector.load %arg13[%c0_310, %c1009] : memref<4x1280xf32, #tpu.memory_space<vmem>>, vector<4x32xf32>
    tpu.vector_store %arg13[%c0_310, %c1009], %329 {strides = array<i32>} : memref<4x1280xf32, #tpu.memory_space<vmem>>, vector<4x32xf32>,
    %c52_311 = arith.constant 52 : index
    %c0_312 = arith.constant 0 : index
    %331 = vector.load %arg12[%c52_311, %c0_312] : memref<64x32xf32, #tpu.memory_space<vmem>>, vector<4x32xf32>
    %cst_313 = arith.constant 2.500000e-01 : f32
    %332 = vector.broadcast %cst_313 : f32 to vector<4x32xf32>
    %333 = arith.mulf %332, %331 : vector<4x32xf32>
    %c56_314 = arith.constant 56 : index
    %c0_315 = arith.constant 0 : index
    %334 = vector.load %arg12[%c56_314, %c0_315] : memref<64x32xf32, #tpu.memory_space<vmem>>, vector<4x32xf32>
    %cst_316 = arith.constant 7.500000e-01 : f32
    %335 = vector.broadcast %cst_316 : f32 to vector<4x32xf32>
    %336 = arith.mulf %335, %334 : vector<4x32xf32>
    %337 = arith.addf %333, %336 : vector<4x32xf32>
    %c0_317 = arith.constant 0 : index
    %c1045 = arith.constant 1045 : index
    %338 = vector.load %arg13[%c0_317, %c1045] : memref<4x1280xf32, #tpu.memory_space<vmem>>, vector<4x32xf32>
    tpu.vector_store %arg13[%c0_317, %c1045], %337 {strides = array<i32>} : memref<4x1280xf32, #tpu.memory_space<vmem>>, vector<4x32xf32>,
    %c56_318 = arith.constant 56 : index
    %c0_319 = arith.constant 0 : index
    %339 = vector.load %arg12[%c56_318, %c0_319] : memref<64x32xf32, #tpu.memory_space<vmem>>, vector<4x32xf32>
    %cst_320 = arith.constant 7.500000e-01 : f32
    %340 = vector.broadcast %cst_320 : f32 to vector<4x32xf32>
    %341 = arith.mulf %340, %339 : vector<4x32xf32>
    %c60_321 = arith.constant 60 : index
    %c0_322 = arith.constant 0 : index
    %342 = vector.load %arg12[%c60_321, %c0_322] : memref<64x32xf32, #tpu.memory_space<vmem>>, vector<4x32xf32>
    %cst_323 = arith.constant 2.500000e-01 : f32
    %343 = vector.broadcast %cst_323 : f32 to vector<4x32xf32>
    %344 = arith.mulf %343, %342 : vector<4x32xf32>
    %345 = arith.addf %341, %344 : vector<4x32xf32>
    %c0_324 = arith.constant 0 : index
    %c1081 = arith.constant 1081 : index
    %346 = vector.load %arg13[%c0_324, %c1081] : memref<4x1280xf32, #tpu.memory_space<vmem>>, vector<4x32xf32>
    tpu.vector_store %arg13[%c0_324, %c1081], %345 {strides = array<i32>} : memref<4x1280xf32, #tpu.memory_space<vmem>>, vector<4x32xf32>,
    %c56_325 = arith.constant 56 : index
    %c0_326 = arith.constant 0 : index
    %347 = vector.load %arg12[%c56_325, %c0_326] : memref<64x32xf32, #tpu.memory_space<vmem>>, vector<4x32xf32>
    %cst_327 = arith.constant 2.500000e-01 : f32
    %348 = vector.broadcast %cst_327 : f32 to vector<4x32xf32>
    %349 = arith.mulf %348, %347 : vector<4x32xf32>
    %c60_328 = arith.constant 60 : index
    %c0_329 = arith.constant 0 : index
    %350 = vector.load %arg12[%c60_328, %c0_329] : memref<64x32xf32, #tpu.memory_space<vmem>>, vector<4x32xf32>
    %cst_330 = arith.constant 7.500000e-01 : f32
    %351 = vector.broadcast %cst_330 : f32 to vector<4x32xf32>
    %352 = arith.mulf %351, %350 : vector<4x32xf32>
    %353 = arith.addf %349, %352 : vector<4x32xf32>
    %c0_331 = arith.constant 0 : index
    %c1117 = arith.constant 1117 : index
    %354 = vector.load %arg13[%c0_331, %c1117] : memref<4x1280xf32, #tpu.memory_space<vmem>>, vector<4x32xf32>
    tpu.vector_store %arg13[%c0_331, %c1117], %353 {strides = array<i32>} : memref<4x1280xf32, #tpu.memory_space<vmem>>, vector<4x32xf32>,
    %c60_332 = arith.constant 60 : index
    %c0_333 = arith.constant 0 : index
    %355 = vector.load %arg12[%c60_332, %c0_333] : memref<64x32xf32, #tpu.memory_space<vmem>>, vector<4x32xf32>
    %cst_334 = arith.constant 7.500000e-01 : f32
    %356 = vector.broadcast %cst_334 : f32 to vector<4x32xf32>
    %357 = arith.mulf %356, %355 : vector<4x32xf32>
    %c60_335 = arith.constant 60 : index
    %c0_336 = arith.constant 0 : index
    %358 = vector.load %arg12[%c60_335, %c0_336] : memref<64x32xf32, #tpu.memory_space<vmem>>, vector<4x32xf32>
    %cst_337 = arith.constant 2.500000e-01 : f32
    %359 = vector.broadcast %cst_337 : f32 to vector<4x32xf32>
    %360 = arith.mulf %359, %358 : vector<4x32xf32>
    %361 = arith.addf %357, %360 : vector<4x32xf32>
    %c0_338 = arith.constant 0 : index
    %c1153 = arith.constant 1153 : index
    %362 = vector.load %arg13[%c0_338, %c1153] : memref<4x1280xf32, #tpu.memory_space<vmem>>, vector<4x32xf32>
    tpu.vector_store %arg13[%c0_338, %c1153], %361 {strides = array<i32>} : memref<4x1280xf32, #tpu.memory_space<vmem>>, vector<4x32xf32>,
    %c0_339 = arith.constant 0 : index
    %c0_340 = arith.constant 0 : index
    %363 = vector.load %arg13[%c0_339, %c0_340] : memref<4x1280xf32, #tpu.memory_space<vmem>>, vector<4x1152xf32>
    %c0_341 = arith.constant 0 : index
    %c0_342 = arith.constant 0 : index
    %364 = vector.load %arg14[%c0_341, %c0_342] : memref<36x1152xf32, #tpu.memory_space<vmem>>, vector<4x1152xf32>
    tpu.vector_store %arg14[%c0_341, %c0_342], %363 {strides = array<i32>} : memref<36x1152xf32, #tpu.memory_space<vmem>>, vector<4x1152xf32>,
    %c0_343 = arith.constant 0 : index
    %c1_344 = arith.constant 1 : index
    %365 = vector.load %arg13[%c0_343, %c1_344] : memref<4x1280xf32, #tpu.memory_space<vmem>>, vector<4x1152xf32>
    %c4_345 = arith.constant 4 : index
    %c0_346 = arith.constant 0 : index
    %366 = vector.load %arg14[%c4_345, %c0_346] : memref<36x1152xf32, #tpu.memory_space<vmem>>, vector<4x1152xf32>
    tpu.vector_store %arg14[%c4_345, %c0_346], %365 {strides = array<i32>} : memref<36x1152xf32, #tpu.memory_space<vmem>>, vector<4x1152xf32>,
    %c0_347 = arith.constant 0 : index
    %c2_348 = arith.constant 2 : index
    %367 = vector.load %arg13[%c0_347, %c2_348] : memref<4x1280xf32, #tpu.memory_space<vmem>>, vector<4x1152xf32>
    %c8_349 = arith.constant 8 : index
    %c0_350 = arith.constant 0 : index
    %368 = vector.load %arg14[%c8_349, %c0_350] : memref<36x1152xf32, #tpu.memory_space<vmem>>, vector<4x1152xf32>
    tpu.vector_store %arg14[%c8_349, %c0_350], %367 {strides = array<i32>} : memref<36x1152xf32, #tpu.memory_space<vmem>>, vector<4x1152xf32>,
    %c0_351 = arith.constant 0 : index
    %c36_352 = arith.constant 36 : index
    %369 = vector.load %arg13[%c0_351, %c36_352] : memref<4x1280xf32, #tpu.memory_space<vmem>>, vector<4x1152xf32>
    %c12_353 = arith.constant 12 : index
    %c0_354 = arith.constant 0 : index
    %370 = vector.load %arg14[%c12_353, %c0_354] : memref<36x1152xf32, #tpu.memory_space<vmem>>, vector<4x1152xf32>
    tpu.vector_store %arg14[%c12_353, %c0_354], %369 {strides = array<i32>} : memref<36x1152xf32, #tpu.memory_space<vmem>>, vector<4x1152xf32>,
    %c0_355 = arith.constant 0 : index
    %c37_356 = arith.constant 37 : index
    %371 = vector.load %arg13[%c0_355, %c37_356] : memref<4x1280xf32, #tpu.memory_space<vmem>>, vector<4x1152xf32>
    %c16_357 = arith.constant 16 : index
    %c0_358 = arith.constant 0 : index
    %372 = vector.load %arg14[%c16_357, %c0_358] : memref<36x1152xf32, #tpu.memory_space<vmem>>, vector<4x1152xf32>
    tpu.vector_store %arg14[%c16_357, %c0_358], %371 {strides = array<i32>} : memref<36x1152xf32, #tpu.memory_space<vmem>>, vector<4x1152xf32>,
    %c0_359 = arith.constant 0 : index
    %c38 = arith.constant 38 : index
    %373 = vector.load %arg13[%c0_359, %c38] : memref<4x1280xf32, #tpu.memory_space<vmem>>, vector<4x1152xf32>
    %c20_360 = arith.constant 20 : index
    %c0_361 = arith.constant 0 : index
    %374 = vector.load %arg14[%c20_360, %c0_361] : memref<36x1152xf32, #tpu.memory_space<vmem>>, vector<4x1152xf32>
    tpu.vector_store %arg14[%c20_360, %c0_361], %373 {strides = array<i32>} : memref<36x1152xf32, #tpu.memory_space<vmem>>, vector<4x1152xf32>,
    %c0_362 = arith.constant 0 : index
    %c72_363 = arith.constant 72 : index
    %375 = vector.load %arg13[%c0_362, %c72_363] : memref<4x1280xf32, #tpu.memory_space<vmem>>, vector<4x1152xf32>
    %c24_364 = arith.constant 24 : index
    %c0_365 = arith.constant 0 : index
    %376 = vector.load %arg14[%c24_364, %c0_365] : memref<36x1152xf32, #tpu.memory_space<vmem>>, vector<4x1152xf32>
    tpu.vector_store %arg14[%c24_364, %c0_365], %375 {strides = array<i32>} : memref<36x1152xf32, #tpu.memory_space<vmem>>, vector<4x1152xf32>,
    %c0_366 = arith.constant 0 : index
    %c73_367 = arith.constant 73 : index
    %377 = vector.load %arg13[%c0_366, %c73_367] : memref<4x1280xf32, #tpu.memory_space<vmem>>, vector<4x1152xf32>
    %c28_368 = arith.constant 28 : index
    %c0_369 = arith.constant 0 : index
    %378 = vector.load %arg14[%c28_368, %c0_369] : memref<36x1152xf32, #tpu.memory_space<vmem>>, vector<4x1152xf32>
    tpu.vector_store %arg14[%c28_368, %c0_369], %377 {strides = array<i32>} : memref<36x1152xf32, #tpu.memory_space<vmem>>, vector<4x1152xf32>,
    %c0_370 = arith.constant 0 : index
    %c74 = arith.constant 74 : index
    %379 = vector.load %arg13[%c0_370, %c74] : memref<4x1280xf32, #tpu.memory_space<vmem>>, vector<4x1152xf32>
    %c32_371 = arith.constant 32 : index
    %c0_372 = arith.constant 0 : index
    %380 = vector.load %arg14[%c32_371, %c0_372] : memref<36x1152xf32, #tpu.memory_space<vmem>>, vector<4x1152xf32>
    tpu.vector_store %arg14[%c32_371, %c0_372], %379 {strides = array<i32>} : memref<36x1152xf32, #tpu.memory_space<vmem>>, vector<4x1152xf32>,
    %c0_373 = arith.constant 0 : index
    %c0_374 = arith.constant 0 : index
    %381 = vector.load %arg5[%c0_373, %c0_374] : memref<8x36xf32, #tpu.memory_space<vmem>>, vector<8x36xf32>
    %c0_375 = arith.constant 0 : index
    %c0_376 = arith.constant 0 : index
    %382 = vector.load %arg14[%c0_375, %c0_376] : memref<36x1152xf32, #tpu.memory_space<vmem>>, vector<36x1152xf32>
    %cst_377 = arith.constant dense<0.000000e+00> : vector<8x1152xf32>
    %383 = tpu.matmul %381, %382, %cst_377 {dimension_numbers = #tpu.dot_dimension_numbers<[1], [0], [0], [1], [0, 0, 1, 1], [], []>} : vector<8x36xf32>, vector<36x1152xf32>, vector<8x1152xf32> -> vector<8x1152xf32>
    %c0_378 = arith.constant 0 : index
    %c0_379 = arith.constant 0 : index
    %384 = vector.load %arg6[%c0_378, %c0_379] : memref<8x1xf32, #tpu.memory_space<vmem>>, vector<8x1xf32>
    %385 = vector.broadcast %384 : vector<8x1xf32> to vector<8x1152xf32>
    %386 = arith.addf %383, %385 : vector<8x1152xf32>
    %cst_380 = arith.constant 5.000000e-01 : f32
    %387 = vector.broadcast %cst_380 : f32 to vector<8x1152xf32>
    %388 = arith.mulf %387, %386 : vector<8x1152xf32>
    %cst_381 = arith.constant 0.707106769 : f32
    %389 = vector.broadcast %cst_381 : f32 to vector<8x1152xf32>
    %390 = arith.mulf %386, %389 : vector<8x1152xf32>
    %391 = math.erf %390 : vector<8x1152xf32>
    %cst_382 = arith.constant 1.000000e+00 : f32
    %392 = vector.broadcast %cst_382 : f32 to vector<8x1152xf32>
    %393 = arith.addf %392, %391 : vector<8x1152xf32>
    %394 = arith.mulf %388, %393 : vector<8x1152xf32>
    %395 = vector.shape_cast %394 : vector<8x1152xf32> to vector<1x8x1152xf32>
    %c0_383 = arith.constant 0 : index
    %c0_384 = arith.constant 0 : index
    %c0_385 = arith.constant 0 : index
    %396 = vector.load %arg7[%c0_383, %c0_384, %c0_385] : memref<1x8x1152xf32, #tpu.memory_space<vmem>>, vector<1x8x1152xf32>
    tpu.vector_store %arg7[%c0_383, %c0_384, %c0_385], %395 {strides = array<i32>} : memref<1x8x1152xf32, #tpu.memory_space<vmem>>, vector<1x8x1152xf32>,
    return
  }
  func.func @transform_0(%arg0: i32) -> (i32, i32, i32) {
    %c0_i32 = arith.constant 0 : i32
    %c0_i32_0 = arith.constant 0 : i32
    %c0_i32_1 = arith.constant 0 : i32
    return %arg0, %c0_i32, %c0_i32_0 : i32, i32, i32
  }
  func.func @transform_1(%arg0: i32) -> (i32, i32) {
    %c0_i32 = arith.constant 0 : i32
    %c0_i32_0 = arith.constant 0 : i32
    %c0_i32_1 = arith.constant 0 : i32
    return %c0_i32, %c0_i32_0 : i32, i32
  }
  func.func @transform_2(%arg0: i32) -> (i32, i32) {
    %c0_i32 = arith.constant 0 : i32
    %c0_i32_0 = arith.constant 0 : i32
    %c0_i32_1 = arith.constant 0 : i32
    return %c0_i32, %c0_i32_0 : i32, i32
  }
  func.func @transform_3(%arg0: i32) -> (i32, i32) {
    %c0_i32 = arith.constant 0 : i32
    %c0_i32_0 = arith.constant 0 : i32
    %c0_i32_1 = arith.constant 0 : i32
    return %c0_i32, %c0_i32_0 : i32, i32
  }
  func.func @transform_4(%arg0: i32) -> (i32, i32) {
    %c0_i32 = arith.constant 0 : i32
    %c0_i32_0 = arith.constant 0 : i32
    %c0_i32_1 = arith.constant 0 : i32
    return %c0_i32, %c0_i32_0 : i32, i32
  }
  func.func @transform_5(%arg0: i32) -> (i32, i32) {
    %c0_i32 = arith.constant 0 : i32
    %c0_i32_0 = arith.constant 0 : i32
    %c0_i32_1 = arith.constant 0 : i32
    return %c0_i32, %c0_i32_0 : i32, i32
  }
  func.func @transform_6(%arg0: i32) -> (i32, i32, i32) {
    %c0_i32 = arith.constant 0 : i32
    %c0_i32_0 = arith.constant 0 : i32
    %c0_i32_1 = arith.constant 0 : i32
    return %arg0, %c0_i32, %c0_i32_0 : i32, i32, i32
  }
}

</mosaic_0001>

<llo_original>
// kernel: up_forward.1
$region0: #{up_forward.1}
  #allocation0 [shape = 'u32[]', space=smem, size = 0x4, offset = 0x4, fixed_abs, tag = 'smem constant byte address 0x4 - core index']
  #allocation1 [shape = 'u32[144,128]{1,0:T(1,128)}', space=vmem, size = 0x12000, scoped, tag = 'internal scratch']
  #allocation2 [shape = 'f32[4,512]{1,0:T(4,128)}', space=vmem, size = 0x2000, scoped, tag = 'scratch operand']
  #allocation3 [shape = 'f32[36,384]{1,0:T(8,128)}', space=vmem, size = 0xf000, scoped, tag = 'scratch operand']
  #allocation4 [shape = 'f32[4,384]{1,0:T(4,128)}', space=vmem, size = 0x1800, scoped, tag = 'scratch operand']
  #allocation5 [shape = 'f32[64,16]{1,0:T(8,128)}', space=vmem, size = 0x8000, scoped, tag = 'scratch operand']
  #allocation6 [shape = 'f32[64,32]{1,0:T(8,128)}', space=vmem, size = 0x8000, scoped, tag = 'scratch operand']
  #allocation7 [shape = 'f32[4,1280]{1,0:T(4,128)}', space=vmem, size = 0x5000, scoped, tag = 'scratch operand']
  #allocation8 [shape = 'f32[36,1152]{1,0:T(8,128)}', space=vmem, size = 0x2d000, scoped, tag = 'scratch operand']
  %s0 = inlined_call_operand.vmem [shape: f32[2,4,256], index: 0, kind: input, shape index: {}]
  %s1 = inlined_call_operand.vmem [shape: f32[4,36], index: 1, kind: input, shape index: {}]
  %s2 = inlined_call_operand.vmem [shape: f32[4,1], index: 2, kind: input, shape index: {}]
  %s3 = inlined_call_operand.vmem [shape: f32[16,32], index: 3, kind: input, shape index: {}]
  %s4 = inlined_call_operand.vmem [shape: f32[8,36], index: 4, kind: input, shape index: {}]
  %s5 = inlined_call_operand.vmem [shape: f32[8,1], index: 5, kind: input, shape index: {}]
  %s6 = inlined_call_operand.vmem [shape: f32[2,8,1152], index: 6, kind: output, shape index: {}]
  %s7 = sld [smem:[#allocation0]]
  $region57: #{up_forward.1} parent=0
    _
  %s9 = ssub.s32 1, %s7
  %s10 = scalar_select 0, %s9, %s7
  loop: start=0, step=1, limit=4
  $region2: #{up_forward.1} parent=0 // loop_pre_header
    _
  $region3: #{up_forward.1} parent=0 // loop_header
    %s12 = sphi 0, %s16
    %p13 = scmp.ge.s32.totalorder %s12, 4
    %s22 = sphi 0, %s24
    %s25 = sphi 0, %s22
    %s26 = sphi 0, %s25
    %s42 = sphi 0, %s26
    %s46 = sphi 0, %s46
    %s48 = sphi 0, %s46
    %s49 = sphi 0, %s48
    %s63 = sphi 0, %s49
    %s67 = sphi 0, %s67
    %s69 = sphi 0, %s67
    %s70 = sphi 0, %s69
    %s84 = sphi 0, %s70
    %s88 = sphi 0, %s88
    %s90 = sphi 0, %s88
    %s91 = sphi 0, %s90
    %s105 = sphi 0, %s91
    %s109 = sphi 0, %s109
    %s111 = sphi 0, %s109
    %s112 = sphi 0, %s111
    %s126 = sphi 0, %s112
    %s130 = sphi 0, %s130
    %s132 = sphi 0, %s130
    %s133 = sphi 0, %s132
    %s147 = sphi 0, %s133
    %s153 = sphi 0, %s155
    %s156 = sphi 0, %s153
    %s157 = sphi 0, %s156
    %s173 = sphi 0, %s157
  $region4: #{up_forward.1} parent=0 // loop_header_branch
    %15 = sbr.rel (%p13) target = $region8
  $region5: #{up_forward.1} parent=0 // loop_body
    %s17 = ssub.s32 %s12, 1
    %s18 = ssub.s32 %s12, 2
    %s19 = sadd.s32 %s12, 1
    %s20 = ssub.s32 %s12, %s19
    %p21 = scmp.eq.s32.totalorder %s20, 0
    %s23 = sadd.s32 %s22, 1
    %s24 = scalar_select %p21, %s22, %s23
    %p27 = pneg %p21
    %p28 = scmp.eq.s32.totalorder %s12, 1
    %p29 = por %p27, %p28
    %p30 = scmp.ne.s32.totalorder %s22, %s25
    %p31 = scmp.eq.s32.totalorder %s12, 0
    %p32 = por %p30, %p31
    %p33 = scmp.ne.s32.totalorder %s22, %s25
    %p34 = scmp.eq.s32.totalorder %s17, 1
    %p35 = por %p33, %p34
    %p36 = scmp.ne.s32.totalorder %s25, %s26
    %p37 = scmp.eq.s32.totalorder %s17, 0
    %p38 = por %p36, %p37
    %p39 = scmp.ne.s32.totalorder %s25, %s26
    %p40 = scmp.eq.s32.totalorder %s18, 1
    %p41 = por %p39, %p40
    %p43 = scmp.ne.s32.totalorder %s26, %s42
    %p44 = scmp.eq.s32.totalorder %s18, 0
    %p45 = por %p43, %p44
    %s47 = sadd.s32 %s46, 1
    %p50 = scmp.eq.s32.totalorder %s12, 1
    %p51 = scmp.ne.s32.totalorder %s46, %s48
    %p52 = scmp.eq.s32.totalorder %s12, 0
    %p53 = por %p51, %p52
    %p54 = scmp.ne.s32.totalorder %s46, %s48
    %p55 = scmp.eq.s32.totalorder %s17, 1
    %p56 = por %p54, %p55
    %p57 = scmp.ne.s32.totalorder %s48, %s49
    %p58 = scmp.eq.s32.totalorder %s17, 0
    %p59 = por %p57, %p58
    %p60 = scmp.ne.s32.totalorder %s48, %s49
    %p61 = scmp.eq.s32.totalorder %s18, 1
    %p62 = por %p60, %p61
    %p64 = scmp.ne.s32.totalorder %s49, %s63
    %p65 = scmp.eq.s32.totalorder %s18, 0
    %p66 = por %p64, %p65
    %s68 = sadd.s32 %s67, 1
    %p71 = scmp.eq.s32.totalorder %s12, 1
    %p72 = scmp.ne.s32.totalorder %s67, %s69
    %p73 = scmp.eq.s32.totalorder %s12, 0
    %p74 = por %p72, %p73
    %p75 = scmp.ne.s32.totalorder %s67, %s69
    %p76 = scmp.eq.s32.totalorder %s17, 1
    %p77 = por %p75, %p76
    %p78 = scmp.ne.s32.totalorder %s69, %s70
    %p79 = scmp.eq.s32.totalorder %s17, 0
    %p80 = por %p78, %p79
    %p81 = scmp.ne.s32.totalorder %s69, %s70
    %p82 = scmp.eq.s32.totalorder %s18, 1
    %p83 = por %p81, %p82
    %p85 = scmp.ne.s32.totalorder %s70, %s84
    %p86 = scmp.eq.s32.totalorder %s18, 0
    %p87 = por %p85, %p86
    %s89 = sadd.s32 %s88, 1
    %p92 = scmp.eq.s32.totalorder %s12, 1
    %p93 = scmp.ne.s32.totalorder %s88, %s90
    %p94 = scmp.eq.s32.totalorder %s12, 0
    %p95 = por %p93, %p94
    %p96 = scmp.ne.s32.totalorder %s88, %s90
    %p97 = scmp.eq.s32.totalorder %s17, 1
    %p98 = por %p96, %p97
    %p99 = scmp.ne.s32.totalorder %s90, %s91
    %p100 = scmp.eq.s32.totalorder %s17, 0
    %p101 = por %p99, %p100
    %p102 = scmp.ne.s32.totalorder %s90, %s91
    %p103 = scmp.eq.s32.totalorder %s18, 1
    %p104 = por %p102, %p103
    %p106 = scmp.ne.s32.totalorder %s91, %s105
    %p107 = scmp.eq.s32.totalorder %s18, 0
    %p108 = por %p106, %p107
    %s110 = sadd.s32 %s109, 1
    %p113 = scmp.eq.s32.totalorder %s12, 1
    %p114 = scmp.ne.s32.totalorder %s109, %s111
    %p115 = scmp.eq.s32.totalorder %s12, 0
    %p116 = por %p114, %p115
    %p117 = scmp.ne.s32.totalorder %s109, %s111
    %p118 = scmp.eq.s32.totalorder %s17, 1
    %p119 = por %p117, %p118
    %p120 = scmp.ne.s32.totalorder %s111, %s112
    %p121 = scmp.eq.s32.totalorder %s17, 0
    %p122 = por %p120, %p121
    %p123 = scmp.ne.s32.totalorder %s111, %s112
    %p124 = scmp.eq.s32.totalorder %s18, 1
    %p125 = por %p123, %p124
    %p127 = scmp.ne.s32.totalorder %s112, %s126
    %p128 = scmp.eq.s32.totalorder %s18, 0
    %p129 = por %p127, %p128
    %s131 = sadd.s32 %s130, 1
    %p134 = scmp.eq.s32.totalorder %s12, 1
    %p135 = scmp.ne.s32.totalorder %s130, %s132
    %p136 = scmp.eq.s32.totalorder %s12, 0
    %p137 = por %p135, %p136
    %p138 = scmp.ne.s32.totalorder %s130, %s132
    %p139 = scmp.eq.s32.totalorder %s17, 1
    %p140 = por %p138, %p139
    %p141 = scmp.ne.s32.totalorder %s132, %s133
    %p142 = scmp.eq.s32.totalorder %s17, 0
    %p143 = por %p141, %p142
    %p144 = scmp.ne.s32.totalorder %s132, %s133
    %p145 = scmp.eq.s32.totalorder %s18, 1
    %p146 = por %p144, %p145
    %p148 = scmp.ne.s32.totalorder %s133, %s147
    %p149 = scmp.eq.s32.totalorder %s18, 0
    %p150 = por %p148, %p149
    %s151 = ssub.s32 %s12, %s19
    %p152 = scmp.eq.s32.totalorder %s151, 0
    %s154 = sadd.s32 %s153, 1
    %s155 = scalar_select %p152, %s153, %s154
    %p158 = pneg %p152
    %p159 = scmp.eq.s32.totalorder %s12, 1
    %p160 = por %p158, %p159
    %p161 = scmp.ne.s32.totalorder %s153, %s156
    %p162 = scmp.eq.s32.totalorder %s12, 0
    %p163 = por %p161, %p162
    %p164 = scmp.ne.s32.totalorder %s153, %s156
    %p165 = scmp.eq.s32.totalorder %s17, 1
    %p166 = por %p164, %p165
    %p167 = scmp.ne.s32.totalorder %s156, %s157
    %p168 = scmp.eq.s32.totalorder %s17, 0
    %p169 = por %p167, %p168
    %p170 = scmp.ne.s32.totalorder %s156, %s157
    %p171 = scmp.eq.s32.totalorder %s18, 1
    %p172 = por %p170, %p171
    %p174 = scmp.ne.s32.totalorder %s157, %s173
    %p175 = scmp.eq.s32.totalorder %s18, 0
    %p176 = por %p174, %p175
    %p177 = scmp.le.s32.totalorder 1, %s12
    %p178 = scmp.lt.s32.totalorder %s12, 3
    %p179 = pnand %p177, %p178
    %p180 = pneg %p179
    // Predicated region
    $region9: #{up_forward.1} parent=5 // pred_check
      _
    $region10: #{up_forward.1} parent=5 // pred_check_branch
      %182 = sbr.rel (%p179) target = $region12
    $region11: #{up_forward.1} parent=5 // pred_region
      %s183 = ssub.s32 %s12, 1
      // Predicated region
      $region13: #{up_forward.1} parent=11 // pred_check
        %p184 = pneg %p59
      $region14: #{up_forward.1} parent=11 // pred_check_branch
        %186 = sbr.rel (%p184) target = $region16
      $region15: #{up_forward.1} parent=11 // pred_region
        _
      $region16: #{up_forward.1} parent=11 // pred_fallthru
        _
      // Predicated region
      $region17: #{up_forward.1} parent=11 // pred_check
        %p187 = pneg %p80
      $region18: #{up_forward.1} parent=11 // pred_check_branch
        %189 = sbr.rel (%p187) target = $region20
      $region19: #{up_forward.1} parent=11 // pred_region
        _
      $region20: #{up_forward.1} parent=11 // pred_fallthru
        _
      // Predicated region
      $region21: #{up_forward.1} parent=11 // pred_check
        %p190 = pneg %p101
      $region22: #{up_forward.1} parent=11 // pred_check_branch
        %192 = sbr.rel (%p190) target = $region24
      $region23: #{up_forward.1} parent=11 // pred_region
        _
      $region24: #{up_forward.1} parent=11 // pred_fallthru
        _
      // Predicated region
      $region25: #{up_forward.1} parent=11 // pred_check
        %p193 = pneg %p122
      $region26: #{up_forward.1} parent=11 // pred_check_branch
        %195 = sbr.rel (%p193) target = $region28
      $region27: #{up_forward.1} parent=11 // pred_region
        _
      $region28: #{up_forward.1} parent=11 // pred_fallthru
        _
      // Predicated region
      $region29: #{up_forward.1} parent=11 // pred_check
        %p196 = pneg %p143
      $region30: #{up_forward.1} parent=11 // pred_check_branch
        %198 = sbr.rel (%p196) target = $region32
      $region31: #{up_forward.1} parent=11 // pred_region
        _
      $region32: #{up_forward.1} parent=11 // pred_fallthru
        _
    $region12: #{up_forward.1} parent=5 // pred_fallthru
      _
    %p199 = scmp.lt.s32.totalorder %s12, 2
    // Predicated region
    $region33: #{up_forward.1} parent=5 // pred_check
      %p200 = pneg %p199
    $region34: #{up_forward.1} parent=5 // pred_check_branch
      %202 = sbr.rel (%p200) target = $region36
    $region35: #{up_forward.1} parent=5 // pred_region
      // Predicated region
      $region37: #{up_forward.1} parent=35 // pred_check
        %p203 = pneg %p32
      $region38: #{up_forward.1} parent=35 // pred_check_branch
        %205 = sbr.rel (%p203) target = $region40
      $region39: #{up_forward.1} parent=35 // pred_region
        %p206 = scmp.lt.s32.totalorder %s12, 1
        %s207 = scalar_select %p206, %s12, 1
        %s208 = smul.addr %s207, 2
        %s209 = smul.addr %s208, 4
        %s210 = scalar_lea.vmem %s0, %s209
      $region40: #{up_forward.1} parent=35 // pred_fallthru
        _
    $region36: #{up_forward.1} parent=5 // pred_fallthru
      _
    %p211 = scmp.le.s32.totalorder 1, %s12
    %p212 = scmp.lt.s32.totalorder %s12, 3
    %p213 = pnand %p211, %p212
    %p214 = pneg %p213
    // Predicated region
    $region41: #{up_forward.1} parent=5 // pred_check
      _
    $region42: #{up_forward.1} parent=5 // pred_check_branch
      %216 = sbr.rel (%p213) target = $region44
    $region43: #{up_forward.1} parent=5 // pred_region
      %s217 = ssub.s32 %s12, 1
      %p218 = scmp.lt.s32.totalorder %s17, 1
      %s219 = scalar_select %p218, %s17, 1
      %s220 = smul.addr %s219, 2
      %s221 = smul.addr %s220, 4
      %s222 = scalar_lea.vmem %s0, %s221
      %p223 = pneg %p38
      %p224 = pneg %p35
      %p225 = pneg %p59
      %p226 = pneg %p56
      %p227 = pneg %p80
      %p228 = pneg %p77
      %p229 = pneg %p101
      %p230 = pneg %p98
      %p231 = pneg %p122
      %p232 = pneg %p119
      %p233 = pneg %p143
      %p234 = pneg %p140
      %p235 = pneg %p169
      %p236 = pneg %p166
      %p237 = scmp.lt.s32.totalorder %s17, 1
      %s238 = scalar_select %p237, %s17, 1
      %s239 = smul.addr %s238, 9
      %s240 = smul.addr %s239, 8
      %s241 = scalar_lea.vmem %s6, %s240
      %p242 = scmp.lt.s32.totalorder %s17, 1
      %s243 = scalar_select %p242, %s17, 1
      %s244 = smul.addr %s243, 2
      %s245 = smul.addr %s244, 4
      %s246 = scalar_lea.vmem %s0, %s245
      %p247 = scmp.lt.s32.totalorder %s17, 1
      %s248 = scalar_select %p247, %s17, 1
      %s249 = smul.addr %s248, 9
      %s250 = smul.addr %s249, 8
      %s251 = scalar_lea.vmem %s6, %s250
      %v252 = vld [vmem:[%s246] sm:$0xff]
      %253 = vst [vmem:[#allocation2] sm:$0xff] 0.0
      %254 = vst [vmem:[#allocation2 + $0x8] sm:$0xff] 0.0
      %256 = vrot.lane.b32.xlu0 %v252, 25
      %v257 = vpop.permute.xlu0 %256
      %vm259 = vcmask 330952
      %260 = vst.msk [vmem:[#allocation2] sm:$0xf] %vm259, %v257
      %261 = vrot.lane.b32.xlu0 %v252, 33
      %v262 = vpop.permute.xlu0 %261
      %vm264 = vcmask 527752
      %265 = vst.msk [vmem:[#allocation2] sm:$0xf] %vm264, %v262
      %266 = vrot.lane.b32.xlu0 %v252, 41
      %v267 = vpop.permute.xlu0 %266
      %vm269 = vcmask 724552
      %270 = vst.msk [vmem:[#allocation2] sm:$0xf] %vm269, %v267
      %271 = vrot.lane.b32.xlu0 %v252, 49
      %v272 = vpop.permute.xlu0 %271
      %vm274 = vcmask 921352
      %275 = vst.msk [vmem:[#allocation2] sm:$0xf] %vm274, %v272
      %276 = vrot.lane.b32.xlu0 %v252, 57
      %v277 = vpop.permute.xlu0 %276
      %v278 = vrot.slane %v277, 4
      %vm279 = vcmask 465920
      %v280 = vsel %vm279, %v278, %v277
      %vm282 = vcmask 1044424
      %vm283 = vcmask 72708
      %vm284 = vmor %vm283, %vm282
      %285 = vst.msk [vmem:[#allocation2] sm:$0xff] %vm284, %v280
      %286 = vrot.lane.b32.xlu0 %v252, 65
      %v287 = vpop.permute.xlu0 %286
      %vm289 = vcmask 265352
      %290 = vst.msk [vmem:[#allocation2 + $0x4] sm:$0xf] %vm289, %v287
      %291 = vrot.lane.b32.xlu0 %v252, 73
      %v292 = vpop.permute.xlu0 %291
      %vm294 = vcmask 462152
      %295 = vst.msk [vmem:[#allocation2 + $0x4] sm:$0xf] %vm294, %v292
      %296 = vrot.lane.b32.xlu0 %v252, 81
      %v297 = vpop.permute.xlu0 %296
      %vm299 = vcmask 658952
      %300 = vst.msk [vmem:[#allocation2 + $0x4] sm:$0xf] %vm299, %v297
      %301 = vrot.lane.b32.xlu0 %v252, 89
      %v302 = vpop.permute.xlu0 %301
      %v303 = vrot.slane %v302, 4
      %vm304 = vcmask 728064
      %v305 = vsel %vm304, %v302, %v303
      %vm307 = vcmask 855752
      %308 = vst.msk [vmem:[#allocation2 + $0x4] sm:$0xf] %vm307, %v305
      %309 = vrot.lane.b32.xlu0 %v252, 97
      %v310 = vpop.permute.xlu0 %309
      %v311 = vrot.slane %v310, 4
      %vm312 = vcmask 793600
      %v313 = vsel %vm312, %v310, %v311
      %vm315 = vcmask 1044360
      %vm316 = vcmask 7172
      %vm317 = vmor %vm316, %vm315
      %318 = vst.msk [vmem:[#allocation2 + $0x4] sm:$0xff] %vm317, %v313
      %319 = vrot.lane.b32.xlu0 %v252, 105
      %v320 = vpop.permute.xlu0 %319
      %v321 = vrot.slane %v320, 4
      %vm323 = vcmask 199752
      %324 = vst.msk [vmem:[#allocation2 + $0x8] sm:$0xf] %vm323, %v321
      %325 = vrot.lane.b32.xlu0 %v252, 113
      %v326 = vpop.permute.xlu0 %325
      %v327 = vrot.slane %v326, 4
      %vm329 = vcmask 396552
      %330 = vst.msk [vmem:[#allocation2 + $0x8] sm:$0xf] %vm329, %v327
      %331 = vrot.lane.b32.xlu0 %v252, 121
      %v332 = vpop.permute.xlu0 %331
      %v333 = vrot.slane %v332, 4
      %vm335 = vcmask 593352
      %336 = vst.msk [vmem:[#allocation2 + $0x8] sm:$0xf] %vm335, %v333
      %337 = vrot.lane.b32.xlu0 %v252, 1
      %v338 = vpop.permute.xlu0 %337
      %v339 = vrot.slane %v338, 4
      %vm340 = vcmask 7168
      %v341 = vsel %vm340, %v338, %v339
      %vm343 = vcmask 790152
      %344 = vst.msk [vmem:[#allocation2 + $0x8] sm:$0xf] %vm343, %v341
      %345 = vrot.lane.b32.xlu0 %v252, 9
      %v346 = vpop.permute.xlu0 %345
      %v347 = vrot.slane %v346, 4
      %vm348 = vcmask 72704
      %v349 = vsel %vm348, %v346, %v347
      %vm351 = vcmask 986952
      %352 = vst.msk [vmem:[#allocation2 + $0x8] sm:$0xf] %vm351, %v349
      %353 = vrot.lane.b32.xlu0 %v252, 17
      %v354 = vpop.permute.xlu0 %353
      %v355 = vrot.slane %v354, 4
      %vm357 = vcmask 134152
      %358 = vst.msk [vmem:[#allocation2 + $0xc] sm:$0xf] %vm357, %v355
      %v359 = vld [vmem:[#allocation2] sm:$0xff]
      %v360 = vld [vmem:[#allocation2 + $0x8] sm:$0xf]
      %v362 = vcombine.high %v359, %v359
      %364 = vst [vmem:[#allocation3] sm:$0xf] %v359
      %365 = vst [vmem:[#allocation3 + $0x8] sm:$0xf] %v362
      %366 = vst [vmem:[#allocation3 + $0x10] sm:$0xf] %v360
      %v367 = vld [vmem:[#allocation2] sm:$0xff]
      %v368 = vld [vmem:[#allocation2 + $0x8] sm:$0xff]
      %v371 = vcombine.low %v367, %v367
      %v372 = vcombine.low %v368, %v368
      %373 = vrot.lane.b32.xlu0 %v371, 127
      %v374 = vpop.permute.xlu0 %373
      %375 = vrot.lane.b32.xlu0 %v367, 127
      %v376 = vpop.permute.xlu0 %375
      %377 = vrot.lane.b32.xlu0 %v372, 127
      %v378 = vpop.permute.xlu0 %377
      %379 = vrot.lane.b32.xlu0 %v368, 127
      %v380 = vpop.permute.xlu0 %379
      %vm381 = vcmask 1039360
      %v382 = vsel %vm381, %v374, %v376
      %v383 = vsel %vm381, %v376, %v378
      %v384 = vsel %vm381, %v378, %v380
      %388 = vst [vmem:[#allocation3] sm:$0xf0] %v382
      %389 = vst [vmem:[#allocation3 + $0x8] sm:$0xf0] %v383
      %390 = vst [vmem:[#allocation3 + $0x10] sm:$0xf0] %v384
      %v391 = vld [vmem:[#allocation2] sm:$0xff]
      %v392 = vld [vmem:[#allocation2 + $0x8] sm:$0xff]
      %v395 = vcombine.high %v391, %v391
      %v396 = vcombine.high %v392, %v392
      %397 = vrot.lane.b32.xlu0 %v391, 126
      %v398 = vpop.permute.xlu0 %397
      %399 = vrot.lane.b32.xlu0 %v395, 126
      %v400 = vpop.permute.xlu0 %399
      %401 = vrot.lane.b32.xlu0 %v392, 126
      %v402 = vpop.permute.xlu0 %401
      %403 = vrot.lane.b32.xlu0 %v396, 126
      %v404 = vpop.permute.xlu0 %403
      %vm405 = vcmask 1031168
      %v406 = vsel %vm405, %v398, %v400
      %v407 = vsel %vm405, %v400, %v402
      %v408 = vsel %vm405, %v402, %v404
      %412 = vst [vmem:[#allocation3 + $0x18] sm:$0xf] %v406
      %413 = vst [vmem:[#allocation3 + $0x20] sm:$0xf] %v407
      %414 = vst [vmem:[#allocation3 + $0x28] sm:$0xf] %v408
      %v415 = vld [vmem:[#allocation2] sm:$0xff]
      %v416 = vld [vmem:[#allocation2 + $0x8] sm:$0xff]
      %v419 = vcombine.low %v415, %v415
      %v420 = vcombine.low %v416, %v416
      %421 = vrot.lane.b32.xlu0 %v419, 104
      %v422 = vpop.permute.xlu0 %421
      %423 = vrot.lane.b32.xlu0 %v415, 104
      %v424 = vpop.permute.xlu0 %423
      %425 = vrot.lane.b32.xlu0 %v420, 104
      %v426 = vpop.permute.xlu0 %425
      %427 = vrot.lane.b32.xlu0 %v416, 104
      %v428 = vpop.permute.xlu0 %427
      %vm429 = vcmask 850944
      %v430 = vsel %vm429, %v422, %v424
      %v431 = vsel %vm429, %v424, %v426
      %v432 = vsel %vm429, %v426, %v428
      %436 = vst [vmem:[#allocation3 + $0x18] sm:$0xf0] %v430
      %437 = vst [vmem:[#allocation3 + $0x20] sm:$0xf0] %v431
      %438 = vst [vmem:[#allocation3 + $0x28] sm:$0xf0] %v432
      %v439 = vld [vmem:[#allocation2] sm:$0xff]
      %v440 = vld [vmem:[#allocation2 + $0x8] sm:$0xff]
      %v443 = vcombine.high %v439, %v439
      %v444 = vcombine.high %v440, %v440
      %445 = vrot.lane.b32.xlu0 %v439, 103
      %v446 = vpop.permute.xlu0 %445
      %447 = vrot.lane.b32.xlu0 %v443, 103
      %v448 = vpop.permute.xlu0 %447
      %449 = vrot.lane.b32.xlu0 %v440, 103
      %v450 = vpop.permute.xlu0 %449
      %451 = vrot.lane.b32.xlu0 %v444, 103
      %v452 = vpop.permute.xlu0 %451
      %vm453 = vcmask 842752
      %v454 = vsel %vm453, %v446, %v448
      %v455 = vsel %vm453, %v448, %v450
      %v456 = vsel %vm453, %v450, %v452
      %460 = vst [vmem:[#allocation3 + $0x30] sm:$0xf] %v454
      %461 = vst [vmem:[#allocation3 + $0x38] sm:$0xf] %v455
      %462 = vst [vmem:[#allocation3 + $0x40] sm:$0xf] %v456
      %v463 = vld [vmem:[#allocation2] sm:$0xff]
      %v464 = vld [vmem:[#allocation2 + $0x8] sm:$0xff]
      %v467 = vcombine.low %v463, %v463
      %v468 = vcombine.low %v464, %v464
      %469 = vrot.lane.b32.xlu0 %v467, 102
      %v470 = vpop.permute.xlu0 %469
      %471 = vrot.lane.b32.xlu0 %v463, 102
      %v472 = vpop.permute.xlu0 %471
      %473 = vrot.lane.b32.xlu0 %v468, 102
      %v474 = vpop.permute.xlu0 %473
      %475 = vrot.lane.b32.xlu0 %v464, 102
      %v476 = vpop.permute.xlu0 %475
      %vm477 = vcmask 834560
      %v478 = vsel %vm477, %v470, %v472
      %v479 = vsel %vm477, %v472, %v474
      %v480 = vsel %vm477, %v474, %v476
      %484 = vst [vmem:[#allocation3 + $0x30] sm:$0xf0] %v478
      %485 = vst [vmem:[#allocation3 + $0x38] sm:$0xf0] %v479
      %486 = vst [vmem:[#allocation3 + $0x40] sm:$0xf0] %v480
      %v487 = vld [vmem:[#allocation2] sm:$0xff]
      %v488 = vld [vmem:[#allocation2 + $0x8] sm:$0xff]
      %v491 = vcombine.high %v487, %v487
      %v492 = vcombine.high %v488, %v488
      %493 = vrot.lane.b32.xlu0 %v487, 80
      %v494 = vpop.permute.xlu0 %493
      %495 = vrot.lane.b32.xlu0 %v491, 80
      %v496 = vpop.permute.xlu0 %495
      %497 = vrot.lane.b32.xlu0 %v488, 80
      %v498 = vpop.permute.xlu0 %497
      %499 = vrot.lane.b32.xlu0 %v492, 80
      %v500 = vpop.permute.xlu0 %499
      %vm501 = vcmask 654336
      %v502 = vsel %vm501, %v494, %v496
      %v503 = vsel %vm501, %v496, %v498
      %v504 = vsel %vm501, %v498, %v500
      %508 = vst [vmem:[#allocation3 + $0x48] sm:$0xf] %v502
      %509 = vst [vmem:[#allocation3 + $0x50] sm:$0xf] %v503
      %510 = vst [vmem:[#allocation3 + $0x58] sm:$0xf] %v504
      %v511 = vld [vmem:[#allocation2] sm:$0xff]
      %v512 = vld [vmem:[#allocation2 + $0x8] sm:$0xff]
      %v515 = vcombine.low %v511, %v511
      %v516 = vcombine.low %v512, %v512
      %517 = vrot.lane.b32.xlu0 %v515, 79
      %v518 = vpop.permute.xlu0 %517
      %519 = vrot.lane.b32.xlu0 %v511, 79
      %v520 = vpop.permute.xlu0 %519
      %521 = vrot.lane.b32.xlu0 %v516, 79
      %v522 = vpop.permute.xlu0 %521
      %523 = vrot.lane.b32.xlu0 %v512, 79
      %v524 = vpop.permute.xlu0 %523
      %vm525 = vcmask 646144
      %v526 = vsel %vm525, %v518, %v520
      %v527 = vsel %vm525, %v520, %v522
      %v528 = vsel %vm525, %v522, %v524
      %532 = vst [vmem:[#allocation3 + $0x48] sm:$0xf0] %v526
      %533 = vst [vmem:[#allocation3 + $0x50] sm:$0xf0] %v527
      %534 = vst [vmem:[#allocation3 + $0x58] sm:$0xf0] %v528
      %v535 = vld [vmem:[#allocation2] sm:$0xff]
      %v536 = vld [vmem:[#allocation2 + $0x8] sm:$0xff]
      %v539 = vcombine.high %v535, %v535
      %v540 = vcombine.high %v536, %v536
      %541 = vrot.lane.b32.xlu0 %v535, 78
      %v542 = vpop.permute.xlu0 %541
      %543 = vrot.lane.b32.xlu0 %v539, 78
      %v544 = vpop.permute.xlu0 %543
      %545 = vrot.lane.b32.xlu0 %v536, 78
      %v546 = vpop.permute.xlu0 %545
      %547 = vrot.lane.b32.xlu0 %v540, 78
      %v548 = vpop.permute.xlu0 %547
      %vm549 = vcmask 637952
      %v550 = vsel %vm549, %v542, %v544
      %v551 = vsel %vm549, %v544, %v546
      %v552 = vsel %vm549, %v546, %v548
      %556 = vst [vmem:[#allocation3 + $0x60] sm:$0xf] %v550
      %557 = vst [vmem:[#allocation3 + $0x68] sm:$0xf] %v551
      %558 = vst [vmem:[#allocation3 + $0x70] sm:$0xf] %v552
      %v559 = vld [vmem:[%s1] sm:$0xf]
      %v560 = vld [vmem:[#allocation3] sm:$0xff]
      %v561 = vld [vmem:[#allocation3 + $0x8] sm:$0xff]
      %v562 = vld [vmem:[#allocation3 + $0x10] sm:$0xff]
      %v563 = vld [vmem:[#allocation3 + $0x18] sm:$0xff]
      %v564 = vld [vmem:[#allocation3 + $0x20] sm:$0xff]
      %v565 = vld [vmem:[#allocation3 + $0x28] sm:$0xff]
      %v566 = vld [vmem:[#allocation3 + $0x30] sm:$0xff]
      %v567 = vld [vmem:[#allocation3 + $0x38] sm:$0xff]
      %v568 = vld [vmem:[#allocation3 + $0x40] sm:$0xff]
      %v569 = vld [vmem:[#allocation3 + $0x48] sm:$0xff]
      %v570 = vld [vmem:[#allocation3 + $0x50] sm:$0xff]
      %v571 = vld [vmem:[#allocation3 + $0x58] sm:$0xff]
      %v572 = vld [vmem:[#allocation3 + $0x60] sm:$0xf]
      %v573 = vld [vmem:[#allocation3 + $0x68] sm:$0xf]
      %v574 = vld [vmem:[#allocation3 + $0x70] sm:$0xf]
      %v575 = vld [vmem:[%s2] sm:$0xf]
      %577 = vset.pattern.permute.xlu0 0
      %578 = vperm.xlu0 %577, %v575
      %v579 = vpop.permute.xlu0 %578
      %vm581 = vcmask 293888
      %v583 = vsel %vm581, %v559, 0
      %vm585 = vcmask 1043456
      %v587 = vsel %vm585, %v572, 0
      %v590 = vsel %vm585, %v573, 0
      %v593 = vsel %vm585, %v574, 0
      %595 = vmatprep.subr.mxu0 0.0
      %596 = vmatpush1.msra.mxu0 0.0
      %597 = vmatprep.subr.mxu0 0.0
      %598 = vmatpush1.msra.mxu0 0.0
      %599 = vmatprep.subr.mxu0 0.0
      %600 = vmatpush1.msra.mxu0 0.0
      %601 = vmatprep.subr.mxu0 0.0
      %602 = vmatpush1.msra.mxu0 0.0
      %603 = vmatprep.subr.mxu0 0.0
      %604 = vmatpush1.msra.mxu0 0.0
      %605 = vmatprep.subr.mxu0 0.0
      %606 = vmatpush1.msra.mxu0 0.0
      %607 = vmatprep.subr.mxu0 0.0
      %608 = vmatpush1.msra.mxu0 0.0
      %609 = vmatprep.subr.mxu0 0.0
      %610 = vmatpush1.msra.mxu0 0.0
      %611 = vmatprep.subr.mxu0 0.0
      %612 = vmatpush1.msra.mxu0 0.0
      %613 = vmatprep.subr.mxu0 0.0
      %614 = vmatpush1.msra.mxu0 0.0
      %615 = vmatprep.subr.mxu0 0.0
      %616 = vmatpush1.msra.mxu0 0.0
      %617 = vmatprep.subr.mxu0 %v590
      %618 = vmatpush1.msra.mxu0 %v587
      %619 = vmatprep.subr.mxu0 %v570
      %620 = vmatpush1.msra.mxu0 %v569
      %621 = vmatprep.subr.mxu0 %v567
      %622 = vmatpush1.msra.mxu0 %v566
      %623 = vmatprep.subr.mxu0 %v564
      %624 = vmatpush1.msra.mxu0 %v563
      %625 = vmatprep.subr.mxu0 %v561
      %626 = vmatpush1.msra.mxu0 %v560
      %627 = vmatprep.subr.mxu0 0.0
      %628 = vmatpush2.msra.mxu0 0.0
      %629 = vmatprep.subr.mxu0 0.0
      %630 = vmatpush2.msra.mxu0 0.0
      %631 = vmatprep.subr.mxu0 0.0
      %632 = vmatpush2.msra.mxu0 0.0
      %633 = vmatprep.subr.mxu0 0.0
      %634 = vmatpush2.msra.mxu0 0.0
      %635 = vmatprep.subr.mxu0 0.0
      %636 = vmatpush2.msra.mxu0 0.0
      %637 = vmatprep.subr.mxu0 0.0
      %638 = vmatpush2.msra.mxu0 0.0
      %639 = vmatprep.subr.mxu0 0.0
      %640 = vmatpush2.msra.mxu0 0.0
      %641 = vmatprep.subr.mxu0 0.0
      %642 = vmatpush2.msra.mxu0 0.0
      %643 = vmatprep.subr.mxu0 0.0
      %644 = vmatpush2.msra.mxu0 0.0
      %645 = vmatprep.subr.mxu0 0.0
      %646 = vmatpush2.msra.mxu0 0.0
      %647 = vmatprep.subr.mxu0 0.0
      %648 = vmatpush2.msra.mxu0 0.0
      %649 = vmatprep.subr.mxu0 0.0
      %650 = vmatpush2.msra.mxu0 0.0
      %651 = vmatprep.subr.mxu0 0.0
      %652 = vmatpush2.msra.mxu0 0.0
      %653 = vmatprep.subr.mxu0 0.0
      %654 = vmatpush2.msra.mxu0 0.0
      %655 = vmatprep.subr.mxu0 0.0
      %656 = vmatpush2.msra.mxu0 0.0
      %657 = vmatprep.subr.mxu0 0.0
      %658 = vmatpush2.msra.mxu0 0.0
      %659 = vmatprep.mubr.f32.mxu0 0.0
      %660 = vmatmul.mubr.f32.gmra.mxu0 %v583
      %v661 = vpop.f32.mrf.mxu0
      %v662 = vadd.f32 %v579, %v661
      %v663 = vpop.f32.mrf.mxu0
      %v664 = vadd.f32 %v579, %v663
      %665 = vdwg.mxu0
      %666 = vmatprep.subr.mxu0 0.0
      %667 = vmatpush1.msra.mxu0 0.0
      %668 = vmatprep.subr.mxu0 0.0
      %669 = vmatpush1.msra.mxu0 0.0
      %670 = vmatprep.subr.mxu0 0.0
      %671 = vmatpush1.msra.mxu0 0.0
      %672 = vmatprep.subr.mxu0 0.0
      %673 = vmatpush1.msra.mxu0 0.0
      %674 = vmatprep.subr.mxu0 0.0
      %675 = vmatpush1.msra.mxu0 0.0
      %676 = vmatprep.subr.mxu0 0.0
      %677 = vmatpush1.msra.mxu0 0.0
      %678 = vmatprep.subr.mxu0 0.0
      %679 = vmatpush1.msra.mxu0 0.0
      %680 = vmatprep.subr.mxu0 0.0
      %681 = vmatpush1.msra.mxu0 0.0
      %682 = vmatprep.subr.mxu0 0.0
      %683 = vmatpush1.msra.mxu0 0.0
      %684 = vmatprep.subr.mxu0 0.0
      %685 = vmatpush1.msra.mxu0 0.0
      %686 = vmatprep.subr.mxu0 0.0
      %687 = vmatpush1.msra.mxu0 0.0
      %688 = vmatprep.subr.mxu0 0.0
      %689 = vmatpush1.msra.mxu0 %v593
      %690 = vmatprep.subr.mxu0 0.0
      %691 = vmatpush1.msra.mxu0 %v571
      %692 = vmatprep.subr.mxu0 0.0
      %693 = vmatpush1.msra.mxu0 %v568
      %694 = vmatprep.subr.mxu0 0.0
      %695 = vmatpush1.msra.mxu0 %v565
      %696 = vmatprep.subr.mxu0 0.0
      %697 = vmatpush1.msra.mxu0 %v562
      %698 = vmatprep.subr.mxu0 0.0
      %699 = vmatpush2.msra.mxu0 0.0
      %700 = vmatprep.subr.mxu0 0.0
      %701 = vmatpush2.msra.mxu0 0.0
      %702 = vmatprep.subr.mxu0 0.0
      %703 = vmatpush2.msra.mxu0 0.0
      %704 = vmatprep.subr.mxu0 0.0
      %705 = vmatpush2.msra.mxu0 0.0
      %706 = vmatprep.subr.mxu0 0.0
      %707 = vmatpush2.msra.mxu0 0.0
      %708 = vmatprep.subr.mxu0 0.0
      %709 = vmatpush2.msra.mxu0 0.0
      %710 = vmatprep.subr.mxu0 0.0
      %711 = vmatpush2.msra.mxu0 0.0
      %712 = vmatprep.subr.mxu0 0.0
      %713 = vmatpush2.msra.mxu0 0.0
      %714 = vmatprep.subr.mxu0 0.0
      %715 = vmatpush2.msra.mxu0 0.0
      %716 = vmatprep.subr.mxu0 0.0
      %717 = vmatpush2.msra.mxu0 0.0
      %718 = vmatprep.subr.mxu0 0.0
      %719 = vmatpush2.msra.mxu0 0.0
      %720 = vmatprep.subr.mxu0 0.0
      %721 = vmatpush2.msra.mxu0 0.0
      %722 = vmatprep.subr.mxu0 0.0
      %723 = vmatpush2.msra.mxu0 0.0
      %724 = vmatprep.subr.mxu0 0.0
      %725 = vmatpush2.msra.mxu0 0.0
      %726 = vmatprep.subr.mxu0 0.0
      %727 = vmatpush2.msra.mxu0 0.0
      %728 = vmatprep.subr.mxu0 0.0
      %729 = vmatpush2.msra.mxu0 0.0
      %730 = vmatprep.mubr.f32.mxu0 0.0
      %731 = vmatmul.mubr.f32.gmra.mxu0 %v583
      %v732 = vpop.f32.mrf.mxu0
      %v733 = vadd.f32 %v579, %v732
      %v734 = vpop.f32.mrf.mxu0
      %735 = vdwg.mxu0
      %v736 = vmul.f32 %v662, 0.5
      %v737 = vmul.f32 %v664, 0.5
      %v738 = vmul.f32 %v733, 0.5
      %v739 = vmul.f32 %v662, 0.70710677
      %v740 = vmul.f32 %v664, 0.70710677
      %v741 = vmul.f32 %v733, 0.70710677
      %v742 = verf.f32.pop %v739
      %v743 = verf.f32.pop %v740
      %v744 = verf.f32.pop %v741
      %v745 = vadd.f32 %v742, 1.0
      %v746 = vadd.f32 %v743, 1.0
      %v747 = vadd.f32 %v744, 1.0
      %v748 = vmul.f32 %v736, %v745
      %v749 = vmul.f32 %v737, %v746
      %v750 = vmul.f32 %v738, %v747
      %v753 = vcombine.low %v748, %v749
      %755 = vst [vmem:[#allocation4] sm:$0xff] %v753
      %756 = vst [vmem:[#allocation4 + $0x8] sm:$0xf] %v750
      %v757 = vld [vmem:[#allocation4] sm:$0xf]
      %vm758 = vcmask 125952
      %759 = vst.msk [vmem:[#allocation5] sm:$0xf] %vm758, %v757
      %v760 = vld [vmem:[#allocation4] sm:$0xf]
      %762 = vrot.lane.b32.xlu0 %v760, 104
      %v763 = vpop.permute.xlu0 %762
      %765 = vst.msk [vmem:[#allocation5 + $0x4] sm:$0xf] %vm758, %v763
      %v766 = vld [vmem:[#allocation4] sm:$0xf]
      %768 = vrot.lane.b32.xlu0 %v766, 80
      %v769 = vpop.permute.xlu0 %768
      %771 = vst.msk [vmem:[#allocation5 + $0x8] sm:$0xf] %vm758, %v769
      %v772 = vld [vmem:[#allocation4] sm:$0xf]
      %774 = vrot.lane.b32.xlu0 %v772, 56
      %v775 = vpop.permute.xlu0 %774
      %777 = vst.msk [vmem:[#allocation5 + $0xc] sm:$0xf] %vm758, %v775
      %v778 = vld [vmem:[#allocation4] sm:$0xf]
      %780 = vrot.lane.b32.xlu0 %v778, 32
      %v781 = vpop.permute.xlu0 %780
      %783 = vst.msk [vmem:[#allocation5 + $0x10] sm:$0xf] %vm758, %v781
      %v784 = vld [vmem:[#allocation4] sm:$0xff]
      %v786 = vcombine.high %v784, %v784
      %787 = vrot.lane.b32.xlu0 %v784, 8
      %v788 = vpop.permute.xlu0 %787
      %789 = vrot.lane.b32.xlu0 %v786, 8
      %v790 = vpop.permute.xlu0 %789
      %vm791 = vcmask 64512
      %v792 = vsel %vm791, %v788, %v790
      %794 = vst.msk [vmem:[#allocation5 + $0x14] sm:$0xf] %vm758, %v792
      %v795 = vld [vmem:[#allocation4 + $0x4] sm:$0xf]
      %797 = vrot.lane.b32.xlu0 %v795, 112
      %v798 = vpop.permute.xlu0 %797
      %800 = vst.msk [vmem:[#allocation5 + $0x18] sm:$0xf] %vm758, %v798
      %v801 = vld [vmem:[#allocation4 + $0x4] sm:$0xf]
      %803 = vrot.lane.b32.xlu0 %v801, 88
      %v804 = vpop.permute.xlu0 %803
      %806 = vst.msk [vmem:[#allocation5 + $0x1c] sm:$0xf] %vm758, %v804
      %v807 = vld [vmem:[#allocation4 + $0x4] sm:$0xf]
      %809 = vrot.lane.b32.xlu0 %v807, 64
      %v810 = vpop.permute.xlu0 %809
      %812 = vst.msk [vmem:[#allocation5 + $0x20] sm:$0xf] %vm758, %v810
      %v813 = vld [vmem:[#allocation4 + $0x4] sm:$0xf]
      %815 = vrot.lane.b32.xlu0 %v813, 40
      %v816 = vpop.permute.xlu0 %815
      %818 = vst.msk [vmem:[#allocation5 + $0x24] sm:$0xf] %vm758, %v816
      %v819 = vld [vmem:[#allocation4 + $0x4] sm:$0xf]
      %821 = vrot.lane.b32.xlu0 %v819, 16
      %v822 = vpop.permute.xlu0 %821
      %824 = vst.msk [vmem:[#allocation5 + $0x28] sm:$0xf] %vm758, %v822
      %v825 = vld [vmem:[#allocation4 + $0x8] sm:$0xf]
      %827 = vrot.lane.b32.xlu0 %v825, 120
      %v828 = vpop.permute.xlu0 %827
      %830 = vst.msk [vmem:[#allocation5 + $0x2c] sm:$0xf] %vm758, %v828
      %v831 = vld [vmem:[#allocation4 + $0x8] sm:$0xf]
      %833 = vrot.lane.b32.xlu0 %v831, 96
      %v834 = vpop.permute.xlu0 %833
      %836 = vst.msk [vmem:[#allocation5 + $0x30] sm:$0xf] %vm758, %v834
      %v837 = vld [vmem:[#allocation4 + $0x8] sm:$0xf]
      %839 = vrot.lane.b32.xlu0 %v837, 72
      %v840 = vpop.permute.xlu0 %839
      %842 = vst.msk [vmem:[#allocation5 + $0x34] sm:$0xf] %vm758, %v840
      %v843 = vld [vmem:[#allocation4 + $0x8] sm:$0xf]
      %845 = vrot.lane.b32.xlu0 %v843, 48
      %v846 = vpop.permute.xlu0 %845
      %848 = vst.msk [vmem:[#allocation5 + $0x38] sm:$0xf] %vm758, %v846
      %v849 = vld [vmem:[#allocation4 + $0x8] sm:$0xf]
      %851 = vrot.lane.b32.xlu0 %v849, 24
      %v852 = vpop.permute.xlu0 %851
      %854 = vst.msk [vmem:[#allocation5 + $0x3c] sm:$0xf] %vm758, %v852
      %v855 = vld [vmem:[#allocation5] sm:$0xff]
      %v856 = vld [vmem:[#allocation5 + $0x8] sm:$0xff]
      %v857 = vld [vmem:[#allocation5 + $0x10] sm:$0xff]
      %v858 = vld [vmem:[#allocation5 + $0x18] sm:$0xff]
      %v859 = vld [vmem:[#allocation5 + $0x20] sm:$0xff]
      %v860 = vld [vmem:[#allocation5 + $0x28] sm:$0xff]
      %v861 = vld [vmem:[#allocation5 + $0x30] sm:$0xff]
      %v862 = vld [vmem:[#allocation5 + $0x38] sm:$0xff]
      %v863 = vld [vmem:[%s3] sm:$0xff]
      %v864 = vld [vmem:[%s3 + $0x8] sm:$0xff]
      %vm865 = vcmask 130048
      %v867 = vsel %vm865, %v855, 0
      %v870 = vsel %vm865, %v856, 0
      %v873 = vsel %vm865, %v857, 0
      %v876 = vsel %vm865, %v858, 0
      %v879 = vsel %vm865, %v859, 0
      %v882 = vsel %vm865, %v860, 0
      %v885 = vsel %vm865, %v861, 0
      %v888 = vsel %vm865, %v862, 0
      %890 = vmatprep.subr.mxu0 0.0
      %891 = vmatpush1.msra.mxu0 0.0
      %892 = vmatprep.subr.mxu0 0.0
      %893 = vmatpush1.msra.mxu0 0.0
      %894 = vmatprep.subr.mxu0 0.0
      %895 = vmatpush1.msra.mxu0 0.0
      %896 = vmatprep.subr.mxu0 0.0
      %897 = vmatpush1.msra.mxu0 0.0
      %898 = vmatprep.subr.mxu0 0.0
      %899 = vmatpush1.msra.mxu0 0.0
      %900 = vmatprep.subr.mxu0 0.0
      %901 = vmatpush1.msra.mxu0 0.0
      %902 = vmatprep.subr.mxu0 0.0
      %903 = vmatpush1.msra.mxu0 0.0
      %904 = vmatprep.subr.mxu0 0.0
      %905 = vmatpush1.msra.mxu0 0.0
      %906 = vmatprep.subr.mxu0 0.0
      %907 = vmatpush1.msra.mxu0 0.0
      %908 = vmatprep.subr.mxu0 0.0
      %909 = vmatpush1.msra.mxu0 0.0
      %910 = vmatprep.subr.mxu0 0.0
      %911 = vmatpush1.msra.mxu0 0.0
      %912 = vmatprep.subr.mxu0 0.0
      %913 = vmatpush1.msra.mxu0 0.0
      %914 = vmatprep.subr.mxu0 0.0
      %915 = vmatpush1.msra.mxu0 0.0
      %916 = vmatprep.subr.mxu0 0.0
      %917 = vmatpush1.msra.mxu0 0.0
      %918 = vmatprep.subr.mxu0 0.0
      %919 = vmatpush1.msra.mxu0 %v864
      %920 = vmatprep.subr.mxu0 0.0
      %921 = vmatpush1.msra.mxu0 %v863
      %922 = vmatprep.subr.mxu0 0.0
      %923 = vmatpush2.msra.mxu0 0.0
      %924 = vmatprep.subr.mxu0 0.0
      %925 = vmatpush2.msra.mxu0 0.0
      %926 = vmatprep.subr.mxu0 0.0
      %927 = vmatpush2.msra.mxu0 0.0
      %928 = vmatprep.subr.mxu0 0.0
      %929 = vmatpush2.msra.mxu0 0.0
      %930 = vmatprep.subr.mxu0 0.0
      %931 = vmatpush2.msra.mxu0 0.0
      %932 = vmatprep.subr.mxu0 0.0
      %933 = vmatpush2.msra.mxu0 0.0
      %934 = vmatprep.subr.mxu0 0.0
      %935 = vmatpush2.msra.mxu0 0.0
      %936 = vmatprep.subr.mxu0 0.0
      %937 = vmatpush2.msra.mxu0 0.0
      %938 = vmatprep.subr.mxu0 0.0
      %939 = vmatpush2.msra.mxu0 0.0
      %940 = vmatprep.subr.mxu0 0.0
      %941 = vmatpush2.msra.mxu0 0.0
      %942 = vmatprep.subr.mxu0 0.0
      %943 = vmatpush2.msra.mxu0 0.0
      %944 = vmatprep.subr.mxu0 0.0
      %945 = vmatpush2.msra.mxu0 0.0
      %946 = vmatprep.subr.mxu0 0.0
      %947 = vmatpush2.msra.mxu0 0.0
      %948 = vmatprep.subr.mxu0 0.0
      %949 = vmatpush2.msra.mxu0 0.0
      %950 = vmatprep.subr.mxu0 0.0
      %951 = vmatpush2.msra.mxu0 0.0
      %952 = vmatprep.subr.mxu0 0.0
      %953 = vmatpush2.msra.mxu0 0.0
      %954 = vmatprep.mubr.f32.mxu0 0.0
      %955 = vmatmul.mubr.f32.gmra.mxu0 %v867
      %v956 = vpop.f32.mrf.mxu0
      %v957 = vadd.f32 0.0, %v956
      %v958 = vpop.f32.mrf.mxu0
      %959 = vmatprep.mubr.f32.mxu0 0.0
      %960 = vmatmul.mubr.f32.gmra.mxu0 %v870
      %v961 = vpop.f32.mrf.mxu0
      %v962 = vadd.f32 0.0, %v961
      %v963 = vpop.f32.mrf.mxu0
      %964 = vmatprep.mubr.f32.mxu0 0.0
      %965 = vmatmul.mubr.f32.gmra.mxu0 %v873
      %v966 = vpop.f32.mrf.mxu0
      %v967 = vadd.f32 0.0, %v966
      %v968 = vpop.f32.mrf.mxu0
      %969 = vmatprep.mubr.f32.mxu0 0.0
      %970 = vmatmul.mubr.f32.gmra.mxu0 %v876
      %v971 = vpop.f32.mrf.mxu0
      %v972 = vadd.f32 0.0, %v971
      %v973 = vpop.f32.mrf.mxu0
      %974 = vmatprep.mubr.f32.mxu0 0.0
      %975 = vmatmul.mubr.f32.gmra.mxu0 %v879
      %v976 = vpop.f32.mrf.mxu0
      %v977 = vadd.f32 0.0, %v976
      %v978 = vpop.f32.mrf.mxu0
      %979 = vmatprep.mubr.f32.mxu0 0.0
      %980 = vmatmul.mubr.f32.gmra.mxu0 %v882
      %v981 = vpop.f32.mrf.mxu0
      %v982 = vadd.f32 0.0, %v981
      %v983 = vpop.f32.mrf.mxu0
      %984 = vmatprep.mubr.f32.mxu0 0.0
      %985 = vmatmul.mubr.f32.gmra.mxu0 %v885
      %v986 = vpop.f32.mrf.mxu0
      %v987 = vadd.f32 0.0, %v986
      %v988 = vpop.f32.mrf.mxu0
      %989 = vmatprep.mubr.f32.mxu0 0.0
      %990 = vmatmul.mubr.f32.gmra.mxu0 %v888
      %v991 = vpop.f32.mrf.mxu0
      %v992 = vadd.f32 0.0, %v991
      %v993 = vpop.f32.mrf.mxu0
      %994 = vdwg.mxu0
      %vm995 = vcmask 261120
      %996 = vst.msk [vmem:[#allocation6] sm:$0xff] %vm995, %v957
      %997 = vst.msk [vmem:[#allocation6 + $0x8] sm:$0xff] %vm995, %v962
      %998 = vst.msk [vmem:[#allocation6 + $0x10] sm:$0xff] %vm995, %v967
      %999 = vst.msk [vmem:[#allocation6 + $0x18] sm:$0xff] %vm995, %v972
      %1000 = vst.msk [vmem:[#allocation6 + $0x20] sm:$0xff] %vm995, %v977
      %1001 = vst.msk [vmem:[#allocation6 + $0x28] sm:$0xff] %vm995, %v982
      %1002 = vst.msk [vmem:[#allocation6 + $0x30] sm:$0xff] %vm995, %v987
      %1003 = vst.msk [vmem:[#allocation6 + $0x38] sm:$0xff] %vm995, %v992
      %1004 = vst [vmem:[#allocation7] sm:$0xff] 0.0
      %1005 = vst [vmem:[#allocation7 + $0x8] sm:$0xff] 0.0
      %1006 = vst [vmem:[#allocation7 + $0x10] sm:$0xff] 0.0
      %1007 = vst [vmem:[#allocation7 + $0x18] sm:$0xff] 0.0
      %1008 = vst [vmem:[#allocation7 + $0x20] sm:$0xff] 0.0
      %v1009 = vld [vmem:[#allocation6] sm:$0xf]
      %v1010 = vld [vmem:[#allocation6 + $0x4] sm:$0xf]
      %v1011 = vmul.f32 %v1010, 0.0
      %v1012 = vadd.f32 %v1009, %v1011
      %1014 = vrot.lane.b32.xlu0 %v1012, 37
      %v1015 = vpop.permute.xlu0 %1014
      %vm1017 = vcmask 560424
      %1018 = vst.msk [vmem:[#allocation7] sm:$0xf] %vm1017, %v1015
      %v1019 = vld [vmem:[#allocation6] sm:$0xf]
      %v1020 = vmul.f32 %v1019, 0.75
      %v1021 = vld [vmem:[#allocation6 + $0x4] sm:$0xf]
      %v1022 = vmul.f32 %v1021, 0.25
      %v1023 = vadd.f32 %v1020, %v1022
      %1025 = vrot.lane.b32.xlu0 %v1023, 73
      %v1026 = vpop.permute.xlu0 %1025
      %vm1028 = vcmask 855624
      %1029 = vst.msk [vmem:[#allocation7] sm:$0xf] %vm1028, %v1026
      %v1030 = vld [vmem:[#allocation6] sm:$0xf]
      %v1031 = vmul.f32 %v1030, 0.25
      %v1032 = vld [vmem:[#allocation6 + $0x4] sm:$0xf]
      %v1033 = vmul.f32 %v1032, 0.75
      %v1034 = vadd.f32 %v1031, %v1033
      %1036 = vrot.lane.b32.xlu0 %v1034, 109
      %v1037 = vpop.permute.xlu0 %1036
      %v1038 = vrot.slane %v1037, 4
      %vm1039 = vcmask 891904
      %v1040 = vsel %vm1039, %v1038, %v1037
      %vm1042 = vcmask 1044328
      %vm1043 = vcmask 105476
      %vm1044 = vmor %vm1043, %vm1042
      %1045 = vst.msk [vmem:[#allocation7] sm:$0xff] %vm1044, %v1040
      %v1046 = vld [vmem:[#allocation6 + $0x4] sm:$0xf]
      %v1047 = vmul.f32 %v1046, 0.75
      %v1048 = vld [vmem:[#allocation6 + $0x8] sm:$0xf]
      %v1049 = vmul.f32 %v1048, 0.25
      %v1050 = vadd.f32 %v1047, %v1049
      %1052 = vrot.lane.b32.xlu0 %v1050, 17
      %v1053 = vpop.permute.xlu0 %1052
      %vm1055 = vcmask 396424
      %1056 = vst.msk [vmem:[#allocation7 + $0x4] sm:$0xf] %vm1055, %v1053
      %v1057 = vld [vmem:[#allocation6 + $0x4] sm:$0xf]
      %v1058 = vmul.f32 %v1057, 0.25
      %v1059 = vld [vmem:[#allocation6 + $0x8] sm:$0xf]
      %v1060 = vmul.f32 %v1059, 0.75
      %v1061 = vadd.f32 %v1058, %v1060
      %1063 = vrot.lane.b32.xlu0 %v1061, 53
      %v1064 = vpop.permute.xlu0 %1063
      %vm1066 = vcmask 691624
      %1067 = vst.msk [vmem:[#allocation7 + $0x4] sm:$0xf] %vm1066, %v1064
      %v1068 = vld [vmem:[#allocation6 + $0x8] sm:$0xf]
      %v1069 = vmul.f32 %v1068, 0.75
      %v1070 = vld [vmem:[#allocation6 + $0xc] sm:$0xf]
      %v1071 = vmul.f32 %v1070, 0.25
      %v1072 = vadd.f32 %v1069, %v1071
      %1074 = vrot.lane.b32.xlu0 %v1072, 89
      %v1075 = vpop.permute.xlu0 %1074
      %vm1077 = vcmask 986824
      %1078 = vst.msk [vmem:[#allocation7 + $0x4] sm:$0xf] %vm1077, %v1075
      %v1079 = vld [vmem:[#allocation6 + $0x8] sm:$0xf]
      %v1080 = vmul.f32 %v1079, 0.25
      %v1081 = vld [vmem:[#allocation6 + $0xc] sm:$0xf]
      %v1082 = vmul.f32 %v1081, 0.75
      %v1083 = vadd.f32 %v1080, %v1082
      %1085 = vrot.lane.b32.xlu0 %v1083, 125
      %v1086 = vpop.permute.xlu0 %1085
      %v1087 = vrot.slane %v1086, 4
      %vm1088 = vcmask 1022976
      %v1089 = vsel %vm1088, %v1087, %v1086
      %vm1091 = vcmask 1044456
      %vm1092 = vcmask 236548
      %vm1093 = vmor %vm1092, %vm1091
      %1094 = vst.msk [vmem:[#allocation7 + $0x4] sm:$0xff] %vm1093, %v1089
      %v1095 = vld [vmem:[#allocation6 + $0xc] sm:$0xf]
      %v1096 = vmul.f32 %v1095, 0.75
      %v1097 = vld [vmem:[#allocation6 + $0x10] sm:$0xf]
      %v1098 = vmul.f32 %v1097, 0.25
      %v1099 = vadd.f32 %v1096, %v1098
      %1101 = vrot.lane.b32.xlu0 %v1099, 33
      %v1102 = vpop.permute.xlu0 %1101
      %vm1104 = vcmask 527624
      %1105 = vst.msk [vmem:[#allocation7 + $0x8] sm:$0xf] %vm1104, %v1102
      %v1106 = vld [vmem:[#allocation6 + $0xc] sm:$0xf]
      %v1107 = vmul.f32 %v1106, 0.25
      %v1108 = vld [vmem:[#allocation6 + $0x10] sm:$0xf]
      %v1109 = vmul.f32 %v1108, 0.75
      %v1110 = vadd.f32 %v1107, %v1109
      %1112 = vrot.lane.b32.xlu0 %v1110, 69
      %v1113 = vpop.permute.xlu0 %1112
      %vm1115 = vcmask 822824
      %1116 = vst.msk [vmem:[#allocation7 + $0x8] sm:$0xf] %vm1115, %v1113
      %v1117 = vld [vmem:[#allocation6 + $0x10] sm:$0xf]
      %v1118 = vmul.f32 %v1117, 0.75
      %v1119 = vld [vmem:[#allocation6 + $0x14] sm:$0xf]
      %v1120 = vmul.f32 %v1119, 0.25
      %v1121 = vadd.f32 %v1118, %v1120
      %1123 = vrot.lane.b32.xlu0 %v1121, 105
      %v1124 = vpop.permute.xlu0 %1123
      %v1125 = vrot.slane %v1124, 4
      %vm1126 = vcmask 859136
      %v1127 = vsel %vm1126, %v1125, %v1124
      %vm1129 = vcmask 1044296
      %vm1130 = vmor %vm283, %vm1129
      %1131 = vst.msk [vmem:[#allocation7 + $0x8] sm:$0xff] %vm1130, %v1127
      %v1132 = vld [vmem:[#allocation6 + $0x10] sm:$0xf]
      %v1133 = vmul.f32 %v1132, 0.25
      %v1134 = vld [vmem:[#allocation6 + $0x14] sm:$0xf]
      %v1135 = vmul.f32 %v1134, 0.75
      %v1136 = vadd.f32 %v1133, %v1135
      %1138 = vrot.lane.b32.xlu0 %v1136, 13
      %v1139 = vpop.permute.xlu0 %1138
      %vm1141 = vcmask 363624
      %1142 = vst.msk [vmem:[#allocation7 + $0xc] sm:$0xf] %vm1141, %v1139
      %v1143 = vld [vmem:[#allocation6 + $0x14] sm:$0xf]
      %v1144 = vmul.f32 %v1143, 0.75
      %v1145 = vld [vmem:[#allocation6 + $0x18] sm:$0xf]
      %v1146 = vmul.f32 %v1145, 0.25
      %v1147 = vadd.f32 %v1144, %v1146
      %1149 = vrot.lane.b32.xlu0 %v1147, 49
      %v1150 = vpop.permute.xlu0 %1149
      %vm1152 = vcmask 658824
      %1153 = vst.msk [vmem:[#allocation7 + $0xc] sm:$0xf] %vm1152, %v1150
      %v1154 = vld [vmem:[#allocation6 + $0x14] sm:$0xf]
      %v1155 = vmul.f32 %v1154, 0.25
      %v1156 = vld [vmem:[#allocation6 + $0x18] sm:$0xf]
      %v1157 = vmul.f32 %v1156, 0.75
      %v1158 = vadd.f32 %v1155, %v1157
      %1160 = vrot.lane.b32.xlu0 %v1158, 85
      %v1161 = vpop.permute.xlu0 %1160
      %vm1163 = vcmask 954024
      %1164 = vst.msk [vmem:[#allocation7 + $0xc] sm:$0xf] %vm1163, %v1161
      %v1165 = vld [vmem:[#allocation6 + $0x18] sm:$0xf]
      %v1166 = vmul.f32 %v1165, 0.75
      %v1167 = vld [vmem:[#allocation6 + $0x1c] sm:$0xf]
      %v1168 = vmul.f32 %v1167, 0.25
      %v1169 = vadd.f32 %v1166, %v1168
      %1171 = vrot.lane.b32.xlu0 %v1169, 121
      %v1172 = vpop.permute.xlu0 %1171
      %v1173 = vrot.slane %v1172, 4
      %vm1174 = vcmask 990208
      %v1175 = vsel %vm1174, %v1173, %v1172
      %vm1177 = vcmask 203780
      %vm1178 = vmor %vm1177, %vm282
      %1179 = vst.msk [vmem:[#allocation7 + $0xc] sm:$0xff] %vm1178, %v1175
      %v1180 = vld [vmem:[#allocation6 + $0x18] sm:$0xf]
      %v1181 = vmul.f32 %v1180, 0.25
      %v1182 = vld [vmem:[#allocation6 + $0x1c] sm:$0xf]
      %v1183 = vmul.f32 %v1182, 0.75
      %v1184 = vadd.f32 %v1181, %v1183
      %1186 = vrot.lane.b32.xlu0 %v1184, 29
      %v1187 = vpop.permute.xlu0 %1186
      %vm1189 = vcmask 494824
      %1190 = vst.msk [vmem:[#allocation7 + $0x10] sm:$0xf] %vm1189, %v1187
      %v1191 = vld [vmem:[#allocation6 + $0x1c] sm:$0xf]
      %v1192 = vmul.f32 %v1191, 0.75
      %v1193 = vld [vmem:[#allocation6 + $0x20] sm:$0xf]
      %v1194 = vmul.f32 %v1193, 0.25
      %v1195 = vadd.f32 %v1192, %v1194
      %1197 = vrot.lane.b32.xlu0 %v1195, 65
      %v1198 = vpop.permute.xlu0 %1197
      %vm1200 = vcmask 790024
      %1201 = vst.msk [vmem:[#allocation7 + $0x10] sm:$0xf] %vm1200, %v1198
      %v1202 = vld [vmem:[#allocation6 + $0x1c] sm:$0xf]
      %v1203 = vmul.f32 %v1202, 0.25
      %v1204 = vld [vmem:[#allocation6 + $0x20] sm:$0xf]
      %v1205 = vmul.f32 %v1204, 0.75
      %v1206 = vadd.f32 %v1203, %v1205
      %1208 = vrot.lane.b32.xlu0 %v1206, 101
      %v1209 = vpop.permute.xlu0 %1208
      %v1210 = vrot.slane %v1209, 4
      %vm1211 = vcmask 826368
      %v1212 = vsel %vm1211, %v1210, %v1209
      %vm1214 = vcmask 1044264
      %vm1215 = vcmask 39940
      %vm1216 = vmor %vm1215, %vm1214
      %1217 = vst.msk [vmem:[#allocation7 + $0x10] sm:$0xff] %vm1216, %v1212
      %v1218 = vld [vmem:[#allocation6 + $0x20] sm:$0xf]
      %v1219 = vmul.f32 %v1218, 0.75
      %v1220 = vld [vmem:[#allocation6 + $0x24] sm:$0xf]
      %v1221 = vmul.f32 %v1220, 0.25
      %v1222 = vadd.f32 %v1219, %v1221
      %1224 = vrot.lane.b32.xlu0 %v1222, 9
      %v1225 = vpop.permute.xlu0 %1224
      %vm1227 = vcmask 330824
      %1228 = vst.msk [vmem:[#allocation7 + $0x14] sm:$0xf] %vm1227, %v1225
      %v1229 = vld [vmem:[#allocation6 + $0x20] sm:$0xf]
      %v1230 = vmul.f32 %v1229, 0.25
      %v1231 = vld [vmem:[#allocation6 + $0x24] sm:$0xf]
      %v1232 = vmul.f32 %v1231, 0.75
      %v1233 = vadd.f32 %v1230, %v1232
      %1235 = vrot.lane.b32.xlu0 %v1233, 45
      %v1236 = vpop.permute.xlu0 %1235
      %vm1238 = vcmask 626024
      %1239 = vst.msk [vmem:[#allocation7 + $0x14] sm:$0xf] %vm1238, %v1236
      %v1240 = vld [vmem:[#allocation6 + $0x24] sm:$0xf]
      %v1241 = vmul.f32 %v1240, 0.75
      %v1242 = vld [vmem:[#allocation6 + $0x28] sm:$0xf]
      %v1243 = vmul.f32 %v1242, 0.25
      %v1244 = vadd.f32 %v1241, %v1243
      %1246 = vrot.lane.b32.xlu0 %v1244, 81
      %v1247 = vpop.permute.xlu0 %1246
      %vm1249 = vcmask 921224
      %1250 = vst.msk [vmem:[#allocation7 + $0x14] sm:$0xf] %vm1249, %v1247
      %v1251 = vld [vmem:[#allocation6 + $0x24] sm:$0xf]
      %v1252 = vmul.f32 %v1251, 0.25
      %v1253 = vld [vmem:[#allocation6 + $0x28] sm:$0xf]
      %v1254 = vmul.f32 %v1253, 0.75
      %v1255 = vadd.f32 %v1252, %v1254
      %1257 = vrot.lane.b32.xlu0 %v1255, 117
      %v1258 = vpop.permute.xlu0 %1257
      %v1259 = vrot.slane %v1258, 4
      %vm1260 = vcmask 957440
      %v1261 = vsel %vm1260, %v1259, %v1258
      %vm1263 = vcmask 1044392
      %vm1264 = vcmask 171012
      %vm1265 = vmor %vm1264, %vm1263
      %1266 = vst.msk [vmem:[#allocation7 + $0x14] sm:$0xff] %vm1265, %v1261
      %v1267 = vld [vmem:[#allocation6 + $0x28] sm:$0xf]
      %v1268 = vmul.f32 %v1267, 0.75
      %v1269 = vld [vmem:[#allocation6 + $0x2c] sm:$0xf]
      %v1270 = vmul.f32 %v1269, 0.25
      %v1271 = vadd.f32 %v1268, %v1270
      %1273 = vrot.lane.b32.xlu0 %v1271, 25
      %v1274 = vpop.permute.xlu0 %1273
      %vm1276 = vcmask 462024
      %1277 = vst.msk [vmem:[#allocation7 + $0x18] sm:$0xf] %vm1276, %v1274
      %v1278 = vld [vmem:[#allocation6 + $0x28] sm:$0xf]
      %v1279 = vmul.f32 %v1278, 0.25
      %v1280 = vld [vmem:[#allocation6 + $0x2c] sm:$0xf]
      %v1281 = vmul.f32 %v1280, 0.75
      %v1282 = vadd.f32 %v1279, %v1281
      %1284 = vrot.lane.b32.xlu0 %v1282, 61
      %v1285 = vpop.permute.xlu0 %1284
      %vm1287 = vcmask 757224
      %1288 = vst.msk [vmem:[#allocation7 + $0x18] sm:$0xf] %vm1287, %v1285
      %v1289 = vld [vmem:[#allocation6 + $0x2c] sm:$0xf]
      %v1290 = vmul.f32 %v1289, 0.75
      %v1291 = vld [vmem:[#allocation6 + $0x30] sm:$0xf]
      %v1292 = vmul.f32 %v1291, 0.25
      %v1293 = vadd.f32 %v1290, %v1292
      %1295 = vrot.lane.b32.xlu0 %v1293, 97
      %v1296 = vpop.permute.xlu0 %1295
      %v1297 = vrot.slane %v1296, 4
      %v1298 = vsel %vm312, %v1297, %v1296
      %vm1300 = vcmask 1044232
      %vm1301 = vmor %vm316, %vm1300
      %1302 = vst.msk [vmem:[#allocation7 + $0x18] sm:$0xff] %vm1301, %v1298
      %v1303 = vld [vmem:[#allocation6 + $0x2c] sm:$0xf]
      %v1304 = vmul.f32 %v1303, 0.25
      %v1305 = vld [vmem:[#allocation6 + $0x30] sm:$0xf]
      %v1306 = vmul.f32 %v1305, 0.75
      %v1307 = vadd.f32 %v1304, %v1306
      %1309 = vrot.lane.b32.xlu0 %v1307, 5
      %v1310 = vpop.permute.xlu0 %1309
      %vm1312 = vcmask 298024
      %1313 = vst.msk [vmem:[#allocation7 + $0x1c] sm:$0xf] %vm1312, %v1310
      %v1314 = vld [vmem:[#allocation6 + $0x30] sm:$0xf]
      %v1315 = vmul.f32 %v1314, 0.75
      %v1316 = vld [vmem:[#allocation6 + $0x34] sm:$0xf]
      %v1317 = vmul.f32 %v1316, 0.25
      %v1318 = vadd.f32 %v1315, %v1317
      %1320 = vrot.lane.b32.xlu0 %v1318, 41
      %v1321 = vpop.permute.xlu0 %1320
      %vm1323 = vcmask 593224
      %1324 = vst.msk [vmem:[#allocation7 + $0x1c] sm:$0xf] %vm1323, %v1321
      %v1325 = vld [vmem:[#allocation6 + $0x30] sm:$0xf]
      %v1326 = vmul.f32 %v1325, 0.25
      %v1327 = vld [vmem:[#allocation6 + $0x34] sm:$0xf]
      %v1328 = vmul.f32 %v1327, 0.75
      %v1329 = vadd.f32 %v1326, %v1328
      %1331 = vrot.lane.b32.xlu0 %v1329, 77
      %v1332 = vpop.permute.xlu0 %1331
      %vm1334 = vcmask 888424
      %1335 = vst.msk [vmem:[#allocation7 + $0x1c] sm:$0xf] %vm1334, %v1332
      %v1336 = vld [vmem:[#allocation6 + $0x34] sm:$0xf]
      %v1337 = vmul.f32 %v1336, 0.75
      %v1338 = vld [vmem:[#allocation6 + $0x38] sm:$0xf]
      %v1339 = vmul.f32 %v1338, 0.25
      %v1340 = vadd.f32 %v1337, %v1339
      %1342 = vrot.lane.b32.xlu0 %v1340, 113
      %v1343 = vpop.permute.xlu0 %1342
      %v1344 = vrot.slane %v1343, 4
      %vm1345 = vcmask 924672
      %v1346 = vsel %vm1345, %v1344, %v1343
      %vm1348 = vcmask 138244
      %vm1349 = vmor %vm1348, %vm315
      %1350 = vst.msk [vmem:[#allocation7 + $0x1c] sm:$0xff] %vm1349, %v1346
      %v1351 = vld [vmem:[#allocation6 + $0x34] sm:$0xf]
      %v1352 = vmul.f32 %v1351, 0.25
      %v1353 = vld [vmem:[#allocation6 + $0x38] sm:$0xf]
      %v1354 = vmul.f32 %v1353, 0.75
      %v1355 = vadd.f32 %v1352, %v1354
      %1357 = vrot.lane.b32.xlu0 %v1355, 21
      %v1358 = vpop.permute.xlu0 %1357
      %vm1360 = vcmask 429224
      %1361 = vst.msk [vmem:[#allocation7 + $0x20] sm:$0xf] %vm1360, %v1358
      %v1362 = vld [vmem:[#allocation6 + $0x38] sm:$0xf]
      %v1363 = vmul.f32 %v1362, 0.75
      %v1364 = vld [vmem:[#allocation6 + $0x3c] sm:$0xf]
      %v1365 = vmul.f32 %v1364, 0.25
      %v1366 = vadd.f32 %v1363, %v1365
      %1368 = vrot.lane.b32.xlu0 %v1366, 57
      %v1369 = vpop.permute.xlu0 %1368
      %vm1371 = vcmask 724424
      %1372 = vst.msk [vmem:[#allocation7 + $0x20] sm:$0xf] %vm1371, %v1369
      %v1373 = vld [vmem:[#allocation6 + $0x38] sm:$0xf]
      %v1374 = vmul.f32 %v1373, 0.25
      %v1375 = vld [vmem:[#allocation6 + $0x3c] sm:$0xf]
      %v1376 = vmul.f32 %v1375, 0.75
      %v1377 = vadd.f32 %v1374, %v1376
      %1379 = vrot.lane.b32.xlu0 %v1377, 93
      %v1380 = vpop.permute.xlu0 %1379
      %vm1382 = vcmask 1019624
      %1383 = vst.msk [vmem:[#allocation7 + $0x20] sm:$0xf] %vm1382, %v1380
      %v1384 = vld [vmem:[#allocation6 + $0x3c] sm:$0xf]
      %v1385 = vmul.f32 %v1384, 0.75
      %v1386 = vmul.f32 %v1384, 0.25
      %v1387 = vadd.f32 %v1385, %v1386
      %1389 = vrot.lane.b32.xlu0 %v1387, 1
      %v1390 = vpop.permute.xlu0 %1389
      %vm1392 = vcmask 265224
      %1393 = vst.msk [vmem:[#allocation7 + $0x24] sm:$0xf] %vm1392, %v1390
      %v1394 = vld [vmem:[#allocation7] sm:$0xff]
      %v1395 = vld [vmem:[#allocation7 + $0x8] sm:$0xff]
      %v1396 = vld [vmem:[#allocation7 + $0x10] sm:$0xff]
      %v1397 = vld [vmem:[#allocation7 + $0x18] sm:$0xff]
      %v1398 = vld [vmem:[#allocation7 + $0x20] sm:$0xf]
      %v1403 = vcombine.high %v1394, %v1394
      %v1404 = vcombine.high %v1395, %v1395
      %v1405 = vcombine.high %v1396, %v1396
      %v1406 = vcombine.high %v1397, %v1397
      %1411 = vst [vmem:[#allocation8] sm:$0xf] %v1394
      %1412 = vst [vmem:[#allocation8 + $0x8] sm:$0xf] %v1403
      %1413 = vst [vmem:[#allocation8 + $0x10] sm:$0xf] %v1395
      %1414 = vst [vmem:[#allocation8 + $0x18] sm:$0xf] %v1404
      %1415 = vst [vmem:[#allocation8 + $0x20] sm:$0xf] %v1396
      %1416 = vst [vmem:[#allocation8 + $0x28] sm:$0xf] %v1405
      %1417 = vst [vmem:[#allocation8 + $0x30] sm:$0xf] %v1397
      %1418 = vst [vmem:[#allocation8 + $0x38] sm:$0xf] %v1406
      %1419 = vst [vmem:[#allocation8 + $0x40] sm:$0xf] %v1398
      %v1420 = vld [vmem:[#allocation7] sm:$0xff]
      %v1421 = vld [vmem:[#allocation7 + $0x8] sm:$0xff]
      %v1422 = vld [vmem:[#allocation7 + $0x10] sm:$0xff]
      %v1423 = vld [vmem:[#allocation7 + $0x18] sm:$0xff]
      %v1424 = vld [vmem:[#allocation7 + $0x20] sm:$0xff]
      %v1430 = vcombine.low %v1420, %v1420
      %v1431 = vcombine.low %v1421, %v1421
      %v1432 = vcombine.low %v1422, %v1422
      %v1433 = vcombine.low %v1423, %v1423
      %v1434 = vcombine.low %v1424, %v1424
      %1435 = vrot.lane.b32.xlu0 %v1430, 127
      %v1436 = vpop.permute.xlu0 %1435
      %1437 = vrot.lane.b32.xlu0 %v1420, 127
      %v1438 = vpop.permute.xlu0 %1437
      %1439 = vrot.lane.b32.xlu0 %v1431, 127
      %v1440 = vpop.permute.xlu0 %1439
      %1441 = vrot.lane.b32.xlu0 %v1421, 127
      %v1442 = vpop.permute.xlu0 %1441
      %1443 = vrot.lane.b32.xlu0 %v1432, 127
      %v1444 = vpop.permute.xlu0 %1443
      %1445 = vrot.lane.b32.xlu0 %v1422, 127
      %v1446 = vpop.permute.xlu0 %1445
      %1447 = vrot.lane.b32.xlu0 %v1433, 127
      %v1448 = vpop.permute.xlu0 %1447
      %1449 = vrot.lane.b32.xlu0 %v1423, 127
      %v1450 = vpop.permute.xlu0 %1449
      %1451 = vrot.lane.b32.xlu0 %v1434, 127
      %v1452 = vpop.permute.xlu0 %1451
      %1453 = vrot.lane.b32.xlu0 %v1424, 127
      %v1454 = vpop.permute.xlu0 %1453
      %v1455 = vsel %vm381, %v1436, %v1438
      %v1456 = vsel %vm381, %v1438, %v1440
      %v1457 = vsel %vm381, %v1440, %v1442
      %v1458 = vsel %vm381, %v1442, %v1444
      %v1459 = vsel %vm381, %v1444, %v1446
      %v1460 = vsel %vm381, %v1446, %v1448
      %v1461 = vsel %vm381, %v1448, %v1450
      %v1462 = vsel %vm381, %v1450, %v1452
      %v1463 = vsel %vm381, %v1452, %v1454
      %1473 = vst [vmem:[#allocation8] sm:$0xf0] %v1455
      %1474 = vst [vmem:[#allocation8 + $0x8] sm:$0xf0] %v1456
      %1475 = vst [vmem:[#allocation8 + $0x10] sm:$0xf0] %v1457
      %1476 = vst [vmem:[#allocation8 + $0x18] sm:$0xf0] %v1458
      %1477 = vst [vmem:[#allocation8 + $0x20] sm:$0xf0] %v1459
      %1478 = vst [vmem:[#allocation8 + $0x28] sm:$0xf0] %v1460
      %1479 = vst [vmem:[#allocation8 + $0x30] sm:$0xf0] %v1461
      %1480 = vst [vmem:[#allocation8 + $0x38] sm:$0xf0] %v1462
      %1481 = vst [vmem:[#allocation8 + $0x40] sm:$0xf0] %v1463
      %v1482 = vld [vmem:[#allocation7] sm:$0xff]
      %v1483 = vld [vmem:[#allocation7 + $0x8] sm:$0xff]
      %v1484 = vld [vmem:[#allocation7 + $0x10] sm:$0xff]
      %v1485 = vld [vmem:[#allocation7 + $0x18] sm:$0xff]
      %v1486 = vld [vmem:[#allocation7 + $0x20] sm:$0xff]
      %v1492 = vcombine.high %v1482, %v1482
      %v1493 = vcombine.high %v1483, %v1483
      %v1494 = vcombine.high %v1484, %v1484
      %v1495 = vcombine.high %v1485, %v1485
      %v1496 = vcombine.high %v1486, %v1486
      %1497 = vrot.lane.b32.xlu0 %v1482, 126
      %v1498 = vpop.permute.xlu0 %1497
      %1499 = vrot.lane.b32.xlu0 %v1492, 126
      %v1500 = vpop.permute.xlu0 %1499
      %1501 = vrot.lane.b32.xlu0 %v1483, 126
      %v1502 = vpop.permute.xlu0 %1501
      %1503 = vrot.lane.b32.xlu0 %v1493, 126
      %v1504 = vpop.permute.xlu0 %1503
      %1505 = vrot.lane.b32.xlu0 %v1484, 126
      %v1506 = vpop.permute.xlu0 %1505
      %1507 = vrot.lane.b32.xlu0 %v1494, 126
      %v1508 = vpop.permute.xlu0 %1507
      %1509 = vrot.lane.b32.xlu0 %v1485, 126
      %v1510 = vpop.permute.xlu0 %1509
      %1511 = vrot.lane.b32.xlu0 %v1495, 126
      %v1512 = vpop.permute.xlu0 %1511
      %1513 = vrot.lane.b32.xlu0 %v1486, 126
      %v1514 = vpop.permute.xlu0 %1513
      %1515 = vrot.lane.b32.xlu0 %v1496, 126
      %v1516 = vpop.permute.xlu0 %1515
      %v1517 = vsel %vm405, %v1498, %v1500
      %v1518 = vsel %vm405, %v1500, %v1502
      %v1519 = vsel %vm405, %v1502, %v1504
      %v1520 = vsel %vm405, %v1504, %v1506
      %v1521 = vsel %vm405, %v1506, %v1508
      %v1522 = vsel %vm405, %v1508, %v1510
      %v1523 = vsel %vm405, %v1510, %v1512
      %v1524 = vsel %vm405, %v1512, %v1514
      %v1525 = vsel %vm405, %v1514, %v1516
      %1535 = vst [vmem:[#allocation8 + $0x48] sm:$0xf] %v1517
      %1536 = vst [vmem:[#allocation8 + $0x50] sm:$0xf] %v1518
      %1537 = vst [vmem:[#allocation8 + $0x58] sm:$0xf] %v1519
      %1538 = vst [vmem:[#allocation8 + $0x60] sm:$0xf] %v1520
      %1539 = vst [vmem:[#allocation8 + $0x68] sm:$0xf] %v1521
      %1540 = vst [vmem:[#allocation8 + $0x70] sm:$0xf] %v1522
      %1541 = vst [vmem:[#allocation8 + $0x78] sm:$0xf] %v1523
      %1542 = vst [vmem:[#allocation8 + $0x80] sm:$0xf] %v1524
      %1543 = vst [vmem:[#allocation8 + $0x88] sm:$0xf] %v1525
      %v1544 = vld [vmem:[#allocation7] sm:$0xff]
      %v1545 = vld [vmem:[#allocation7 + $0x8] sm:$0xff]
      %v1546 = vld [vmem:[#allocation7 + $0x10] sm:$0xff]
      %v1547 = vld [vmem:[#allocation7 + $0x18] sm:$0xff]
      %v1548 = vld [vmem:[#allocation7 + $0x20] sm:$0xff]
      %v1554 = vcombine.low %v1544, %v1544
      %v1555 = vcombine.low %v1545, %v1545
      %v1556 = vcombine.low %v1546, %v1546
      %v1557 = vcombine.low %v1547, %v1547
      %v1558 = vcombine.low %v1548, %v1548
      %1559 = vrot.lane.b32.xlu0 %v1554, 92
      %v1560 = vpop.permute.xlu0 %1559
      %1561 = vrot.lane.b32.xlu0 %v1544, 92
      %v1562 = vpop.permute.xlu0 %1561
      %1563 = vrot.lane.b32.xlu0 %v1555, 92
      %v1564 = vpop.permute.xlu0 %1563
      %1565 = vrot.lane.b32.xlu0 %v1545, 92
      %v1566 = vpop.permute.xlu0 %1565
      %1567 = vrot.lane.b32.xlu0 %v1556, 92
      %v1568 = vpop.permute.xlu0 %1567
      %1569 = vrot.lane.b32.xlu0 %v1546, 92
      %v1570 = vpop.permute.xlu0 %1569
      %1571 = vrot.lane.b32.xlu0 %v1557, 92
      %v1572 = vpop.permute.xlu0 %1571
      %1573 = vrot.lane.b32.xlu0 %v1547, 92
      %v1574 = vpop.permute.xlu0 %1573
      %1575 = vrot.lane.b32.xlu0 %v1558, 92
      %v1576 = vpop.permute.xlu0 %1575
      %1577 = vrot.lane.b32.xlu0 %v1548, 92
      %v1578 = vpop.permute.xlu0 %1577
      %vm1579 = vcmask 752640
      %v1580 = vsel %vm1579, %v1560, %v1562
      %v1581 = vsel %vm1579, %v1562, %v1564
      %v1582 = vsel %vm1579, %v1564, %v1566
      %v1583 = vsel %vm1579, %v1566, %v1568
      %v1584 = vsel %vm1579, %v1568, %v1570
      %v1585 = vsel %vm1579, %v1570, %v1572
      %v1586 = vsel %vm1579, %v1572, %v1574
      %v1587 = vsel %vm1579, %v1574, %v1576
      %v1588 = vsel %vm1579, %v1576, %v1578
      %1598 = vst [vmem:[#allocation8 + $0x48] sm:$0xf0] %v1580
      %1599 = vst [vmem:[#allocation8 + $0x50] sm:$0xf0] %v1581
      %1600 = vst [vmem:[#allocation8 + $0x58] sm:$0xf0] %v1582
      %1601 = vst [vmem:[#allocation8 + $0x60] sm:$0xf0] %v1583
      %1602 = vst [vmem:[#allocation8 + $0x68] sm:$0xf0] %v1584
      %1603 = vst [vmem:[#allocation8 + $0x70] sm:$0xf0] %v1585
      %1604 = vst [vmem:[#allocation8 + $0x78] sm:$0xf0] %v1586
      %1605 = vst [vmem:[#allocation8 + $0x80] sm:$0xf0] %v1587
      %1606 = vst [vmem:[#allocation8 + $0x88] sm:$0xf0] %v1588
      %v1607 = vld [vmem:[#allocation7] sm:$0xff]
      %v1608 = vld [vmem:[#allocation7 + $0x8] sm:$0xff]
      %v1609 = vld [vmem:[#allocation7 + $0x10] sm:$0xff]
      %v1610 = vld [vmem:[#allocation7 + $0x18] sm:$0xff]
      %v1611 = vld [vmem:[#allocation7 + $0x20] sm:$0xff]
      %v1617 = vcombine.high %v1607, %v1607
      %v1618 = vcombine.high %v1608, %v1608
      %v1619 = vcombine.high %v1609, %v1609
      %v1620 = vcombine.high %v1610, %v1610
      %v1621 = vcombine.high %v1611, %v1611
      %1622 = vrot.lane.b32.xlu0 %v1607, 91
      %v1623 = vpop.permute.xlu0 %1622
      %1624 = vrot.lane.b32.xlu0 %v1617, 91
      %v1625 = vpop.permute.xlu0 %1624
      %1626 = vrot.lane.b32.xlu0 %v1608, 91
      %v1627 = vpop.permute.xlu0 %1626
      %1628 = vrot.lane.b32.xlu0 %v1618, 91
      %v1629 = vpop.permute.xlu0 %1628
      %1630 = vrot.lane.b32.xlu0 %v1609, 91
      %v1631 = vpop.permute.xlu0 %1630
      %1632 = vrot.lane.b32.xlu0 %v1619, 91
      %v1633 = vpop.permute.xlu0 %1632
      %1634 = vrot.lane.b32.xlu0 %v1610, 91
      %v1635 = vpop.permute.xlu0 %1634
      %1636 = vrot.lane.b32.xlu0 %v1620, 91
      %v1637 = vpop.permute.xlu0 %1636
      %1638 = vrot.lane.b32.xlu0 %v1611, 91
      %v1639 = vpop.permute.xlu0 %1638
      %1640 = vrot.lane.b32.xlu0 %v1621, 91
      %v1641 = vpop.permute.xlu0 %1640
      %vm1642 = vcmask 744448
      %v1643 = vsel %vm1642, %v1623, %v1625
      %v1644 = vsel %vm1642, %v1625, %v1627
      %v1645 = vsel %vm1642, %v1627, %v1629
      %v1646 = vsel %vm1642, %v1629, %v1631
      %v1647 = vsel %vm1642, %v1631, %v1633
      %v1648 = vsel %vm1642, %v1633, %v1635
      %v1649 = vsel %vm1642, %v1635, %v1637
      %v1650 = vsel %vm1642, %v1637, %v1639
      %v1651 = vsel %vm1642, %v1639, %v1641
      %1661 = vst [vmem:[#allocation8 + $0x90] sm:$0xf] %v1643
      %1662 = vst [vmem:[#allocation8 + $0x98] sm:$0xf] %v1644
      %1663 = vst [vmem:[#allocation8 + $0xa0] sm:$0xf] %v1645
      %1664 = vst [vmem:[#allocation8 + $0xa8] sm:$0xf] %v1646
      %1665 = vst [vmem:[#allocation8 + $0xb0] sm:$0xf] %v1647
      %1666 = vst [vmem:[#allocation8 + $0xb8] sm:$0xf] %v1648
      %1667 = vst [vmem:[#allocation8 + $0xc0] sm:$0xf] %v1649
      %1668 = vst [vmem:[#allocation8 + $0xc8] sm:$0xf] %v1650
      %1669 = vst [vmem:[#allocation8 + $0xd0] sm:$0xf] %v1651
      %v1670 = vld [vmem:[#allocation7] sm:$0xff]
      %v1671 = vld [vmem:[#allocation7 + $0x8] sm:$0xff]
      %v1672 = vld [vmem:[#allocation7 + $0x10] sm:$0xff]
      %v1673 = vld [vmem:[#allocation7 + $0x18] sm:$0xff]
      %v1674 = vld [vmem:[#allocation7 + $0x20] sm:$0xff]
      %v1680 = vcombine.low %v1670, %v1670
      %v1681 = vcombine.low %v1671, %v1671
      %v1682 = vcombine.low %v1672, %v1672
      %v1683 = vcombine.low %v1673, %v1673
      %v1684 = vcombine.low %v1674, %v1674
      %1685 = vrot.lane.b32.xlu0 %v1680, 90
      %v1686 = vpop.permute.xlu0 %1685
      %1687 = vrot.lane.b32.xlu0 %v1670, 90
      %v1688 = vpop.permute.xlu0 %1687
      %1689 = vrot.lane.b32.xlu0 %v1681, 90
      %v1690 = vpop.permute.xlu0 %1689
      %1691 = vrot.lane.b32.xlu0 %v1671, 90
      %v1692 = vpop.permute.xlu0 %1691
      %1693 = vrot.lane.b32.xlu0 %v1682, 90
      %v1694 = vpop.permute.xlu0 %1693
      %1695 = vrot.lane.b32.xlu0 %v1672, 90
      %v1696 = vpop.permute.xlu0 %1695
      %1697 = vrot.lane.b32.xlu0 %v1683, 90
      %v1698 = vpop.permute.xlu0 %1697
      %1699 = vrot.lane.b32.xlu0 %v1673, 90
      %v1700 = vpop.permute.xlu0 %1699
      %1701 = vrot.lane.b32.xlu0 %v1684, 90
      %v1702 = vpop.permute.xlu0 %1701
      %1703 = vrot.lane.b32.xlu0 %v1674, 90
      %v1704 = vpop.permute.xlu0 %1703
      %vm1705 = vcmask 736256
      %v1706 = vsel %vm1705, %v1686, %v1688
      %v1707 = vsel %vm1705, %v1688, %v1690
      %v1708 = vsel %vm1705, %v1690, %v1692
      %v1709 = vsel %vm1705, %v1692, %v1694
      %v1710 = vsel %vm1705, %v1694, %v1696
      %v1711 = vsel %vm1705, %v1696, %v1698
      %v1712 = vsel %vm1705, %v1698, %v1700
      %v1713 = vsel %vm1705, %v1700, %v1702
      %v1714 = vsel %vm1705, %v1702, %v1704
      %1724 = vst [vmem:[#allocation8 + $0x90] sm:$0xf0] %v1706
      %1725 = vst [vmem:[#allocation8 + $0x98] sm:$0xf0] %v1707
      %1726 = vst [vmem:[#allocation8 + $0xa0] sm:$0xf0] %v1708
      %1727 = vst [vmem:[#allocation8 + $0xa8] sm:$0xf0] %v1709
      %1728 = vst [vmem:[#allocation8 + $0xb0] sm:$0xf0] %v1710
      %1729 = vst [vmem:[#allocation8 + $0xb8] sm:$0xf0] %v1711
      %1730 = vst [vmem:[#allocation8 + $0xc0] sm:$0xf0] %v1712
      %1731 = vst [vmem:[#allocation8 + $0xc8] sm:$0xf0] %v1713
      %1732 = vst [vmem:[#allocation8 + $0xd0] sm:$0xf0] %v1714
      %v1733 = vld [vmem:[#allocation7] sm:$0xff]
      %v1734 = vld [vmem:[#allocation7 + $0x8] sm:$0xff]
      %v1735 = vld [vmem:[#allocation7 + $0x10] sm:$0xff]
      %v1736 = vld [vmem:[#allocation7 + $0x18] sm:$0xff]
      %v1737 = vld [vmem:[#allocation7 + $0x20] sm:$0xff]
      %v1743 = vcombine.high %v1733, %v1733
      %v1744 = vcombine.high %v1734, %v1734
      %v1745 = vcombine.high %v1735, %v1735
      %v1746 = vcombine.high %v1736, %v1736
      %v1747 = vcombine.high %v1737, %v1737
      %1748 = vrot.lane.b32.xlu0 %v1733, 56
      %v1749 = vpop.permute.xlu0 %1748
      %1750 = vrot.lane.b32.xlu0 %v1743, 56
      %v1751 = vpop.permute.xlu0 %1750
      %1752 = vrot.lane.b32.xlu0 %v1734, 56
      %v1753 = vpop.permute.xlu0 %1752
      %1754 = vrot.lane.b32.xlu0 %v1744, 56
      %v1755 = vpop.permute.xlu0 %1754
      %1756 = vrot.lane.b32.xlu0 %v1735, 56
      %v1757 = vpop.permute.xlu0 %1756
      %1758 = vrot.lane.b32.xlu0 %v1745, 56
      %v1759 = vpop.permute.xlu0 %1758
      %1760 = vrot.lane.b32.xlu0 %v1736, 56
      %v1761 = vpop.permute.xlu0 %1760
      %1762 = vrot.lane.b32.xlu0 %v1746, 56
      %v1763 = vpop.permute.xlu0 %1762
      %1764 = vrot.lane.b32.xlu0 %v1737, 56
      %v1765 = vpop.permute.xlu0 %1764
      %1766 = vrot.lane.b32.xlu0 %v1747, 56
      %v1767 = vpop.permute.xlu0 %1766
      %vm1768 = vcmask 457728
      %v1769 = vsel %vm1768, %v1749, %v1751
      %v1770 = vsel %vm1768, %v1751, %v1753
      %v1771 = vsel %vm1768, %v1753, %v1755
      %v1772 = vsel %vm1768, %v1755, %v1757
      %v1773 = vsel %vm1768, %v1757, %v1759
      %v1774 = vsel %vm1768, %v1759, %v1761
      %v1775 = vsel %vm1768, %v1761, %v1763
      %v1776 = vsel %vm1768, %v1763, %v1765
      %v1777 = vsel %vm1768, %v1765, %v1767
      %1787 = vst [vmem:[#allocation8 + $0xd8] sm:$0xf] %v1769
      %1788 = vst [vmem:[#allocation8 + $0xe0] sm:$0xf] %v1770
      %1789 = vst [vmem:[#allocation8 + $0xe8] sm:$0xf] %v1771
      %1790 = vst [vmem:[#allocation8 + $0xf0] sm:$0xf] %v1772
      %1791 = vst [vmem:[#allocation8 + $0xf8] sm:$0xf] %v1773
      %1792 = vst [vmem:[#allocation8 + $0x100] sm:$0xf] %v1774
      %1793 = vst [vmem:[#allocation8 + $0x108] sm:$0xf] %v1775
      %1794 = vst [vmem:[#allocation8 + $0x110] sm:$0xf] %v1776
      %1795 = vst [vmem:[#allocation8 + $0x118] sm:$0xf] %v1777
      %v1796 = vld [vmem:[#allocation7] sm:$0xff]
      %v1797 = vld [vmem:[#allocation7 + $0x8] sm:$0xff]
      %v1798 = vld [vmem:[#allocation7 + $0x10] sm:$0xff]
      %v1799 = vld [vmem:[#allocation7 + $0x18] sm:$0xff]
      %v1800 = vld [vmem:[#allocation7 + $0x20] sm:$0xff]
      %v1806 = vcombine.low %v1796, %v1796
      %v1807 = vcombine.low %v1797, %v1797
      %v1808 = vcombine.low %v1798, %v1798
      %v1809 = vcombine.low %v1799, %v1799
      %v1810 = vcombine.low %v1800, %v1800
      %1811 = vrot.lane.b32.xlu0 %v1806, 55
      %v1812 = vpop.permute.xlu0 %1811
      %1813 = vrot.lane.b32.xlu0 %v1796, 55
      %v1814 = vpop.permute.xlu0 %1813
      %1815 = vrot.lane.b32.xlu0 %v1807, 55
      %v1816 = vpop.permute.xlu0 %1815
      %1817 = vrot.lane.b32.xlu0 %v1797, 55
      %v1818 = vpop.permute.xlu0 %1817
      %1819 = vrot.lane.b32.xlu0 %v1808, 55
      %v1820 = vpop.permute.xlu0 %1819
      %1821 = vrot.lane.b32.xlu0 %v1798, 55
      %v1822 = vpop.permute.xlu0 %1821
      %1823 = vrot.lane.b32.xlu0 %v1809, 55
      %v1824 = vpop.permute.xlu0 %1823
      %1825 = vrot.lane.b32.xlu0 %v1799, 55
      %v1826 = vpop.permute.xlu0 %1825
      %1827 = vrot.lane.b32.xlu0 %v1810, 55
      %v1828 = vpop.permute.xlu0 %1827
      %1829 = vrot.lane.b32.xlu0 %v1800, 55
      %v1830 = vpop.permute.xlu0 %1829
      %vm1831 = vcmask 449536
      %v1832 = vsel %vm1831, %v1812, %v1814
      %v1833 = vsel %vm1831, %v1814, %v1816
      %v1834 = vsel %vm1831, %v1816, %v1818
      %v1835 = vsel %vm1831, %v1818, %v1820
      %v1836 = vsel %vm1831, %v1820, %v1822
      %v1837 = vsel %vm1831, %v1822, %v1824
      %v1838 = vsel %vm1831, %v1824, %v1826
      %v1839 = vsel %vm1831, %v1826, %v1828
      %v1840 = vsel %vm1831, %v1828, %v1830
      %1850 = vst [vmem:[#allocation8 + $0xd8] sm:$0xf0] %v1832
      %1851 = vst [vmem:[#allocation8 + $0xe0] sm:$0xf0] %v1833
      %1852 = vst [vmem:[#allocation8 + $0xe8] sm:$0xf0] %v1834
      %1853 = vst [vmem:[#allocation8 + $0xf0] sm:$0xf0] %v1835
      %1854 = vst [vmem:[#allocation8 + $0xf8] sm:$0xf0] %v1836
      %1855 = vst [vmem:[#allocation8 + $0x100] sm:$0xf0] %v1837
      %1856 = vst [vmem:[#allocation8 + $0x108] sm:$0xf0] %v1838
      %1857 = vst [vmem:[#allocation8 + $0x110] sm:$0xf0] %v1839
      %1858 = vst [vmem:[#allocation8 + $0x118] sm:$0xf0] %v1840
      %v1859 = vld [vmem:[#allocation7] sm:$0xff]
      %v1860 = vld [vmem:[#allocation7 + $0x8] sm:$0xff]
      %v1861 = vld [vmem:[#allocation7 + $0x10] sm:$0xff]
      %v1862 = vld [vmem:[#allocation7 + $0x18] sm:$0xff]
      %v1863 = vld [vmem:[#allocation7 + $0x20] sm:$0xff]
      %v1869 = vcombine.high %v1859, %v1859
      %v1870 = vcombine.high %v1860, %v1860
      %v1871 = vcombine.high %v1861, %v1861
      %v1872 = vcombine.high %v1862, %v1862
      %v1873 = vcombine.high %v1863, %v1863
      %1874 = vrot.lane.b32.xlu0 %v1859, 54
      %v1875 = vpop.permute.xlu0 %1874
      %1876 = vrot.lane.b32.xlu0 %v1869, 54
      %v1877 = vpop.permute.xlu0 %1876
      %1878 = vrot.lane.b32.xlu0 %v1860, 54
      %v1879 = vpop.permute.xlu0 %1878
      %1880 = vrot.lane.b32.xlu0 %v1870, 54
      %v1881 = vpop.permute.xlu0 %1880
      %1882 = vrot.lane.b32.xlu0 %v1861, 54
      %v1883 = vpop.permute.xlu0 %1882
      %1884 = vrot.lane.b32.xlu0 %v1871, 54
      %v1885 = vpop.permute.xlu0 %1884
      %1886 = vrot.lane.b32.xlu0 %v1862, 54
      %v1887 = vpop.permute.xlu0 %1886
      %1888 = vrot.lane.b32.xlu0 %v1872, 54
      %v1889 = vpop.permute.xlu0 %1888
      %1890 = vrot.lane.b32.xlu0 %v1863, 54
      %v1891 = vpop.permute.xlu0 %1890
      %1892 = vrot.lane.b32.xlu0 %v1873, 54
      %v1893 = vpop.permute.xlu0 %1892
      %vm1894 = vcmask 441344
      %v1895 = vsel %vm1894, %v1875, %v1877
      %v1896 = vsel %vm1894, %v1877, %v1879
      %v1897 = vsel %vm1894, %v1879, %v1881
      %v1898 = vsel %vm1894, %v1881, %v1883
      %v1899 = vsel %vm1894, %v1883, %v1885
      %v1900 = vsel %vm1894, %v1885, %v1887
      %v1901 = vsel %vm1894, %v1887, %v1889
      %v1902 = vsel %vm1894, %v1889, %v1891
      %v1903 = vsel %vm1894, %v1891, %v1893
      %1913 = vst [vmem:[#allocation8 + $0x120] sm:$0xf] %v1895
      %1914 = vst [vmem:[#allocation8 + $0x128] sm:$0xf] %v1896
      %1915 = vst [vmem:[#allocation8 + $0x130] sm:$0xf] %v1897
      %1916 = vst [vmem:[#allocation8 + $0x138] sm:$0xf] %v1898
      %1917 = vst [vmem:[#allocation8 + $0x140] sm:$0xf] %v1899
      %1918 = vst [vmem:[#allocation8 + $0x148] sm:$0xf] %v1900
      %1919 = vst [vmem:[#allocation8 + $0x150] sm:$0xf] %v1901
      %1920 = vst [vmem:[#allocation8 + $0x158] sm:$0xf] %v1902
      %1921 = vst [vmem:[#allocation8 + $0x160] sm:$0xf] %v1903
      %v1922 = vld [vmem:[%s4] sm:$0xff]
      %v1923 = vld [vmem:[#allocation8] sm:$0xff]
      %v1924 = vld [vmem:[#allocation8 + $0x8] sm:$0xff]
      %v1925 = vld [vmem:[#allocation8 + $0x10] sm:$0xff]
      %v1926 = vld [vmem:[#allocation8 + $0x18] sm:$0xff]
      %v1927 = vld [vmem:[#allocation8 + $0x20] sm:$0xff]
      %v1928 = vld [vmem:[#allocation8 + $0x28] sm:$0xff]
      %v1929 = vld [vmem:[#allocation8 + $0x30] sm:$0xff]
      %v1930 = vld [vmem:[#allocation8 + $0x38] sm:$0xff]
      %v1931 = vld [vmem:[#allocation8 + $0x40] sm:$0xff]
      %v1932 = vld [vmem:[#allocation8 + $0x48] sm:$0xff]
      %v1933 = vld [vmem:[#allocation8 + $0x50] sm:$0xff]
      %v1934 = vld [vmem:[#allocation8 + $0x58] sm:$0xff]
      %v1935 = vld [vmem:[#allocation8 + $0x60] sm:$0xff]
      %v1936 = vld [vmem:[#allocation8 + $0x68] sm:$0xff]
      %v1937 = vld [vmem:[#allocation8 + $0x70] sm:$0xff]
      %v1938 = vld [vmem:[#allocation8 + $0x78] sm:$0xff]
      %v1939 = vld [vmem:[#allocation8 + $0x80] sm:$0xff]
      %v1940 = vld [vmem:[#allocation8 + $0x88] sm:$0xff]
      %v1941 = vld [vmem:[#allocation8 + $0x90] sm:$0xff]
      %v1942 = vld [vmem:[#allocation8 + $0x98] sm:$0xff]
      %v1943 = vld [vmem:[#allocation8 + $0xa0] sm:$0xff]
      %v1944 = vld [vmem:[#allocation8 + $0xa8] sm:$0xff]
      %v1945 = vld [vmem:[#allocation8 + $0xb0] sm:$0xff]
      %v1946 = vld [vmem:[#allocation8 + $0xb8] sm:$0xff]
      %v1947 = vld [vmem:[#allocation8 + $0xc0] sm:$0xff]
      %v1948 = vld [vmem:[#allocation8 + $0xc8] sm:$0xff]
      %v1949 = vld [vmem:[#allocation8 + $0xd0] sm:$0xff]
      %v1950 = vld [vmem:[#allocation8 + $0xd8] sm:$0xff]
      %v1951 = vld [vmem:[#allocation8 + $0xe0] sm:$0xff]
      %v1952 = vld [vmem:[#allocation8 + $0xe8] sm:$0xff]
      %v1953 = vld [vmem:[#allocation8 + $0xf0] sm:$0xff]
      %v1954 = vld [vmem:[#allocation8 + $0xf8] sm:$0xff]
      %v1955 = vld [vmem:[#allocation8 + $0x100] sm:$0xff]
      %v1956 = vld [vmem:[#allocation8 + $0x108] sm:$0xff]
      %v1957 = vld [vmem:[#allocation8 + $0x110] sm:$0xff]
      %v1958 = vld [vmem:[#allocation8 + $0x118] sm:$0xff]
      %v1959 = vld [vmem:[#allocation8 + $0x120] sm:$0xf]
      %v1960 = vld [vmem:[#allocation8 + $0x128] sm:$0xf]
      %v1961 = vld [vmem:[#allocation8 + $0x130] sm:$0xf]
      %v1962 = vld [vmem:[#allocation8 + $0x138] sm:$0xf]
      %v1963 = vld [vmem:[#allocation8 + $0x140] sm:$0xf]
      %v1964 = vld [vmem:[#allocation8 + $0x148] sm:$0xf]
      %v1965 = vld [vmem:[#allocation8 + $0x150] sm:$0xf]
      %v1966 = vld [vmem:[#allocation8 + $0x158] sm:$0xf]
      %v1967 = vld [vmem:[#allocation8 + $0x160] sm:$0xf]
      %v1968 = vld [vmem:[%s5] sm:$0xff]
      %1970 = vset.pattern.permute.xlu0 0
      %1971 = vperm.xlu0 %1970, %v1968
      %v1972 = vpop.permute.xlu0 %1971
      %v1975 = vsel %vm581, %v1922, 0
      %v1978 = vsel %vm585, %v1959, 0
      %v1981 = vsel %vm585, %v1960, 0
      %v1984 = vsel %vm585, %v1961, 0
      %v1987 = vsel %vm585, %v1962, 0
      %v1990 = vsel %vm585, %v1963, 0
      %v1993 = vsel %vm585, %v1964, 0
      %v1996 = vsel %vm585, %v1965, 0
      %v1999 = vsel %vm585, %v1966, 0
      %v2002 = vsel %vm585, %v1967, 0
      %2004 = vmatprep.subr.mxu0 0.0
      %2005 = vmatpush1.msra.mxu0 0.0
      %2006 = vmatprep.subr.mxu0 0.0
      %2007 = vmatpush1.msra.mxu0 0.0
      %2008 = vmatprep.subr.mxu0 0.0
      %2009 = vmatpush1.msra.mxu0 0.0
      %2010 = vmatprep.subr.mxu0 0.0
      %2011 = vmatpush1.msra.mxu0 0.0
      %2012 = vmatprep.subr.mxu0 0.0
      %2013 = vmatpush1.msra.mxu0 0.0
      %2014 = vmatprep.subr.mxu0 0.0
      %2015 = vmatpush1.msra.mxu0 0.0
      %2016 = vmatprep.subr.mxu0 0.0
      %2017 = vmatpush1.msra.mxu0 0.0
      %2018 = vmatprep.subr.mxu0 0.0
      %2019 = vmatpush1.msra.mxu0 0.0
      %2020 = vmatprep.subr.mxu0 0.0
      %2021 = vmatpush1.msra.mxu0 0.0
      %2022 = vmatprep.subr.mxu0 0.0
      %2023 = vmatpush1.msra.mxu0 0.0
      %2024 = vmatprep.subr.mxu0 0.0
      %2025 = vmatpush1.msra.mxu0 0.0
      %2026 = vmatprep.subr.mxu0 %v1981
      %2027 = vmatpush1.msra.mxu0 %v1978
      %2028 = vmatprep.subr.mxu0 %v1951
      %2029 = vmatpush1.msra.mxu0 %v1950
      %2030 = vmatprep.subr.mxu0 %v1942
      %2031 = vmatpush1.msra.mxu0 %v1941
      %2032 = vmatprep.subr.mxu0 %v1933
      %2033 = vmatpush1.msra.mxu0 %v1932
      %2034 = vmatprep.subr.mxu0 %v1924
      %2035 = vmatpush1.msra.mxu0 %v1923
      %2036 = vmatprep.subr.mxu0 0.0
      %2037 = vmatpush2.msra.mxu0 0.0
      %2038 = vmatprep.subr.mxu0 0.0
      %2039 = vmatpush2.msra.mxu0 0.0
      %2040 = vmatprep.subr.mxu0 0.0
      %2041 = vmatpush2.msra.mxu0 0.0
      %2042 = vmatprep.subr.mxu0 0.0
      %2043 = vmatpush2.msra.mxu0 0.0
      %2044 = vmatprep.subr.mxu0 0.0
      %2045 = vmatpush2.msra.mxu0 0.0
      %2046 = vmatprep.subr.mxu0 0.0
      %2047 = vmatpush2.msra.mxu0 0.0
      %2048 = vmatprep.subr.mxu0 0.0
      %2049 = vmatpush2.msra.mxu0 0.0
      %2050 = vmatprep.subr.mxu0 0.0
      %2051 = vmatpush2.msra.mxu0 0.0
      %2052 = vmatprep.subr.mxu0 0.0
      %2053 = vmatpush2.msra.mxu0 0.0
      %2054 = vmatprep.subr.mxu0 0.0
      %2055 = vmatpush2.msra.mxu0 0.0
      %2056 = vmatprep.subr.mxu0 0.0
      %2057 = vmatpush2.msra.mxu0 0.0
      %2058 = vmatprep.subr.mxu0 0.0
      %2059 = vmatpush2.msra.mxu0 0.0
      %2060 = vmatprep.subr.mxu0 0.0
      %2061 = vmatpush2.msra.mxu0 0.0
      %2062 = vmatprep.subr.mxu0 0.0
      %2063 = vmatpush2.msra.mxu0 0.0
      %2064 = vmatprep.subr.mxu0 0.0
      %2065 = vmatpush2.msra.mxu0 0.0
      %2066 = vmatprep.subr.mxu0 0.0
      %2067 = vmatpush2.msra.mxu0 0.0
      %2068 = vmatprep.mubr.f32.mxu0 0.0
      %2069 = vmatmul.mubr.f32.gmra.mxu0 %v1975
      %v2070 = vpop.f32.mrf.mxu0
      %v2071 = vadd.f32 %v1972, %v2070
      %v2072 = vpop.f32.mrf.mxu0
      %v2073 = vadd.f32 %v1972, %v2072
      %2074 = vdwg.mxu0
      %2075 = vmatprep.subr.mxu0 0.0
      %2076 = vmatpush1.msra.mxu0 0.0
      %2077 = vmatprep.subr.mxu0 0.0
      %2078 = vmatpush1.msra.mxu0 0.0
      %2079 = vmatprep.subr.mxu0 0.0
      %2080 = vmatpush1.msra.mxu0 0.0
      %2081 = vmatprep.subr.mxu0 0.0
      %2082 = vmatpush1.msra.mxu0 0.0
      %2083 = vmatprep.subr.mxu0 0.0
      %2084 = vmatpush1.msra.mxu0 0.0
      %2085 = vmatprep.subr.mxu0 0.0
      %2086 = vmatpush1.msra.mxu0 0.0
      %2087 = vmatprep.subr.mxu0 0.0
      %2088 = vmatpush1.msra.mxu0 0.0
      %2089 = vmatprep.subr.mxu0 0.0
      %2090 = vmatpush1.msra.mxu0 0.0
      %2091 = vmatprep.subr.mxu0 0.0
      %2092 = vmatpush1.msra.mxu0 0.0
      %2093 = vmatprep.subr.mxu0 0.0
      %2094 = vmatpush1.msra.mxu0 0.0
      %2095 = vmatprep.subr.mxu0 0.0
      %2096 = vmatpush1.msra.mxu0 0.0
      %2097 = vmatprep.subr.mxu0 %v1987
      %2098 = vmatpush1.msra.mxu0 %v1984
      %2099 = vmatprep.subr.mxu0 %v1953
      %2100 = vmatpush1.msra.mxu0 %v1952
      %2101 = vmatprep.subr.mxu0 %v1944
      %2102 = vmatpush1.msra.mxu0 %v1943
      %2103 = vmatprep.subr.mxu0 %v1935
      %2104 = vmatpush1.msra.mxu0 %v1934
      %2105 = vmatprep.subr.mxu0 %v1926
      %2106 = vmatpush1.msra.mxu0 %v1925
      %2107 = vmatprep.subr.mxu0 0.0
      %2108 = vmatpush2.msra.mxu0 0.0
      %2109 = vmatprep.subr.mxu0 0.0
      %2110 = vmatpush2.msra.mxu0 0.0
      %2111 = vmatprep.subr.mxu0 0.0
      %2112 = vmatpush2.msra.mxu0 0.0
      %2113 = vmatprep.subr.mxu0 0.0
      %2114 = vmatpush2.msra.mxu0 0.0
      %2115 = vmatprep.subr.mxu0 0.0
      %2116 = vmatpush2.msra.mxu0 0.0
      %2117 = vmatprep.subr.mxu0 0.0
      %2118 = vmatpush2.msra.mxu0 0.0
      %2119 = vmatprep.subr.mxu0 0.0
      %2120 = vmatpush2.msra.mxu0 0.0
      %2121 = vmatprep.subr.mxu0 0.0
      %2122 = vmatpush2.msra.mxu0 0.0
      %2123 = vmatprep.subr.mxu0 0.0
      %2124 = vmatpush2.msra.mxu0 0.0
      %2125 = vmatprep.subr.mxu0 0.0
      %2126 = vmatpush2.msra.mxu0 0.0
      %2127 = vmatprep.subr.mxu0 0.0
      %2128 = vmatpush2.msra.mxu0 0.0
      %2129 = vmatprep.subr.mxu0 0.0
      %2130 = vmatpush2.msra.mxu0 0.0
      %2131 = vmatprep.subr.mxu0 0.0
      %2132 = vmatpush2.msra.mxu0 0.0
      %2133 = vmatprep.subr.mxu0 0.0
      %2134 = vmatpush2.msra.mxu0 0.0
      %2135 = vmatprep.subr.mxu0 0.0
      %2136 = vmatpush2.msra.mxu0 0.0
      %2137 = vmatprep.subr.mxu0 0.0
      %2138 = vmatpush2.msra.mxu0 0.0
      %2139 = vmatprep.mubr.f32.mxu0 0.0
      %2140 = vmatmul.mubr.f32.gmra.mxu0 %v1975
      %v2141 = vpop.f32.mrf.mxu0
      %v2142 = vadd.f32 %v1972, %v2141
      %v2143 = vpop.f32.mrf.mxu0
      %v2144 = vadd.f32 %v1972, %v2143
      %2145 = vdwg.mxu0
      %2146 = vmatprep.subr.mxu0 0.0
      %2147 = vmatpush1.msra.mxu0 0.0
      %2148 = vmatprep.subr.mxu0 0.0
      %2149 = vmatpush1.msra.mxu0 0.0
      %2150 = vmatprep.subr.mxu0 0.0
      %2151 = vmatpush1.msra.mxu0 0.0
      %2152 = vmatprep.subr.mxu0 0.0
      %2153 = vmatpush1.msra.mxu0 0.0
      %2154 = vmatprep.subr.mxu0 0.0
      %2155 = vmatpush1.msra.mxu0 0.0
      %2156 = vmatprep.subr.mxu0 0.0
      %2157 = vmatpush1.msra.mxu0 0.0
      %2158 = vmatprep.subr.mxu0 0.0
      %2159 = vmatpush1.msra.mxu0 0.0
      %2160 = vmatprep.subr.mxu0 0.0
      %2161 = vmatpush1.msra.mxu0 0.0
      %2162 = vmatprep.subr.mxu0 0.0
      %2163 = vmatpush1.msra.mxu0 0.0
      %2164 = vmatprep.subr.mxu0 0.0
      %2165 = vmatpush1.msra.mxu0 0.0
      %2166 = vmatprep.subr.mxu0 0.0
      %2167 = vmatpush1.msra.mxu0 0.0
      %2168 = vmatprep.subr.mxu0 %v1993
      %2169 = vmatpush1.msra.mxu0 %v1990
      %2170 = vmatprep.subr.mxu0 %v1955
      %2171 = vmatpush1.msra.mxu0 %v1954
      %2172 = vmatprep.subr.mxu0 %v1946
      %2173 = vmatpush1.msra.mxu0 %v1945
      %2174 = vmatprep.subr.mxu0 %v1937
      %2175 = vmatpush1.msra.mxu0 %v1936
      %2176 = vmatprep.subr.mxu0 %v1928
      %2177 = vmatpush1.msra.mxu0 %v1927
      %2178 = vmatprep.subr.mxu0 0.0
      %2179 = vmatpush2.msra.mxu0 0.0
      %2180 = vmatprep.subr.mxu0 0.0
      %2181 = vmatpush2.msra.mxu0 0.0
      %2182 = vmatprep.subr.mxu0 0.0
      %2183 = vmatpush2.msra.mxu0 0.0
      %2184 = vmatprep.subr.mxu0 0.0
      %2185 = vmatpush2.msra.mxu0 0.0
      %2186 = vmatprep.subr.mxu0 0.0
      %2187 = vmatpush2.msra.mxu0 0.0
      %2188 = vmatprep.subr.mxu0 0.0
      %2189 = vmatpush2.msra.mxu0 0.0
      %2190 = vmatprep.subr.mxu0 0.0
      %2191 = vmatpush2.msra.mxu0 0.0
      %2192 = vmatprep.subr.mxu0 0.0
      %2193 = vmatpush2.msra.mxu0 0.0
      %2194 = vmatprep.subr.mxu0 0.0
      %2195 = vmatpush2.msra.mxu0 0.0
      %2196 = vmatprep.subr.mxu0 0.0
      %2197 = vmatpush2.msra.mxu0 0.0
      %2198 = vmatprep.subr.mxu0 0.0
      %2199 = vmatpush2.msra.mxu0 0.0
      %2200 = vmatprep.subr.mxu0 0.0
      %2201 = vmatpush2.msra.mxu0 0.0
      %2202 = vmatprep.subr.mxu0 0.0
      %2203 = vmatpush2.msra.mxu0 0.0
      %2204 = vmatprep.subr.mxu0 0.0
      %2205 = vmatpush2.msra.mxu0 0.0
      %2206 = vmatprep.subr.mxu0 0.0
      %2207 = vmatpush2.msra.mxu0 0.0
      %2208 = vmatprep.subr.mxu0 0.0
      %2209 = vmatpush2.msra.mxu0 0.0
      %2210 = vmatprep.mubr.f32.mxu0 0.0
      %2211 = vmatmul.mubr.f32.gmra.mxu0 %v1975
      %v2212 = vpop.f32.mrf.mxu0
      %v2213 = vadd.f32 %v1972, %v2212
      %v2214 = vpop.f32.mrf.mxu0
      %v2215 = vadd.f32 %v1972, %v2214
      %2216 = vdwg.mxu0
      %2217 = vmatprep.subr.mxu0 0.0
      %2218 = vmatpush1.msra.mxu0 0.0
      %2219 = vmatprep.subr.mxu0 0.0
      %2220 = vmatpush1.msra.mxu0 0.0
      %2221 = vmatprep.subr.mxu0 0.0
      %2222 = vmatpush1.msra.mxu0 0.0
      %2223 = vmatprep.subr.mxu0 0.0
      %2224 = vmatpush1.msra.mxu0 0.0
      %2225 = vmatprep.subr.mxu0 0.0
      %2226 = vmatpush1.msra.mxu0 0.0
      %2227 = vmatprep.subr.mxu0 0.0
      %2228 = vmatpush1.msra.mxu0 0.0
      %2229 = vmatprep.subr.mxu0 0.0
      %2230 = vmatpush1.msra.mxu0 0.0
      %2231 = vmatprep.subr.mxu0 0.0
      %2232 = vmatpush1.msra.mxu0 0.0
      %2233 = vmatprep.subr.mxu0 0.0
      %2234 = vmatpush1.msra.mxu0 0.0
      %2235 = vmatprep.subr.mxu0 0.0
      %2236 = vmatpush1.msra.mxu0 0.0
      %2237 = vmatprep.subr.mxu0 0.0
      %2238 = vmatpush1.msra.mxu0 0.0
      %2239 = vmatprep.subr.mxu0 %v1999
      %2240 = vmatpush1.msra.mxu0 %v1996
      %2241 = vmatprep.subr.mxu0 %v1957
      %2242 = vmatpush1.msra.mxu0 %v1956
      %2243 = vmatprep.subr.mxu0 %v1948
      %2244 = vmatpush1.msra.mxu0 %v1947
      %2245 = vmatprep.subr.mxu0 %v1939
      %2246 = vmatpush1.msra.mxu0 %v1938
      %2247 = vmatprep.subr.mxu0 %v1930
      %2248 = vmatpush1.msra.mxu0 %v1929
      %2249 = vmatprep.subr.mxu0 0.0
      %2250 = vmatpush2.msra.mxu0 0.0
      %2251 = vmatprep.subr.mxu0 0.0
      %2252 = vmatpush2.msra.mxu0 0.0
      %2253 = vmatprep.subr.mxu0 0.0
      %2254 = vmatpush2.msra.mxu0 0.0
      %2255 = vmatprep.subr.mxu0 0.0
      %2256 = vmatpush2.msra.mxu0 0.0
      %2257 = vmatprep.subr.mxu0 0.0
      %2258 = vmatpush2.msra.mxu0 0.0
      %2259 = vmatprep.subr.mxu0 0.0
      %2260 = vmatpush2.msra.mxu0 0.0
      %2261 = vmatprep.subr.mxu0 0.0
      %2262 = vmatpush2.msra.mxu0 0.0
      %2263 = vmatprep.subr.mxu0 0.0
      %2264 = vmatpush2.msra.mxu0 0.0
      %2265 = vmatprep.subr.mxu0 0.0
      %2266 = vmatpush2.msra.mxu0 0.0
      %2267 = vmatprep.subr.mxu0 0.0
      %2268 = vmatpush2.msra.mxu0 0.0
      %2269 = vmatprep.subr.mxu0 0.0
      %2270 = vmatpush2.msra.mxu0 0.0
      %2271 = vmatprep.subr.mxu0 0.0
      %2272 = vmatpush2.msra.mxu0 0.0
      %2273 = vmatprep.subr.mxu0 0.0
      %2274 = vmatpush2.msra.mxu0 0.0
      %2275 = vmatprep.subr.mxu0 0.0
      %2276 = vmatpush2.msra.mxu0 0.0
      %2277 = vmatprep.subr.mxu0 0.0
      %2278 = vmatpush2.msra.mxu0 0.0
      %2279 = vmatprep.subr.mxu0 0.0
      %2280 = vmatpush2.msra.mxu0 0.0
      %2281 = vmatprep.mubr.f32.mxu0 0.0
      %2282 = vmatmul.mubr.f32.gmra.mxu0 %v1975
      %v2283 = vpop.f32.mrf.mxu0
      %v2284 = vadd.f32 %v1972, %v2283
      %v2285 = vpop.f32.mrf.mxu0
      %v2286 = vadd.f32 %v1972, %v2285
      %2287 = vdwg.mxu0
      %2288 = vmatprep.subr.mxu0 0.0
      %2289 = vmatpush1.msra.mxu0 0.0
      %2290 = vmatprep.subr.mxu0 0.0
      %2291 = vmatpush1.msra.mxu0 0.0
      %2292 = vmatprep.subr.mxu0 0.0
      %2293 = vmatpush1.msra.mxu0 0.0
      %2294 = vmatprep.subr.mxu0 0.0
      %2295 = vmatpush1.msra.mxu0 0.0
      %2296 = vmatprep.subr.mxu0 0.0
      %2297 = vmatpush1.msra.mxu0 0.0
      %2298 = vmatprep.subr.mxu0 0.0
      %2299 = vmatpush1.msra.mxu0 0.0
      %2300 = vmatprep.subr.mxu0 0.0
      %2301 = vmatpush1.msra.mxu0 0.0
      %2302 = vmatprep.subr.mxu0 0.0
      %2303 = vmatpush1.msra.mxu0 0.0
      %2304 = vmatprep.subr.mxu0 0.0
      %2305 = vmatpush1.msra.mxu0 0.0
      %2306 = vmatprep.subr.mxu0 0.0
      %2307 = vmatpush1.msra.mxu0 0.0
      %2308 = vmatprep.subr.mxu0 0.0
      %2309 = vmatpush1.msra.mxu0 0.0
      %2310 = vmatprep.subr.mxu0 0.0
      %2311 = vmatpush1.msra.mxu0 %v2002
      %2312 = vmatprep.subr.mxu0 0.0
      %2313 = vmatpush1.msra.mxu0 %v1958
      %2314 = vmatprep.subr.mxu0 0.0
      %2315 = vmatpush1.msra.mxu0 %v1949
      %2316 = vmatprep.subr.mxu0 0.0
      %2317 = vmatpush1.msra.mxu0 %v1940
      %2318 = vmatprep.subr.mxu0 0.0
      %2319 = vmatpush1.msra.mxu0 %v1931
      %2320 = vmatprep.subr.mxu0 0.0
      %2321 = vmatpush2.msra.mxu0 0.0
      %2322 = vmatprep.subr.mxu0 0.0
      %2323 = vmatpush2.msra.mxu0 0.0
      %2324 = vmatprep.subr.mxu0 0.0
      %2325 = vmatpush2.msra.mxu0 0.0
      %2326 = vmatprep.subr.mxu0 0.0
      %2327 = vmatpush2.msra.mxu0 0.0
      %2328 = vmatprep.subr.mxu0 0.0
      %2329 = vmatpush2.msra.mxu0 0.0
      %2330 = vmatprep.subr.mxu0 0.0
      %2331 = vmatpush2.msra.mxu0 0.0
      %2332 = vmatprep.subr.mxu0 0.0
      %2333 = vmatpush2.msra.mxu0 0.0
      %2334 = vmatprep.subr.mxu0 0.0
      %2335 = vmatpush2.msra.mxu0 0.0
      %2336 = vmatprep.subr.mxu0 0.0
      %2337 = vmatpush2.msra.mxu0 0.0
      %2338 = vmatprep.subr.mxu0 0.0
      %2339 = vmatpush2.msra.mxu0 0.0
      %2340 = vmatprep.subr.mxu0 0.0
      %2341 = vmatpush2.msra.mxu0 0.0
      %2342 = vmatprep.subr.mxu0 0.0
      %2343 = vmatpush2.msra.mxu0 0.0
      %2344 = vmatprep.subr.mxu0 0.0
      %2345 = vmatpush2.msra.mxu0 0.0
      %2346 = vmatprep.subr.mxu0 0.0
      %2347 = vmatpush2.msra.mxu0 0.0
      %2348 = vmatprep.subr.mxu0 0.0
      %2349 = vmatpush2.msra.mxu0 0.0
      %2350 = vmatprep.subr.mxu0 0.0
      %2351 = vmatpush2.msra.mxu0 0.0
      %2352 = vmatprep.mubr.f32.mxu0 0.0
      %2353 = vmatmul.mubr.f32.gmra.mxu0 %v1975
      %v2354 = vpop.f32.mrf.mxu0
      %v2355 = vadd.f32 %v1972, %v2354
      %v2356 = vpop.f32.mrf.mxu0
      %2357 = vdwg.mxu0
      %v2358 = vmul.f32 %v2071, 0.5
      %v2359 = vmul.f32 %v2073, 0.5
      %v2360 = vmul.f32 %v2142, 0.5
      %v2361 = vmul.f32 %v2144, 0.5
      %v2362 = vmul.f32 %v2213, 0.5
      %v2363 = vmul.f32 %v2215, 0.5
      %v2364 = vmul.f32 %v2284, 0.5
      %v2365 = vmul.f32 %v2286, 0.5
      %v2366 = vmul.f32 %v2355, 0.5
      %v2367 = vmul.f32 %v2071, 0.70710677
      %v2368 = vmul.f32 %v2073, 0.70710677
      %v2369 = vmul.f32 %v2142, 0.70710677
      %v2370 = vmul.f32 %v2144, 0.70710677
      %v2371 = vmul.f32 %v2213, 0.70710677
      %v2372 = vmul.f32 %v2215, 0.70710677
      %v2373 = vmul.f32 %v2284, 0.70710677
      %v2374 = vmul.f32 %v2286, 0.70710677
      %v2375 = vmul.f32 %v2355, 0.70710677
      %v2376 = verf.f32.pop %v2367
      %v2377 = verf.f32.pop %v2368
      %v2378 = verf.f32.pop %v2369
      %v2379 = verf.f32.pop %v2370
      %v2380 = verf.f32.pop %v2371
      %v2381 = verf.f32.pop %v2372
      %v2382 = verf.f32.pop %v2373
      %v2383 = verf.f32.pop %v2374
      %v2384 = verf.f32.pop %v2375
      %v2385 = vadd.f32 %v2376, 1.0
      %v2386 = vadd.f32 %v2377, 1.0
      %v2387 = vadd.f32 %v2378, 1.0
      %v2388 = vadd.f32 %v2379, 1.0
      %v2389 = vadd.f32 %v2380, 1.0
      %v2390 = vadd.f32 %v2381, 1.0
      %v2391 = vadd.f32 %v2382, 1.0
      %v2392 = vadd.f32 %v2383, 1.0
      %v2393 = vadd.f32 %v2384, 1.0
      %v2394 = vmul.f32 %v2358, %v2385
      %v2395 = vmul.f32 %v2359, %v2386
      %v2396 = vmul.f32 %v2360, %v2387
      %v2397 = vmul.f32 %v2361, %v2388
      %v2398 = vmul.f32 %v2362, %v2389
      %v2399 = vmul.f32 %v2363, %v2390
      %v2400 = vmul.f32 %v2364, %v2391
      %v2401 = vmul.f32 %v2365, %v2392
      %v2402 = vmul.f32 %v2366, %v2393
      %2403 = vst [vmem:[%s251] sm:$0xff] %v2394
      %2404 = vst [vmem:[%s251 + $0x8] sm:$0xff] %v2395
      %2405 = vst [vmem:[%s251 + $0x10] sm:$0xff] %v2396
      %2406 = vst [vmem:[%s251 + $0x18] sm:$0xff] %v2397
      %2407 = vst [vmem:[%s251 + $0x20] sm:$0xff] %v2398
      %2408 = vst [vmem:[%s251 + $0x28] sm:$0xff] %v2399
      %2409 = vst [vmem:[%s251 + $0x30] sm:$0xff] %v2400
      %2410 = vst [vmem:[%s251 + $0x38] sm:$0xff] %v2401
      %2411 = vst [vmem:[%s251 + $0x40] sm:$0xff] %v2402
      %p2412 = scmp.lt.s32.totalorder %s17, 1
      %s2413 = scalar_select %p2412, %s17, 1
      %s2414 = smul.addr %s2413, 9
      %s2415 = smul.addr %s2414, 8
      %s2416 = scalar_lea.vmem %s6, %s2415
      // Predicated region
      $region45: #{up_forward.1} parent=43 // pred_check
        %p2417 = pneg %p166
      $region46: #{up_forward.1} parent=43 // pred_check_branch
        %2419 = sbr.rel (%p2417) target = $region48
      $region47: #{up_forward.1} parent=43 // pred_region
        _
      $region48: #{up_forward.1} parent=43 // pred_fallthru
        _
    $region44: #{up_forward.1} parent=5 // pred_fallthru
      _
    %p2420 = scmp.le.s32.totalorder 2, %s12
    // Predicated region
    $region49: #{up_forward.1} parent=5 // pred_check
      %p2421 = pneg %p2420
    $region50: #{up_forward.1} parent=5 // pred_check_branch
      %2423 = sbr.rel (%p2421) target = $region52
    $region51: #{up_forward.1} parent=5 // pred_region
      %s2424 = ssub.s32 %s12, 2
      // Predicated region
      $region53: #{up_forward.1} parent=51 // pred_check
        %p2425 = pneg %p172
      $region54: #{up_forward.1} parent=51 // pred_check_branch
        %2427 = sbr.rel (%p2425) target = $region56
      $region55: #{up_forward.1} parent=51 // pred_region
        %p2428 = scmp.lt.s32.totalorder %s18, 1
        %s2429 = scalar_select %p2428, %s18, 1
        %s2430 = smul.addr %s2429, 9
        %s2431 = smul.addr %s2430, 8
        %s2432 = scalar_lea.vmem %s6, %s2431
      $region56: #{up_forward.1} parent=51 // pred_fallthru
        _
    $region52: #{up_forward.1} parent=5 // pred_fallthru
      _
  $region6: #{up_forward.1} parent=0 // loop_footer
    %s16 = sadd.s32 1, %s12
  $region7: #{up_forward.1} parent=0 // loop_footer_branch
    %11 = sbr.rel target = $region3
  $region8: #{up_forward.1} parent=0 // loop_exit
    _

</llo_original>
